<compile_context>
chip_gen: v5e
topology: v5e:2x2
jax: 0.10.0
libtpu: 0.0.40
codegen_flags: <defaults>
</compile_context>

<pallas_src>
import jax
import jax.numpy as jnp
from jax import lax
from jax.experimental import pallas as pl
from jax.experimental.pallas import tpu as pltpu

MFB_FACTOR = 2  # K


# ----------------------------------------------------------------------------- kernel
def _make_kernel(TB, N, Lq, L, D, K, TN, tile_dtype):
    NT = N // TN
    f32, bf16 = jnp.float32, jnp.bfloat16

    def kernel(q_ref, v_ref, wcv_ref, ws1b_ref, ws2_ref, wstc_ref, g1_ref,
               m0w_ref, m0b_ref, m1w_ref, m1b_ref,
               out_ref, q1_scr, g2pre_scr, m2_scr, t2v_scr):
        # ---- stage 1: batched projections over all TB*N / TB*Lq rows --------
        vb = v_ref[...].astype(bf16)                                    # (R, D)
        qg = jnp.dot(vb, wcv_ref[...], preferred_element_type=f32)      # (R, 2D)
        q1_scr[...] = qg[:, :D] + ws1b_ref[...]                         # Ws1(v)+b
        g2pre_scr[...] = qg[:, D:]                                      # gate2(v) pre-sigmoid

        qf = q_ref[...].reshape(TB * Lq, D).astype(bf16)
        m2_scr[...] = jnp.dot(qf, ws2_ref[...], preferred_element_type=f32)

        if Lq != L:  # mask zero-padded query positions out of the softmax
            col = lax.broadcasted_iota(jnp.int32, (1, Lq), 1)
            score_bias = jnp.where(col < L, 0.0, -1e30)
        else:
            score_bias = None

        # ---- stage 2: tanh attention, tiled over (batch, N) ------------------
        def score_block(t, i):
            row0 = t * N + i * TN
            if not isinstance(row0, int):
                row0 = pl.multiple_of(row0, TN)
            q1_blk = q1_scr[pl.ds(row0, TN), :]                         # (TN, D)
            m2_t = m2_scr[pl.ds(t * Lq, Lq), :]                         # (Lq, D)
            if tile_dtype == bf16:   # v6e/v7x fast path (bf16 VPU/EUP tile)
                tile = jnp.tanh(q1_blk.astype(bf16)[:, None, :]
                                + m2_t.astype(bf16)[None, :, :])        # (TN,Lq,D)
                lhs = tile.reshape(TN * Lq, D)
            else:                    # default / v5e: f32 tanh, bf16 dot operand
                tile = jnp.tanh(q1_blk[:, None, :] + m2_t[None, :, :])
                lhs = tile.reshape(TN * Lq, D).astype(bf16)
            s = jnp.dot(lhs, wstc_ref[...],
                        preferred_element_type=f32).reshape(TN, Lq)
            if score_bias is not None:
                s = s + score_bias
            s = s - jnp.max(s, axis=-1, keepdims=True)
            e = jnp.exp(s)
            attn = e / jnp.sum(e, axis=-1, keepdims=True)               # exact f32
            q_t = q_ref[t].astype(bf16)                                 # (Lq, D)
            t2v_scr[pl.ds(row0, TN), :] = jnp.dot(
                attn.astype(bf16), q_t, preferred_element_type=f32)

        total = TB * NT
        if total == 1:
            score_block(0, 0)
        else:
            def body(blk, carry):
                t = blk // NT
                score_block(t, blk - t * NT)
                return carry
            lax.fori_loop(0, total, body, 0, unroll=(total <= 8))

        # ---- stage 3: cross gating + MFB fusion on all R rows at once --------
        v = v_ref[...]                                                  # (R, D) f32
        t2v = t2v_scr[...]                                              # (R, D) f32
        text_gate = jax.nn.sigmoid(
            jnp.dot(t2v.astype(bf16), g1_ref[...], preferred_element_type=f32))
        visual_final = text_gate * v
        visual_gate = jax.nn.sigmoid(g2pre_scr[...])
        text_final = visual_gate * t2v

        a = jnp.dot(text_final.astype(bf16), m0w_ref[...],
                    preferred_element_type=f32) + m0b_ref[...]          # (R, K*D)
        b = jnp.dot(visual_final.astype(bf16), m1w_ref[...],
                    preferred_element_type=f32) + m1b_ref[...]          # (R, K*D)
        z = a[:, :D] * b[:, :D]
        for k in range(1, K):
            z = z + a[:, k * D:(k + 1) * D] * b[:, k * D:(k + 1) * D]

        r = jnp.sqrt(jnp.abs(z))                      # signed sqrt
        z = jnp.where(z < 0, -r, r)
        ssq = jnp.sum(z * z, axis=-1, keepdims=True)
        z = z * lax.rsqrt(jnp.maximum(ssq, 1e-24))    # == z / max(||z||, 1e-12)
        out_ref[...] = z.astype(out_ref.dtype)

    return kernel


# ----------------------------------------------------------------------------- wrapper
def _pick_batch_tile(B, N, target_rows=256):
    """Largest divisor TB of B with TB*N <= target rows that satisfies the
    (8,128) BlockSpec rule and (when B >= 2) leaves >= 2 grid steps so both
    v7x TensorCores get work."""
    cands = [tb for tb in range(1, B + 1)
             if B % tb == 0 and ((tb * N) % 8 == 0 or tb == B)]
    pref = [tb for tb in cands if tb < B] if B >= 2 else cands
    pool = pref if pref else cands
    small = [tb for tb in pool if tb * N <= max(target_rows, N)]
    return max(small) if small else min(pool)


def _pick_score_tile(N, Lq, target_rows=256):
    """Largest divisor TN of N with TN*Lq <= target rows (MXU M-dim fill)."""
    best = 1
    for tn in range(1, N + 1):
        if N % tn == 0 and tn * Lq <= max(target_rows, Lq):
            best = tn
    return best


def visual_enhance_by_query(question, visual, params, *,
                            target_rows=256,
                            vmem_limit_bytes=48 * 1024 * 1024,
                            tile_dtype=jnp.float32):
    """question: [B, L, D], visual: [B, N, D] -> [B, N, D] float32.

    Defaults are v7x-safe (64 MiB VMEM): ~256-row slabs, 48 MiB scoped VMEM.
    On v5e/v6e raise target_rows to 512-1024 and vmem_limit_bytes to ~96 MiB.
    tile_dtype=jnp.bfloat16 enables the v6e/v7x bf16 tanh-tile fast path
    (keep f32 on v5e / for strict numerical validation).
    """
    B, L, D = question.shape
    _, N, _ = visual.shape
    K = params["m0_w"].shape[0]
    f32, bf16 = jnp.float32, jnp.bfloat16

    # Pad query length to a multiple of 8 so the (TB, Lq, D) block and the
    # in-kernel (TB, Lq, D)->(TB*Lq, D) reshape stay (8,128)-tile aligned;
    # padded positions are masked out of the softmax inside the kernel.
    Lq = ((L + 7) // 8) * 8
    question_k = question if Lq == L else jnp.pad(
        question, ((0, 0), (0, Lq - L), (0, 0)))

    TB = _pick_batch_tile(B, N, target_rows)
    TN = _pick_score_tile(N, Lq, target_rows)
    G = B // TB
    R = TB * N

    # Repack weights: wide + bf16 matmul operands, f32 biases; w_st transposed
    # to a (D, 1) column on the host (no in-kernel relayout).
    wcv = jnp.concatenate([params["ws1_w"], params["g2_w"]], axis=1).astype(bf16)
    ws1b = params["ws1_b"].astype(f32)                               # (1, D)
    ws2 = params["ws2_w"].astype(bf16)                               # (D, D)
    wstc = params["wst_w"].reshape(D, 1).astype(bf16)                # (D, 1)
    g1 = params["g1_w"].astype(bf16)                                 # (D, D)
    m0w = params["m0_w"].transpose(1, 0, 2).reshape(D, K * D).astype(bf16)
    m0b = params["m0_b"].reshape(1, K * D).astype(f32)
    m1w = params["m1_w"].transpose(1, 0, 2).reshape(D, K * D).astype(bf16)
    m1b = params["m1_b"].reshape(1, K * D).astype(f32)

    vflat = visual.reshape(B * N, D)
    args = (question_k, vflat, wcv, ws1b, ws2, wstc, g1, m0w, m0b, m1w, m1b)

    def build(single_buffer_weights):
        def wspec(shape):                 # grid-invariant resident weight block
            if single_buffer_weights:
                return pl.BlockSpec(shape, lambda g: (0, 0),
                                    pipeline_mode=pl.Buffered(1))
            return pl.BlockSpec(shape, lambda g: (0, 0))

        grid_spec = pltpu.PrefetchScalarGridSpec(
            num_scalar_prefetch=0,
            grid=(G,),
            in_specs=[
                pl.BlockSpec((TB, Lq, D), lambda g: (g, 0, 0)),  # question
                pl.BlockSpec((R, D), lambda g: (g, 0)),          # visual rows
                wspec((D, 2 * D)),                               # [Ws1 | gate2]
                wspec((1, D)),                                   # Ws1 bias
                wspec((D, D)),                                   # Ws2
                wspec((D, 1)),                                   # w_st column
                wspec((D, D)),                                   # gate1
                wspec((D, K * D)),                               # MFB linear0 W
                wspec((1, K * D)),                               # MFB linear0 b
                wspec((D, K * D)),                               # MFB linear1 W
                wspec((1, K * D)),                               # MFB linear1 b
            ],
            out_specs=pl.BlockSpec((R, D), lambda g: (g, 0)),
            scratch_shapes=[
                pltpu.VMEM((R, D), f32),         # q1 = Ws1(v) + b
                pltpu.VMEM((R, D), f32),         # gate2(v) pre-activation
                pltpu.VMEM((TB * Lq, D), f32),   # m2 = Ws2(q)
                pltpu.VMEM((R, D), f32),         # textual2visual
            ],
        )
        return pl.pallas_call(
            _make_kernel(TB, N, Lq, L, D, K, TN, tile_dtype),
            out_shape=jax.ShapeDtypeStruct((B * N, D), f32),
            grid_spec=grid_spec,
            compiler_params=pltpu.CompilerParams(
                dimension_semantics=("parallel",),
                vmem_limit_bytes=vmem_limit_bytes),
        )

    try:
        out = build(True)(*args)
    except Exception:
        # Narrow feature-detect only: some jax/Mosaic builds reject
        # pipeline_mode=pl.Buffered(1) on resident weights.  The fallback is
        # numerically identical (weights just get double-buffered); real
        # failures (e.g. VMEM OOM) fail here too and surface.
        out = build(False)(*args)
    return out.reshape(B, N, D)


# ----------------------------------------------------------------------------- reference
def reference_jax(question, visual, p):
    """Plain-JAX reference for the module forward, mirroring the kernel's
    mixed-precision policy (bf16 matmul/contraction operands, f32 accumulation
    and f32 elementwise math)."""
    f32, bf = jnp.float32, jnp.bfloat16
    c = lambda x: x.astype(bf)
    mm = lambda a, w: jnp.einsum("b...d,de->b...e", c(a), c(w),
                                 preferred_element_type=f32)
    K = p["m0_w"].shape[0]

    # TanhAttention(visual, question)
    q1 = mm(visual, p["ws1_w"]) + p["ws1_b"]                    # [B,N,D]
    m2 = mm(question, p["ws2_w"])                               # [B,L,D]
    item = jnp.tanh(q1[:, :, None, :] + m2[:, None, :, :])      # [B,N,L,D] f32
    scores = jnp.einsum("bnld,d->bnl", c(item), c(p["wst_w"][0]),
                        preferred_element_type=f32)
    attn = jax.nn.softmax(scores, axis=-1)
    t2v = jnp.einsum("bnl,bld->bnd", c(attn), c(question),
                     preferred_element_type=f32)
    # cross gating
    text_gate = jax.nn.sigmoid(mm(t2v, p["g1_w"]))
    visual_final = text_gate * visual
    visual_gate = jax.nn.sigmoid(mm(visual, p["g2_w"]))
    text_final = visual_gate * t2v
    # MFB fusion
    z = 0.0
    for k in range(K):
        a = mm(text_final, p["m0_w"][k]) + p["m0_b"][k]
        b = mm(visual_final, p["m1_w"][k]) + p["m1_b"][k]
        z = z + a * b
    r = jnp.sqrt(jnp.abs(z))
    z = jnp.where(z < 0, -r, r)
    ssq = jnp.sum(z * z, axis=-1, keepdims=True)
    return z * lax.rsqrt(jnp.maximum(ssq, 1e-24))   # == z / max(||z||, 1e-12)


def init_params(key, D):
    K = MFB_FACTOR
    ks = jax.random.split(key, 12)
    n = lambda k, s: (jax.random.normal(k, s, jnp.float32) * 0.05)
    return {
        "ws1_w": n(ks[0], (D, D)),
        "ws1_b": n(ks[1], (1, D)),
        "ws2_w": n(ks[2], (D, D)),
        "wst_w": n(ks[3], (1, D)),
        "g1_w":  n(ks[4], (D, D)),
        "g2_w":  n(ks[5], (D, D)),
        "m0_w":  n(ks[6], (K, D, D)),
        "m0_b":  n(ks[7], (K, 1, D)),
        "m1_w":  n(ks[8], (K, D, D)),
        "m1_b":  n(ks[9], (K, 1, D)),
    }


if __name__ == "__main__":
    B, L, N, D = 2, 8, 16, 128   # batch, question len, num clips, module_dim (small)
    key = jax.random.PRNGKey(0)
    kq, kv, kp = jax.random.split(key, 3)
    question = jax.random.normal(kq, (B, L, D), jnp.float32)
    visual = jax.random.normal(kv, (B, N, D), jnp.float32)
    params = init_params(kp, D)

    out = jax.block_until_ready(visual_enhance_by_query(question, visual, params))
    ref = jax.block_until_ready(reference_jax(question, visual, params))

    assert out.shape == (B, N, D)
    assert jnp.allclose(out, ref, atol=2e-3, rtol=2e-3), (
        "mismatch vs reference, max abs err = %g"
        % float(jnp.max(jnp.abs(out - ref))))
    print("KERNEL_OK")
</pallas_src>

<mosaic_0001>
module attributes {stable_mosaic.version = 11 : i64} {
  func.func @kernel(%arg0: i32, %arg1: memref<1x8x128xf32, #tpu.memory_space<vmem>>, %arg2: memref<16x128xf32, #tpu.memory_space<vmem>>, %arg3: memref<128x256xbf16, #tpu.memory_space<vmem>>, %arg4: memref<1x128xf32, #tpu.memory_space<vmem>>, %arg5: memref<128x128xbf16, #tpu.memory_space<vmem>>, %arg6: memref<128x1xbf16, #tpu.memory_space<vmem>>, %arg7: memref<128x128xbf16, #tpu.memory_space<vmem>>, %arg8: memref<128x256xbf16, #tpu.memory_space<vmem>>, %arg9: memref<1x256xf32, #tpu.memory_space<vmem>>, %arg10: memref<128x256xbf16, #tpu.memory_space<vmem>>, %arg11: memref<1x256xf32, #tpu.memory_space<vmem>>, %arg12: memref<16x128xf32, #tpu.memory_space<vmem>>, %arg13: memref<16x128xf32, #tpu.memory_space<vmem>>, %arg14: memref<16x128xf32, #tpu.memory_space<vmem>>, %arg15: memref<8x128xf32, #tpu.memory_space<vmem>>, %arg16: memref<16x128xf32, #tpu.memory_space<vmem>>) attributes {dimension_semantics = [#tpu.dimension_semantics<parallel>], iteration_bounds = array<i64: 2>, scalar_prefetch = 0 : i64, scratch_operands = 4 : i64, tpu.core_type = #tpu.core_type<tc>, window_params = [{transform_indices = @transform_0, window_bounds = array<i64: 1, 8, 128>}, {transform_indices = @transform_1, window_bounds = array<i64: 16, 128>}, {pipeline_mode = #tpu.pipeline_mode<synchronous>, transform_indices = @transform_2, window_bounds = array<i64: 128, 256>}, {pipeline_mode = #tpu.pipeline_mode<synchronous>, transform_indices = @transform_3, window_bounds = array<i64: 1, 128>}, {pipeline_mode = #tpu.pipeline_mode<synchronous>, transform_indices = @transform_4, window_bounds = array<i64: 128, 128>}, {pipeline_mode = #tpu.pipeline_mode<synchronous>, transform_indices = @transform_5, window_bounds = array<i64: 128, 1>}, {pipeline_mode = #tpu.pipeline_mode<synchronous>, transform_indices = @transform_6, window_bounds = array<i64: 128, 128>}, {pipeline_mode = #tpu.pipeline_mode<synchronous>, transform_indices = @transform_7, window_bounds = array<i64: 128, 256>}, {pipeline_mode = #tpu.pipeline_mode<synchronous>, transform_indices = @transform_8, window_bounds = array<i64: 1, 256>}, {pipeline_mode = #tpu.pipeline_mode<synchronous>, transform_indices = @transform_9, window_bounds = array<i64: 128, 256>}, {pipeline_mode = #tpu.pipeline_mode<synchronous>, transform_indices = @transform_10, window_bounds = array<i64: 1, 256>}, {transform_indices = @transform_11, window_bounds = array<i64: 16, 128>}]} {
    %c0 = arith.constant 0 : index
    %c0_0 = arith.constant 0 : index
    %0 = vector.load %arg2[%c0, %c0_0] : memref<16x128xf32, #tpu.memory_space<vmem>>, vector<16x128xf32>
    %1 = arith.truncf %0 : vector<16x128xf32> to vector<16x128xbf16>
    %c0_1 = arith.constant 0 : index
    %c0_2 = arith.constant 0 : index
    %2 = vector.load %arg3[%c0_1, %c0_2] : memref<128x256xbf16, #tpu.memory_space<vmem>>, vector<128x256xbf16>
    %cst = arith.constant dense<0.000000e+00> : vector<16x256xf32>
    %3 = tpu.matmul %1, %2, %cst {dimension_numbers = #tpu.dot_dimension_numbers<[1], [0], [0], [1], [0, 0, 1, 1], [], []>} : vector<16x128xbf16>, vector<128x256xbf16>, vector<16x256xf32> -> vector<16x256xf32>
    %4 = vector.extract_strided_slice %3 {offsets = [0, 0], sizes = [16, 128], strides = [1, 1]} : vector<16x256xf32> to vector<16x128xf32>
    %c0_3 = arith.constant 0 : index
    %c0_4 = arith.constant 0 : index
    %5 = vector.load %arg4[%c0_3, %c0_4] : memref<1x128xf32, #tpu.memory_space<vmem>>, vector<1x128xf32>
    %6 = vector.broadcast %5 : vector<1x128xf32> to vector<16x128xf32>
    %7 = arith.addf %4, %6 : vector<16x128xf32>
    %c0_5 = arith.constant 0 : index
    %c0_6 = arith.constant 0 : index
    %8 = vector.load %arg13[%c0_5, %c0_6] : memref<16x128xf32, #tpu.memory_space<vmem>>, vector<16x128xf32>
    tpu.vector_store %arg13[%c0_5, %c0_6], %7 {strides = array<i32>} : memref<16x128xf32, #tpu.memory_space<vmem>>, vector<16x128xf32>,
    %9 = vector.extract_strided_slice %3 {offsets = [0, 128], sizes = [16, 128], strides = [1, 1]} : vector<16x256xf32> to vector<16x128xf32>
    %c0_7 = arith.constant 0 : index
    %c0_8 = arith.constant 0 : index
    %10 = vector.load %arg14[%c0_7, %c0_8] : memref<16x128xf32, #tpu.memory_space<vmem>>, vector<16x128xf32>
    tpu.vector_store %arg14[%c0_7, %c0_8], %9 {strides = array<i32>} : memref<16x128xf32, #tpu.memory_space<vmem>>, vector<16x128xf32>,
    %c0_9 = arith.constant 0 : index
    %c0_10 = arith.constant 0 : index
    %c0_11 = arith.constant 0 : index
    %11 = vector.load %arg1[%c0_9, %c0_10, %c0_11] : memref<1x8x128xf32, #tpu.memory_space<vmem>>, vector<1x8x128xf32>
    %12 = vector.shape_cast %11 : vector<1x8x128xf32> to vector<8x128xf32>
    %13 = arith.truncf %12 : vector<8x128xf32> to vector<8x128xbf16>
    %c0_12 = arith.constant 0 : index
    %c0_13 = arith.constant 0 : index
    %14 = vector.load %arg5[%c0_12, %c0_13] : memref<128x128xbf16, #tpu.memory_space<vmem>>, vector<128x128xbf16>
    %cst_14 = arith.constant dense<0.000000e+00> : vector<8x128xf32>
    %15 = tpu.matmul %13, %14, %cst_14 {dimension_numbers = #tpu.dot_dimension_numbers<[1], [0], [0], [1], [0, 0, 1, 1], [], []>} : vector<8x128xbf16>, vector<128x128xbf16>, vector<8x128xf32> -> vector<8x128xf32>
    %c0_15 = arith.constant 0 : index
    %c0_16 = arith.constant 0 : index
    %16 = vector.load %arg15[%c0_15, %c0_16] : memref<8x128xf32, #tpu.memory_space<vmem>>, vector<8x128xf32>
    tpu.vector_store %arg15[%c0_15, %c0_16], %15 {strides = array<i32>} : memref<8x128xf32, #tpu.memory_space<vmem>>, vector<8x128xf32>,
    %c0_17 = arith.constant 0 : index
    %c0_18 = arith.constant 0 : index
    %17 = vector.load %arg13[%c0_17, %c0_18] : memref<16x128xf32, #tpu.memory_space<vmem>>, vector<16x128xf32>
    %c0_19 = arith.constant 0 : index
    %c0_20 = arith.constant 0 : index
    %18 = vector.load %arg15[%c0_19, %c0_20] : memref<8x128xf32, #tpu.memory_space<vmem>>, vector<8x128xf32>
    %19 = vector.shape_cast %17 : vector<16x128xf32> to vector<16x1x128xf32>
    %20 = vector.shape_cast %18 : vector<8x128xf32> to vector<1x8x128xf32>
    %21 = vector.broadcast %19 : vector<16x1x128xf32> to vector<16x8x128xf32>
    %22 = vector.broadcast %20 : vector<1x8x128xf32> to vector<16x8x128xf32>
    %23 = arith.addf %21, %22 : vector<16x8x128xf32>
    %24 = math.tanh %23 : vector<16x8x128xf32>
    %25 = vector.shape_cast %24 : vector<16x8x128xf32> to vector<128x128xf32>
    %26 = arith.truncf %25 : vector<128x128xf32> to vector<128x128xbf16>
    %c0_21 = arith.constant 0 : index
    %c0_22 = arith.constant 0 : index
    %27 = vector.load %arg6[%c0_21, %c0_22] : memref<128x1xbf16, #tpu.memory_space<vmem>>, vector<128x1xbf16>
    %cst_23 = arith.constant dense<0.000000e+00> : vector<128x1xf32>
    %28 = tpu.matmul %26, %27, %cst_23 {dimension_numbers = #tpu.dot_dimension_numbers<[1], [0], [0], [1], [0, 0, 1, 1], [], []>} : vector<128x128xbf16>, vector<128x1xbf16>, vector<128x1xf32> -> vector<128x1xf32>
    %29 = vector.shape_cast %28 : vector<128x1xf32> to vector<16x8xf32>
    %cst_24 = arith.constant dense<0xFF800000> : vector<16xf32>
    %30 = vector.multi_reduction <maximumf>, %29, %cst_24 [1] : vector<16x8xf32> to vector<16xf32>
    %31 = vector.shape_cast %30 : vector<16xf32> to vector<16x1xf32>
    %32 = vector.broadcast %31 : vector<16x1xf32> to vector<16x8xf32>
    %33 = arith.subf %29, %32 : vector<16x8xf32>
    %34 = math.exp %33 : vector<16x8xf32>
    %cst_25 = arith.constant dense<0.000000e+00> : vector<16xf32>
    %35 = vector.multi_reduction <add>, %34, %cst_25 [1] : vector<16x8xf32> to vector<16xf32>
    %36 = vector.shape_cast %35 : vector<16xf32> to vector<16x1xf32>
    %37 = vector.broadcast %36 : vector<16x1xf32> to vector<16x8xf32>
    %38 = arith.divf %34, %37 : vector<16x8xf32>
    %c0_26 = arith.constant 0 : index
    %c0_27 = arith.constant 0 : index
    %c0_28 = arith.constant 0 : index
    %39 = vector.load %arg1[%c0_26, %c0_27, %c0_28] : memref<1x8x128xf32, #tpu.memory_space<vmem>>, vector<1x8x128xf32>
    %40 = vector.shape_cast %39 : vector<1x8x128xf32> to vector<8x128xf32>
    %41 = arith.truncf %40 : vector<8x128xf32> to vector<8x128xbf16>
    %42 = arith.truncf %38 : vector<16x8xf32> to vector<16x8xbf16>
    %cst_29 = arith.constant dense<0.000000e+00> : vector<16x128xf32>
    %43 = tpu.matmul %42, %41, %cst_29 {dimension_numbers = #tpu.dot_dimension_numbers<[1], [0], [0], [1], [0, 0, 1, 1], [], []>} : vector<16x8xbf16>, vector<8x128xbf16>, vector<16x128xf32> -> vector<16x128xf32>
    %c0_30 = arith.constant 0 : index
    %c0_31 = arith.constant 0 : index
    %44 = vector.load %arg16[%c0_30, %c0_31] : memref<16x128xf32, #tpu.memory_space<vmem>>, vector<16x128xf32>
    tpu.vector_store %arg16[%c0_30, %c0_31], %43 {strides = array<i32>} : memref<16x128xf32, #tpu.memory_space<vmem>>, vector<16x128xf32>,
    %c0_32 = arith.constant 0 : index
    %c0_33 = arith.constant 0 : index
    %45 = vector.load %arg2[%c0_32, %c0_33] : memref<16x128xf32, #tpu.memory_space<vmem>>, vector<16x128xf32>
    %c0_34 = arith.constant 0 : index
    %c0_35 = arith.constant 0 : index
    %46 = vector.load %arg16[%c0_34, %c0_35] : memref<16x128xf32, #tpu.memory_space<vmem>>, vector<16x128xf32>
    %47 = arith.truncf %46 : vector<16x128xf32> to vector<16x128xbf16>
    %c0_36 = arith.constant 0 : index
    %c0_37 = arith.constant 0 : index
    %48 = vector.load %arg7[%c0_36, %c0_37] : memref<128x128xbf16, #tpu.memory_space<vmem>>, vector<128x128xbf16>
    %cst_38 = arith.constant dense<0.000000e+00> : vector<16x128xf32>
    %49 = tpu.matmul %47, %48, %cst_38 {dimension_numbers = #tpu.dot_dimension_numbers<[1], [0], [0], [1], [0, 0, 1, 1], [], []>} : vector<16x128xbf16>, vector<128x128xbf16>, vector<16x128xf32> -> vector<16x128xf32>
    %50 = arith.negf %49 : vector<16x128xf32>
    %51 = math.exp %50 : vector<16x128xf32>
    %cst_39 = arith.constant 1.000000e+00 : f32
    %52 = vector.broadcast %cst_39 : f32 to vector<16x128xf32>
    %53 = arith.addf %52, %51 : vector<16x128xf32>
    %54 = arith.divf %52, %53 : vector<16x128xf32>
    %55 = arith.mulf %54, %45 : vector<16x128xf32>
    %c0_40 = arith.constant 0 : index
    %c0_41 = arith.constant 0 : index
    %56 = vector.load %arg14[%c0_40, %c0_41] : memref<16x128xf32, #tpu.memory_space<vmem>>, vector<16x128xf32>
    %57 = arith.negf %56 : vector<16x128xf32>
    %58 = math.exp %57 : vector<16x128xf32>
    %cst_42 = arith.constant 1.000000e+00 : f32
    %59 = vector.broadcast %cst_42 : f32 to vector<16x128xf32>
    %60 = arith.addf %59, %58 : vector<16x128xf32>
    %61 = arith.divf %59, %60 : vector<16x128xf32>
    %62 = arith.mulf %61, %46 : vector<16x128xf32>
    %63 = arith.truncf %62 : vector<16x128xf32> to vector<16x128xbf16>
    %c0_43 = arith.constant 0 : index
    %c0_44 = arith.constant 0 : index
    %64 = vector.load %arg8[%c0_43, %c0_44] : memref<128x256xbf16, #tpu.memory_space<vmem>>, vector<128x256xbf16>
    %cst_45 = arith.constant dense<0.000000e+00> : vector<16x256xf32>
    %65 = tpu.matmul %63, %64, %cst_45 {dimension_numbers = #tpu.dot_dimension_numbers<[1], [0], [0], [1], [0, 0, 1, 1], [], []>} : vector<16x128xbf16>, vector<128x256xbf16>, vector<16x256xf32> -> vector<16x256xf32>
    %c0_46 = arith.constant 0 : index
    %c0_47 = arith.constant 0 : index
    %66 = vector.load %arg9[%c0_46, %c0_47] : memref<1x256xf32, #tpu.memory_space<vmem>>, vector<1x256xf32>
    %67 = vector.broadcast %66 : vector<1x256xf32> to vector<16x256xf32>
    %68 = arith.addf %65, %67 : vector<16x256xf32>
    %69 = arith.truncf %55 : vector<16x128xf32> to vector<16x128xbf16>
    %c0_48 = arith.constant 0 : index
    %c0_49 = arith.constant 0 : index
    %70 = vector.load %arg10[%c0_48, %c0_49] : memref<128x256xbf16, #tpu.memory_space<vmem>>, vector<128x256xbf16>
    %cst_50 = arith.constant dense<0.000000e+00> : vector<16x256xf32>
    %71 = tpu.matmul %69, %70, %cst_50 {dimension_numbers = #tpu.dot_dimension_numbers<[1], [0], [0], [1], [0, 0, 1, 1], [], []>} : vector<16x128xbf16>, vector<128x256xbf16>, vector<16x256xf32> -> vector<16x256xf32>
    %c0_51 = arith.constant 0 : index
    %c0_52 = arith.constant 0 : index
    %72 = vector.load %arg11[%c0_51, %c0_52] : memref<1x256xf32, #tpu.memory_space<vmem>>, vector<1x256xf32>
    %73 = vector.broadcast %72 : vector<1x256xf32> to vector<16x256xf32>
    %74 = arith.addf %71, %73 : vector<16x256xf32>
    %75 = vector.extract_strided_slice %68 {offsets = [0, 0], sizes = [16, 128], strides = [1, 1]} : vector<16x256xf32> to vector<16x128xf32>
    %76 = vector.extract_strided_slice %74 {offsets = [0, 0], sizes = [16, 128], strides = [1, 1]} : vector<16x256xf32> to vector<16x128xf32>
    %77 = arith.mulf %75, %76 : vector<16x128xf32>
    %78 = vector.extract_strided_slice %68 {offsets = [0, 128], sizes = [16, 128], strides = [1, 1]} : vector<16x256xf32> to vector<16x128xf32>
    %79 = vector.extract_strided_slice %74 {offsets = [0, 128], sizes = [16, 128], strides = [1, 1]} : vector<16x256xf32> to vector<16x128xf32>
    %80 = arith.mulf %78, %79 : vector<16x128xf32>
    %81 = arith.addf %77, %80 : vector<16x128xf32>
    %82 = math.absf %81 : vector<16x128xf32>
    %83 = math.sqrt %82 : vector<16x128xf32>
    %cst_53 = arith.constant 0.000000e+00 : f32
    %84 = vector.broadcast %cst_53 : f32 to vector<16x128xf32>
    %85 = arith.cmpf olt, %81, %84 : vector<16x128xf32>
    %cst_54 = arith.constant 0.000000e+00 : f32
    %86 = vector.broadcast %cst_54 : f32 to vector<16x128xf32>
    %87 = arith.subf %86, %83 : vector<16x128xf32>
    %88 = arith.select %85, %87, %83 : vector<16x128xi1>, vector<16x128xf32>
    %89 = arith.mulf %88, %88 : vector<16x128xf32>
    %cst_55 = arith.constant dense<0.000000e+00> : vector<16xf32>
    %90 = vector.multi_reduction <add>, %89, %cst_55 [1] : vector<16x128xf32> to vector<16xf32>
    %91 = vector.shape_cast %90 : vector<16xf32> to vector<16x1xf32>
    %cst_56 = arith.constant 1.000000e-24 : f32
    %92 = vector.broadcast %cst_56 : f32 to vector<16x1xf32>
    %93 = arith.maximumf %91, %92 : vector<16x1xf32>
    %94 = math.rsqrt %93 : vector<16x1xf32>
    %95 = vector.broadcast %94 : vector<16x1xf32> to vector<16x128xf32>
    %96 = arith.mulf %88, %95 : vector<16x128xf32>
    %c0_57 = arith.constant 0 : index
    %c0_58 = arith.constant 0 : index
    %97 = vector.load %arg12[%c0_57, %c0_58] : memref<16x128xf32, #tpu.memory_space<vmem>>, vector<16x128xf32>
    tpu.vector_store %arg12[%c0_57, %c0_58], %96 {strides = array<i32>} : memref<16x128xf32, #tpu.memory_space<vmem>>, vector<16x128xf32>,
    return
  }
  func.func @transform_0(%arg0: i32) -> (i32, i32, i32) {
    %c0_i32 = arith.constant 0 : i32
    %c0_i32_0 = arith.constant 0 : i32
    %c0_i32_1 = arith.constant 0 : i32
    return %arg0, %c0_i32, %c0_i32_0 : i32, i32, i32
  }
  func.func @transform_1(%arg0: i32) -> (i32, i32) {
    %c0_i32 = arith.constant 0 : i32
    %c0_i32_0 = arith.constant 0 : i32
    return %arg0, %c0_i32 : i32, i32
  }
  func.func @transform_2(%arg0: i32) -> (i32, i32) {
    %c0_i32 = arith.constant 0 : i32
    %c0_i32_0 = arith.constant 0 : i32
    %c0_i32_1 = arith.constant 0 : i32
    return %c0_i32, %c0_i32_0 : i32, i32
  }
  func.func @transform_3(%arg0: i32) -> (i32, i32) {
    %c0_i32 = arith.constant 0 : i32
    %c0_i32_0 = arith.constant 0 : i32
    %c0_i32_1 = arith.constant 0 : i32
    return %c0_i32, %c0_i32_0 : i32, i32
  }
  func.func @transform_4(%arg0: i32) -> (i32, i32) {
    %c0_i32 = arith.constant 0 : i32
    %c0_i32_0 = arith.constant 0 : i32
    %c0_i32_1 = arith.constant 0 : i32
    return %c0_i32, %c0_i32_0 : i32, i32
  }
  func.func @transform_5(%arg0: i32) -> (i32, i32) {
    %c0_i32 = arith.constant 0 : i32
    %c0_i32_0 = arith.constant 0 : i32
    %c0_i32_1 = arith.constant 0 : i32
    return %c0_i32, %c0_i32_0 : i32, i32
  }
  func.func @transform_6(%arg0: i32) -> (i32, i32) {
    %c0_i32 = arith.constant 0 : i32
    %c0_i32_0 = arith.constant 0 : i32
    %c0_i32_1 = arith.constant 0 : i32
    return %c0_i32, %c0_i32_0 : i32, i32
  }
  func.func @transform_7(%arg0: i32) -> (i32, i32) {
    %c0_i32 = arith.constant 0 : i32
    %c0_i32_0 = arith.constant 0 : i32
    %c0_i32_1 = arith.constant 0 : i32
    return %c0_i32, %c0_i32_0 : i32, i32
  }
  func.func @transform_8(%arg0: i32) -> (i32, i32) {
    %c0_i32 = arith.constant 0 : i32
    %c0_i32_0 = arith.constant 0 : i32
    %c0_i32_1 = arith.constant 0 : i32
    return %c0_i32, %c0_i32_0 : i32, i32
  }
  func.func @transform_9(%arg0: i32) -> (i32, i32) {
    %c0_i32 = arith.constant 0 : i32
    %c0_i32_0 = arith.constant 0 : i32
    %c0_i32_1 = arith.constant 0 : i32
    return %c0_i32, %c0_i32_0 : i32, i32
  }
  func.func @transform_10(%arg0: i32) -> (i32, i32) {
    %c0_i32 = arith.constant 0 : i32
    %c0_i32_0 = arith.constant 0 : i32
    %c0_i32_1 = arith.constant 0 : i32
    return %c0_i32, %c0_i32_0 : i32, i32
  }
  func.func @transform_11(%arg0: i32) -> (i32, i32) {
    %c0_i32 = arith.constant 0 : i32
    %c0_i32_0 = arith.constant 0 : i32
    return %arg0, %c0_i32 : i32, i32
  }
}

module attributes {stable_mosaic.version = 11 : i64} {
  func.func @kernel(%arg0: i32, %arg1: memref<1x8x128xf32, #tpu.memory_space<vmem>>, %arg2: memref<16x128xf32, #tpu.memory_space<vmem>>, %arg3: memref<128x256xbf16, #tpu.memory_space<vmem>>, %arg4: memref<1x128xf32, #tpu.memory_space<vmem>>, %arg5: memref<128x128xbf16, #tpu.memory_space<vmem>>, %arg6: memref<128x1xbf16, #tpu.memory_space<vmem>>, %arg7: memref<128x128xbf16, #tpu.memory_space<vmem>>, %arg8: memref<128x256xbf16, #tpu.memory_space<vmem>>, %arg9: memref<1x256xf32, #tpu.memory_space<vmem>>, %arg10: memref<128x256xbf16, #tpu.memory_space<vmem>>, %arg11: memref<1x256xf32, #tpu.memory_space<vmem>>, %arg12: memref<16x128xf32, #tpu.memory_space<vmem>>, %arg13: memref<16x128xf32, #tpu.memory_space<vmem>>, %arg14: memref<16x128xf32, #tpu.memory_space<vmem>>, %arg15: memref<8x128xf32, #tpu.memory_space<vmem>>, %arg16: memref<16x128xf32, #tpu.memory_space<vmem>>) attributes {dimension_semantics = [#tpu.dimension_semantics<parallel>], iteration_bounds = array<i64: 2>, scalar_prefetch = 0 : i64, scratch_operands = 4 : i64, tpu.core_type = #tpu.core_type<tc>, window_params = [{transform_indices = @transform_0, window_bounds = array<i64: 1, 8, 128>}, {transform_indices = @transform_1, window_bounds = array<i64: 16, 128>}, {pipeline_mode = #tpu.pipeline_mode<synchronous>, transform_indices = @transform_2, window_bounds = array<i64: 128, 256>}, {pipeline_mode = #tpu.pipeline_mode<synchronous>, transform_indices = @transform_3, window_bounds = array<i64: 1, 128>}, {pipeline_mode = #tpu.pipeline_mode<synchronous>, transform_indices = @transform_4, window_bounds = array<i64: 128, 128>}, {pipeline_mode = #tpu.pipeline_mode<synchronous>, transform_indices = @transform_5, window_bounds = array<i64: 128, 1>}, {pipeline_mode = #tpu.pipeline_mode<synchronous>, transform_indices = @transform_6, window_bounds = array<i64: 128, 128>}, {pipeline_mode = #tpu.pipeline_mode<synchronous>, transform_indices = @transform_7, window_bounds = array<i64: 128, 256>}, {pipeline_mode = #tpu.pipeline_mode<synchronous>, transform_indices = @transform_8, window_bounds = array<i64: 1, 256>}, {pipeline_mode = #tpu.pipeline_mode<synchronous>, transform_indices = @transform_9, window_bounds = array<i64: 128, 256>}, {pipeline_mode = #tpu.pipeline_mode<synchronous>, transform_indices = @transform_10, window_bounds = array<i64: 1, 256>}, {transform_indices = @transform_11, window_bounds = array<i64: 16, 128>}]} {
    %c0 = arith.constant 0 : index
    %c0_0 = arith.constant 0 : index
    %0 = vector.load %arg2[%c0, %c0_0] : memref<16x128xf32, #tpu.memory_space<vmem>>, vector<16x128xf32>
    %1 = arith.truncf %0 : vector<16x128xf32> to vector<16x128xbf16>
    %c0_1 = arith.constant 0 : index
    %c0_2 = arith.constant 0 : index
    %2 = vector.load %arg3[%c0_1, %c0_2] : memref<128x256xbf16, #tpu.memory_space<vmem>>, vector<128x256xbf16>
    %cst = arith.constant dense<0.000000e+00> : vector<16x256xf32>
    %3 = tpu.matmul %1, %2, %cst {dimension_numbers = #tpu.dot_dimension_numbers<[1], [0], [0], [1], [0, 0, 1, 1], [], []>} : vector<16x128xbf16>, vector<128x256xbf16>, vector<16x256xf32> -> vector<16x256xf32>
    %4 = vector.extract_strided_slice %3 {offsets = [0, 0], sizes = [16, 128], strides = [1, 1]} : vector<16x256xf32> to vector<16x128xf32>
    %c0_3 = arith.constant 0 : index
    %c0_4 = arith.constant 0 : index
    %5 = vector.load %arg4[%c0_3, %c0_4] : memref<1x128xf32, #tpu.memory_space<vmem>>, vector<1x128xf32>
    %6 = vector.broadcast %5 : vector<1x128xf32> to vector<16x128xf32>
    %7 = arith.addf %4, %6 : vector<16x128xf32>
    %c0_5 = arith.constant 0 : index
    %c0_6 = arith.constant 0 : index
    %8 = vector.load %arg13[%c0_5, %c0_6] : memref<16x128xf32, #tpu.memory_space<vmem>>, vector<16x128xf32>
    tpu.vector_store %arg13[%c0_5, %c0_6], %7 {strides = array<i32>} : memref<16x128xf32, #tpu.memory_space<vmem>>, vector<16x128xf32>,
    %9 = vector.extract_strided_slice %3 {offsets = [0, 128], sizes = [16, 128], strides = [1, 1]} : vector<16x256xf32> to vector<16x128xf32>
    %c0_7 = arith.constant 0 : index
    %c0_8 = arith.constant 0 : index
    %10 = vector.load %arg14[%c0_7, %c0_8] : memref<16x128xf32, #tpu.memory_space<vmem>>, vector<16x128xf32>
    tpu.vector_store %arg14[%c0_7, %c0_8], %9 {strides = array<i32>} : memref<16x128xf32, #tpu.memory_space<vmem>>, vector<16x128xf32>,
    %c0_9 = arith.constant 0 : index
    %c0_10 = arith.constant 0 : index
    %c0_11 = arith.constant 0 : index
    %11 = vector.load %arg1[%c0_9, %c0_10, %c0_11] : memref<1x8x128xf32, #tpu.memory_space<vmem>>, vector<1x8x128xf32>
    %12 = vector.shape_cast %11 : vector<1x8x128xf32> to vector<8x128xf32>
    %13 = arith.truncf %12 : vector<8x128xf32> to vector<8x128xbf16>
    %c0_12 = arith.constant 0 : index
    %c0_13 = arith.constant 0 : index
    %14 = vector.load %arg5[%c0_12, %c0_13] : memref<128x128xbf16, #tpu.memory_space<vmem>>, vector<128x128xbf16>
    %cst_14 = arith.constant dense<0.000000e+00> : vector<8x128xf32>
    %15 = tpu.matmul %13, %14, %cst_14 {dimension_numbers = #tpu.dot_dimension_numbers<[1], [0], [0], [1], [0, 0, 1, 1], [], []>} : vector<8x128xbf16>, vector<128x128xbf16>, vector<8x128xf32> -> vector<8x128xf32>
    %c0_15 = arith.constant 0 : index
    %c0_16 = arith.constant 0 : index
    %16 = vector.load %arg15[%c0_15, %c0_16] : memref<8x128xf32, #tpu.memory_space<vmem>>, vector<8x128xf32>
    tpu.vector_store %arg15[%c0_15, %c0_16], %15 {strides = array<i32>} : memref<8x128xf32, #tpu.memory_space<vmem>>, vector<8x128xf32>,
    %c0_17 = arith.constant 0 : index
    %c0_18 = arith.constant 0 : index
    %17 = vector.load %arg13[%c0_17, %c0_18] : memref<16x128xf32, #tpu.memory_space<vmem>>, vector<16x128xf32>
    %c0_19 = arith.constant 0 : index
    %c0_20 = arith.constant 0 : index
    %18 = vector.load %arg15[%c0_19, %c0_20] : memref<8x128xf32, #tpu.memory_space<vmem>>, vector<8x128xf32>
    %19 = vector.shape_cast %17 : vector<16x128xf32> to vector<16x1x128xf32>
    %20 = vector.shape_cast %18 : vector<8x128xf32> to vector<1x8x128xf32>
    %21 = vector.broadcast %19 : vector<16x1x128xf32> to vector<16x8x128xf32>
    %22 = vector.broadcast %20 : vector<1x8x128xf32> to vector<16x8x128xf32>
    %23 = arith.addf %21, %22 : vector<16x8x128xf32>
    %24 = math.tanh %23 : vector<16x8x128xf32>
    %25 = vector.shape_cast %24 : vector<16x8x128xf32> to vector<128x128xf32>
    %26 = arith.truncf %25 : vector<128x128xf32> to vector<128x128xbf16>
    %c0_21 = arith.constant 0 : index
    %c0_22 = arith.constant 0 : index
    %27 = vector.load %arg6[%c0_21, %c0_22] : memref<128x1xbf16, #tpu.memory_space<vmem>>, vector<128x1xbf16>
    %cst_23 = arith.constant dense<0.000000e+00> : vector<128x1xf32>
    %28 = tpu.matmul %26, %27, %cst_23 {dimension_numbers = #tpu.dot_dimension_numbers<[1], [0], [0], [1], [0, 0, 1, 1], [], []>} : vector<128x128xbf16>, vector<128x1xbf16>, vector<128x1xf32> -> vector<128x1xf32>
    %29 = vector.shape_cast %28 : vector<128x1xf32> to vector<16x8xf32>
    %cst_24 = arith.constant dense<0xFF800000> : vector<16xf32>
    %30 = vector.multi_reduction <maximumf>, %29, %cst_24 [1] : vector<16x8xf32> to vector<16xf32>
    %31 = vector.shape_cast %30 : vector<16xf32> to vector<16x1xf32>
    %32 = vector.broadcast %31 : vector<16x1xf32> to vector<16x8xf32>
    %33 = arith.subf %29, %32 : vector<16x8xf32>
    %34 = math.exp %33 : vector<16x8xf32>
    %cst_25 = arith.constant dense<0.000000e+00> : vector<16xf32>
    %35 = vector.multi_reduction <add>, %34, %cst_25 [1] : vector<16x8xf32> to vector<16xf32>
    %36 = vector.shape_cast %35 : vector<16xf32> to vector<16x1xf32>
    %37 = vector.broadcast %36 : vector<16x1xf32> to vector<16x8xf32>
    %38 = arith.divf %34, %37 : vector<16x8xf32>
    %c0_26 = arith.constant 0 : index
    %c0_27 = arith.constant 0 : index
    %c0_28 = arith.constant 0 : index
    %39 = vector.load %arg1[%c0_26, %c0_27, %c0_28] : memref<1x8x128xf32, #tpu.memory_space<vmem>>, vector<1x8x128xf32>
    %40 = vector.shape_cast %39 : vector<1x8x128xf32> to vector<8x128xf32>
    %41 = arith.truncf %40 : vector<8x128xf32> to vector<8x128xbf16>
    %42 = arith.truncf %38 : vector<16x8xf32> to vector<16x8xbf16>
    %cst_29 = arith.constant dense<0.000000e+00> : vector<16x128xf32>
    %43 = tpu.matmul %42, %41, %cst_29 {dimension_numbers = #tpu.dot_dimension_numbers<[1], [0], [0], [1], [0, 0, 1, 1], [], []>} : vector<16x8xbf16>, vector<8x128xbf16>, vector<16x128xf32> -> vector<16x128xf32>
    %c0_30 = arith.constant 0 : index
    %c0_31 = arith.constant 0 : index
    %44 = vector.load %arg16[%c0_30, %c0_31] : memref<16x128xf32, #tpu.memory_space<vmem>>, vector<16x128xf32>
    tpu.vector_store %arg16[%c0_30, %c0_31], %43 {strides = array<i32>} : memref<16x128xf32, #tpu.memory_space<vmem>>, vector<16x128xf32>,
    %c0_32 = arith.constant 0 : index
    %c0_33 = arith.constant 0 : index
    %45 = vector.load %arg2[%c0_32, %c0_33] : memref<16x128xf32, #tpu.memory_space<vmem>>, vector<16x128xf32>
    %c0_34 = arith.constant 0 : index
    %c0_35 = arith.constant 0 : index
    %46 = vector.load %arg16[%c0_34, %c0_35] : memref<16x128xf32, #tpu.memory_space<vmem>>, vector<16x128xf32>
    %47 = arith.truncf %46 : vector<16x128xf32> to vector<16x128xbf16>
    %c0_36 = arith.constant 0 : index
    %c0_37 = arith.constant 0 : index
    %48 = vector.load %arg7[%c0_36, %c0_37] : memref<128x128xbf16, #tpu.memory_space<vmem>>, vector<128x128xbf16>
    %cst_38 = arith.constant dense<0.000000e+00> : vector<16x128xf32>
    %49 = tpu.matmul %47, %48, %cst_38 {dimension_numbers = #tpu.dot_dimension_numbers<[1], [0], [0], [1], [0, 0, 1, 1], [], []>} : vector<16x128xbf16>, vector<128x128xbf16>, vector<16x128xf32> -> vector<16x128xf32>
    %50 = arith.negf %49 : vector<16x128xf32>
    %51 = math.exp %50 : vector<16x128xf32>
    %cst_39 = arith.constant 1.000000e+00 : f32
    %52 = vector.broadcast %cst_39 : f32 to vector<16x128xf32>
    %53 = arith.addf %52, %51 : vector<16x128xf32>
    %54 = arith.divf %52, %53 : vector<16x128xf32>
    %55 = arith.mulf %54, %45 : vector<16x128xf32>
    %c0_40 = arith.constant 0 : index
    %c0_41 = arith.constant 0 : index
    %56 = vector.load %arg14[%c0_40, %c0_41] : memref<16x128xf32, #tpu.memory_space<vmem>>, vector<16x128xf32>
    %57 = arith.negf %56 : vector<16x128xf32>
    %58 = math.exp %57 : vector<16x128xf32>
    %cst_42 = arith.constant 1.000000e+00 : f32
    %59 = vector.broadcast %cst_42 : f32 to vector<16x128xf32>
    %60 = arith.addf %59, %58 : vector<16x128xf32>
    %61 = arith.divf %59, %60 : vector<16x128xf32>
    %62 = arith.mulf %61, %46 : vector<16x128xf32>
    %63 = arith.truncf %62 : vector<16x128xf32> to vector<16x128xbf16>
    %c0_43 = arith.constant 0 : index
    %c0_44 = arith.constant 0 : index
    %64 = vector.load %arg8[%c0_43, %c0_44] : memref<128x256xbf16, #tpu.memory_space<vmem>>, vector<128x256xbf16>
    %cst_45 = arith.constant dense<0.000000e+00> : vector<16x256xf32>
    %65 = tpu.matmul %63, %64, %cst_45 {dimension_numbers = #tpu.dot_dimension_numbers<[1], [0], [0], [1], [0, 0, 1, 1], [], []>} : vector<16x128xbf16>, vector<128x256xbf16>, vector<16x256xf32> -> vector<16x256xf32>
    %c0_46 = arith.constant 0 : index
    %c0_47 = arith.constant 0 : index
    %66 = vector.load %arg9[%c0_46, %c0_47] : memref<1x256xf32, #tpu.memory_space<vmem>>, vector<1x256xf32>
    %67 = vector.broadcast %66 : vector<1x256xf32> to vector<16x256xf32>
    %68 = arith.addf %65, %67 : vector<16x256xf32>
    %69 = arith.truncf %55 : vector<16x128xf32> to vector<16x128xbf16>
    %c0_48 = arith.constant 0 : index
    %c0_49 = arith.constant 0 : index
    %70 = vector.load %arg10[%c0_48, %c0_49] : memref<128x256xbf16, #tpu.memory_space<vmem>>, vector<128x256xbf16>
    %cst_50 = arith.constant dense<0.000000e+00> : vector<16x256xf32>
    %71 = tpu.matmul %69, %70, %cst_50 {dimension_numbers = #tpu.dot_dimension_numbers<[1], [0], [0], [1], [0, 0, 1, 1], [], []>} : vector<16x128xbf16>, vector<128x256xbf16>, vector<16x256xf32> -> vector<16x256xf32>
    %c0_51 = arith.constant 0 : index
    %c0_52 = arith.constant 0 : index
    %72 = vector.load %arg11[%c0_51, %c0_52] : memref<1x256xf32, #tpu.memory_space<vmem>>, vector<1x256xf32>
    %73 = vector.broadcast %72 : vector<1x256xf32> to vector<16x256xf32>
    %74 = arith.addf %71, %73 : vector<16x256xf32>
    %75 = vector.extract_strided_slice %68 {offsets = [0, 0], sizes = [16, 128], strides = [1, 1]} : vector<16x256xf32> to vector<16x128xf32>
    %76 = vector.extract_strided_slice %74 {offsets = [0, 0], sizes = [16, 128], strides = [1, 1]} : vector<16x256xf32> to vector<16x128xf32>
    %77 = arith.mulf %75, %76 : vector<16x128xf32>
    %78 = vector.extract_strided_slice %68 {offsets = [0, 128], sizes = [16, 128], strides = [1, 1]} : vector<16x256xf32> to vector<16x128xf32>
    %79 = vector.extract_strided_slice %74 {offsets = [0, 128], sizes = [16, 128], strides = [1, 1]} : vector<16x256xf32> to vector<16x128xf32>
    %80 = arith.mulf %78, %79 : vector<16x128xf32>
    %81 = arith.addf %77, %80 : vector<16x128xf32>
    %82 = math.absf %81 : vector<16x128xf32>
    %83 = math.sqrt %82 : vector<16x128xf32>
    %cst_53 = arith.constant 0.000000e+00 : f32
    %84 = vector.broadcast %cst_53 : f32 to vector<16x128xf32>
    %85 = arith.cmpf olt, %81, %84 : vector<16x128xf32>
    %cst_54 = arith.constant 0.000000e+00 : f32
    %86 = vector.broadcast %cst_54 : f32 to vector<16x128xf32>
    %87 = arith.subf %86, %83 : vector<16x128xf32>
    %88 = arith.select %85, %87, %83 : vector<16x128xi1>, vector<16x128xf32>
    %89 = arith.mulf %88, %88 : vector<16x128xf32>
    %cst_55 = arith.constant dense<0.000000e+00> : vector<16xf32>
    %90 = vector.multi_reduction <add>, %89, %cst_55 [1] : vector<16x128xf32> to vector<16xf32>
    %91 = vector.shape_cast %90 : vector<16xf32> to vector<16x1xf32>
    %cst_56 = arith.constant 1.000000e-24 : f32
    %92 = vector.broadcast %cst_56 : f32 to vector<16x1xf32>
    %93 = arith.maximumf %91, %92 : vector<16x1xf32>
    %94 = math.rsqrt %93 : vector<16x1xf32>
    %95 = vector.broadcast %94 : vector<16x1xf32> to vector<16x128xf32>
    %96 = arith.mulf %88, %95 : vector<16x128xf32>
    %c0_57 = arith.constant 0 : index
    %c0_58 = arith.constant 0 : index
    %97 = vector.load %arg12[%c0_57, %c0_58] : memref<16x128xf32, #tpu.memory_space<vmem>>, vector<16x128xf32>
    tpu.vector_store %arg12[%c0_57, %c0_58], %96 {strides = array<i32>} : memref<16x128xf32, #tpu.memory_space<vmem>>, vector<16x128xf32>,
    return
  }
  func.func @transform_0(%arg0: i32) -> (i32, i32, i32) {
    %c0_i32 = arith.constant 0 : i32
    %c0_i32_0 = arith.constant 0 : i32
    %c0_i32_1 = arith.constant 0 : i32
    return %arg0, %c0_i32, %c0_i32_0 : i32, i32, i32
  }
  func.func @transform_1(%arg0: i32) -> (i32, i32) {
    %c0_i32 = arith.constant 0 : i32
    %c0_i32_0 = arith.constant 0 : i32
    return %arg0, %c0_i32 : i32, i32
  }
  func.func @transform_2(%arg0: i32) -> (i32, i32) {
    %c0_i32 = arith.constant 0 : i32
    %c0_i32_0 = arith.constant 0 : i32
    %c0_i32_1 = arith.constant 0 : i32
    return %c0_i32, %c0_i32_0 : i32, i32
  }
  func.func @transform_3(%arg0: i32) -> (i32, i32) {
    %c0_i32 = arith.constant 0 : i32
    %c0_i32_0 = arith.constant 0 : i32
    %c0_i32_1 = arith.constant 0 : i32
    return %c0_i32, %c0_i32_0 : i32, i32
  }
  func.func @transform_4(%arg0: i32) -> (i32, i32) {
    %c0_i32 = arith.constant 0 : i32
    %c0_i32_0 = arith.constant 0 : i32
    %c0_i32_1 = arith.constant 0 : i32
    return %c0_i32, %c0_i32_0 : i32, i32
  }
  func.func @transform_5(%arg0: i32) -> (i32, i32) {
    %c0_i32 = arith.constant 0 : i32
    %c0_i32_0 = arith.constant 0 : i32
    %c0_i32_1 = arith.constant 0 : i32
    return %c0_i32, %c0_i32_0 : i32, i32
  }
  func.func @transform_6(%arg0: i32) -> (i32, i32) {
    %c0_i32 = arith.constant 0 : i32
    %c0_i32_0 = arith.constant 0 : i32
    %c0_i32_1 = arith.constant 0 : i32
    return %c0_i32, %c0_i32_0 : i32, i32
  }
  func.func @transform_7(%arg0: i32) -> (i32, i32) {
    %c0_i32 = arith.constant 0 : i32
    %c0_i32_0 = arith.constant 0 : i32
    %c0_i32_1 = arith.constant 0 : i32
    return %c0_i32, %c0_i32_0 : i32, i32
  }
  func.func @transform_8(%arg0: i32) -> (i32, i32) {
    %c0_i32 = arith.constant 0 : i32
    %c0_i32_0 = arith.constant 0 : i32
    %c0_i32_1 = arith.constant 0 : i32
    return %c0_i32, %c0_i32_0 : i32, i32
  }
  func.func @transform_9(%arg0: i32) -> (i32, i32) {
    %c0_i32 = arith.constant 0 : i32
    %c0_i32_0 = arith.constant 0 : i32
    %c0_i32_1 = arith.constant 0 : i32
    return %c0_i32, %c0_i32_0 : i32, i32
  }
  func.func @transform_10(%arg0: i32) -> (i32, i32) {
    %c0_i32 = arith.constant 0 : i32
    %c0_i32_0 = arith.constant 0 : i32
    %c0_i32_1 = arith.constant 0 : i32
    return %c0_i32, %c0_i32_0 : i32, i32
  }
  func.func @transform_11(%arg0: i32) -> (i32, i32) {
    %c0_i32 = arith.constant 0 : i32
    %c0_i32_0 = arith.constant 0 : i32
    return %arg0, %c0_i32 : i32, i32
  }
}

</mosaic_0001>

<llo_original>
// kernel: tpu_custom_call.1
$region0: #{tpu_custom_call.1}
  #allocation0 [shape = 'u32[]', space=smem, size = 0x4, offset = 0x4, fixed_abs, tag = 'smem constant byte address 0x4 - core index']
  #allocation1 [shape = 'u32[72,128]{1,0:T(1,128)}', space=vmem, size = 0x9000, scoped, tag = 'internal scratch']
  #allocation2 [shape = 'f32[16,128]{1,0:T(8,128)}', space=vmem, size = 0x2000, scoped, tag = 'scratch operand']
  #allocation3 [shape = 'f32[16,128]{1,0:T(8,128)}', space=vmem, size = 0x2000, scoped, tag = 'scratch operand']
  #allocation4 [shape = 'f32[8,128]{1,0:T(8,128)}', space=vmem, size = 0x1000, scoped, tag = 'scratch operand']
  #allocation5 [shape = 'f32[16,128]{1,0:T(8,128)}', space=vmem, size = 0x2000, scoped, tag = 'scratch operand']
  %s0 = inlined_call_operand.hbm [shape: f32[2,8,128], index: 0, kind: input, shape index: {}]
  %s1 = inlined_call_operand.hbm [shape: f32[32,128], index: 1, kind: input, shape index: {}]
  %s2 = inlined_call_operand.hbm [shape: bf16[128,256], index: 2, kind: input, shape index: {}]
  %s3 = inlined_call_operand.vmem [shape: f32[1,128], index: 3, kind: input, shape index: {}]
  %s4 = inlined_call_operand.vmem [shape: bf16[128,128], index: 4, kind: input, shape index: {}]
  %s5 = inlined_call_operand.vmem [shape: bf16[128,1], index: 5, kind: input, shape index: {}]
  %s6 = inlined_call_operand.hbm [shape: bf16[128,128], index: 6, kind: input, shape index: {}]
  %s7 = inlined_call_operand.hbm [shape: bf16[128,256], index: 7, kind: input, shape index: {}]
  %s8 = inlined_call_operand.vmem [shape: f32[1,256], index: 8, kind: input, shape index: {}]
  %s9 = inlined_call_operand.hbm [shape: bf16[128,256], index: 9, kind: input, shape index: {}]
  %s10 = inlined_call_operand.vmem [shape: f32[1,256], index: 10, kind: input, shape index: {}]
  %s11 = inlined_call_operand.hbm [shape: f32[32,128], index: 11, kind: output, shape index: {}]
  %s12 = sld [smem:[#allocation0]]
  $region101: #{tpu_custom_call.1} parent=0
    _
  %s14 = ssub.s32 1, %s12
  %s15 = scalar_select 0, %s14, %s12
  $region1: #{tpu_custom_call.1} parent=0
    #allocation6 [shape = 'u8[8192]{0}', space=vmem, size = 0x2000, scoped, tag = 'input window, operand 0']
    #allocation7 [shape = 's32[2]{0}', space=sflag, size = 0x8, scoped, tag = 'scoped memory for tpu_custom_call.1']
    #allocation8 [shape = 's32[2]{0}', space=sflag, size = 0x8, scoped, tag = 'scoped memory for tpu_custom_call.1']
    #allocation9 [shape = 'u8[16384]{0}', space=vmem, size = 0x4000, scoped, tag = 'input window, operand 1']
    #allocation10 [shape = 's32[2]{0}', space=sflag, size = 0x8, scoped, tag = 'scoped memory for tpu_custom_call.1']
    #allocation11 [shape = 'u8[65536]{0}', space=vmem, size = 0x10000, scoped, tag = 'input window, operand 2, single buffered']
    #allocation12 [shape = 'u8[32768]{0}', space=vmem, size = 0x8000, scoped, tag = 'input window, operand 6, single buffered']
    #allocation13 [shape = 's32[1]{0}', space=sflag, size = 0x4, scoped, tag = 'scoped memory for tpu_custom_call.1']
    #allocation14 [shape = 'u8[65536]{0}', space=vmem, size = 0x10000, scoped, tag = 'input window, operand 7, single buffered']
    #allocation15 [shape = 'u8[65536]{0}', space=vmem, size = 0x10000, scoped, tag = 'input window, operand 9, single buffered']
    #allocation16 [shape = 's32[1]{0}', space=sflag, size = 0x4, scoped, tag = 'scoped memory for tpu_custom_call.1']
    #allocation17 [shape = 'u8[16384]{0}', space=vmem, size = 0x4000, scoped, tag = 'output window, operand 0']
    %16 = vsyncpa [#allocation7], 0
    %s17 = scalar_lea.sflag [#allocation7], 1
    %18 = vsyncpa %s17, 0
    %19 = vsyncpa [#allocation10], 0
    %s20 = scalar_lea.sflag [#allocation10], 1
    %21 = vsyncpa %s20, 0
    %22 = vsyncpa [#allocation13], 0
    %23 = vsyncpa [#allocation16], 0
    %24 = vsyncpa [#allocation8], 0
    %s25 = scalar_lea.sflag [#allocation8], 1
    %26 = vsyncpa %s25, 0
    loop: start=0, step=1, limit=4
    $region2: #{tpu_custom_call.1} parent=1 // loop_pre_header
      _
    $region3: #{tpu_custom_call.1} parent=1 // loop_header
      %s28 = sphi 0, %s32
      %p29 = scmp.ge.s32.totalorder %s28, 4
      %s38 = sphi 0, %s40
      %s41 = sphi 0, %s38
      %s42 = sphi 0, %s41
      %s58 = sphi 0, %s42
      %s64 = sphi 0, %s66
      %s67 = sphi 0, %s64
      %s68 = sphi 0, %s67
      %s84 = sphi 0, %s68
      %s88 = sphi 0, %s88
      %s90 = sphi 0, %s88
      %s91 = sphi 0, %s90
      %s105 = sphi 0, %s91
      %s109 = sphi 0, %s109
      %s111 = sphi 0, %s109
      %s112 = sphi 0, %s111
      %s126 = sphi 0, %s112
      %s130 = sphi 0, %s130
      %s132 = sphi 0, %s130
      %s133 = sphi 0, %s132
      %s147 = sphi 0, %s133
      %s151 = sphi 0, %s151
      %s153 = sphi 0, %s151
      %s154 = sphi 0, %s153
      %s168 = sphi 0, %s154
      %s172 = sphi 0, %s172
      %s174 = sphi 0, %s172
      %s175 = sphi 0, %s174
      %s189 = sphi 0, %s175
      %s193 = sphi 0, %s193
      %s195 = sphi 0, %s193
      %s196 = sphi 0, %s195
      %s210 = sphi 0, %s196
      %s214 = sphi 0, %s214
      %s216 = sphi 0, %s214
      %s217 = sphi 0, %s216
      %s231 = sphi 0, %s217
      %s235 = sphi 0, %s235
      %s237 = sphi 0, %s235
      %s238 = sphi 0, %s237
      %s252 = sphi 0, %s238
      %s256 = sphi 0, %s256
      %s258 = sphi 0, %s256
      %s259 = sphi 0, %s258
      %s273 = sphi 0, %s259
      %s279 = sphi 0, %s281
      %s282 = sphi 0, %s279
      %s283 = sphi 0, %s282
      %s299 = sphi 0, %s283
    $region4: #{tpu_custom_call.1} parent=1 // loop_header_branch
      %31 = sbr.rel (%p29) target = $region8
    $region5: #{tpu_custom_call.1} parent=1 // loop_body
      %s33 = ssub.s32 %s28, 1
      %s34 = ssub.s32 %s28, 2
      %s35 = sadd.s32 %s28, 1
      %s36 = ssub.s32 %s28, %s35
      %p37 = scmp.eq.s32.totalorder %s36, 0
      %s39 = sadd.s32 %s38, 1
      %s40 = scalar_select %p37, %s38, %s39
      %p43 = pneg %p37
      %p44 = scmp.eq.s32.totalorder %s28, 1
      %p45 = por %p43, %p44
      %p46 = scmp.ne.s32.totalorder %s38, %s41
      %p47 = scmp.eq.s32.totalorder %s28, 0
      %p48 = por %p46, %p47
      %p49 = scmp.ne.s32.totalorder %s38, %s41
      %p50 = scmp.eq.s32.totalorder %s33, 1
      %p51 = por %p49, %p50
      %p52 = scmp.ne.s32.totalorder %s41, %s42
      %p53 = scmp.eq.s32.totalorder %s33, 0
      %p54 = por %p52, %p53
      %p55 = scmp.ne.s32.totalorder %s41, %s42
      %p56 = scmp.eq.s32.totalorder %s34, 1
      %p57 = por %p55, %p56
      %p59 = scmp.ne.s32.totalorder %s42, %s58
      %p60 = scmp.eq.s32.totalorder %s34, 0
      %p61 = por %p59, %p60
      %s62 = ssub.s32 %s28, %s35
      %p63 = scmp.eq.s32.totalorder %s62, 0
      %s65 = sadd.s32 %s64, 1
      %s66 = scalar_select %p63, %s64, %s65
      %p69 = pneg %p63
      %p70 = scmp.eq.s32.totalorder %s28, 1
      %p71 = por %p69, %p70
      %p72 = scmp.ne.s32.totalorder %s64, %s67
      %p73 = scmp.eq.s32.totalorder %s28, 0
      %p74 = por %p72, %p73
      %p75 = scmp.ne.s32.totalorder %s64, %s67
      %p76 = scmp.eq.s32.totalorder %s33, 1
      %p77 = por %p75, %p76
      %p78 = scmp.ne.s32.totalorder %s67, %s68
      %p79 = scmp.eq.s32.totalorder %s33, 0
      %p80 = por %p78, %p79
      %p81 = scmp.ne.s32.totalorder %s67, %s68
      %p82 = scmp.eq.s32.totalorder %s34, 1
      %p83 = por %p81, %p82
      %p85 = scmp.ne.s32.totalorder %s68, %s84
      %p86 = scmp.eq.s32.totalorder %s34, 0
      %p87 = por %p85, %p86
      %s89 = sadd.s32 %s88, 1
      %p92 = scmp.eq.s32.totalorder %s28, 1
      %p93 = scmp.ne.s32.totalorder %s88, %s90
      %p94 = scmp.eq.s32.totalorder %s28, 0
      %p95 = por %p93, %p94
      %p96 = scmp.ne.s32.totalorder %s88, %s90
      %p97 = scmp.eq.s32.totalorder %s33, 1
      %p98 = por %p96, %p97
      %p99 = scmp.ne.s32.totalorder %s90, %s91
      %p100 = scmp.eq.s32.totalorder %s33, 0
      %p101 = por %p99, %p100
      %p102 = scmp.ne.s32.totalorder %s90, %s91
      %p103 = scmp.eq.s32.totalorder %s34, 1
      %p104 = por %p102, %p103
      %p106 = scmp.ne.s32.totalorder %s91, %s105
      %p107 = scmp.eq.s32.totalorder %s34, 0
      %p108 = por %p106, %p107
      %s110 = sadd.s32 %s109, 1
      %p113 = scmp.eq.s32.totalorder %s28, 1
      %p114 = scmp.ne.s32.totalorder %s109, %s111
      %p115 = scmp.eq.s32.totalorder %s28, 0
      %p116 = por %p114, %p115
      %p117 = scmp.ne.s32.totalorder %s109, %s111
      %p118 = scmp.eq.s32.totalorder %s33, 1
      %p119 = por %p117, %p118
      %p120 = scmp.ne.s32.totalorder %s111, %s112
      %p121 = scmp.eq.s32.totalorder %s33, 0
      %p122 = por %p120, %p121
      %p123 = scmp.ne.s32.totalorder %s111, %s112
      %p124 = scmp.eq.s32.totalorder %s34, 1
      %p125 = por %p123, %p124
      %p127 = scmp.ne.s32.totalorder %s112, %s126
      %p128 = scmp.eq.s32.totalorder %s34, 0
      %p129 = por %p127, %p128
      %s131 = sadd.s32 %s130, 1
      %p134 = scmp.eq.s32.totalorder %s28, 1
      %p135 = scmp.ne.s32.totalorder %s130, %s132
      %p136 = scmp.eq.s32.totalorder %s28, 0
      %p137 = por %p135, %p136
      %p138 = scmp.ne.s32.totalorder %s130, %s132
      %p139 = scmp.eq.s32.totalorder %s33, 1
      %p140 = por %p138, %p139
      %p141 = scmp.ne.s32.totalorder %s132, %s133
      %p142 = scmp.eq.s32.totalorder %s33, 0
      %p143 = por %p141, %p142
      %p144 = scmp.ne.s32.totalorder %s132, %s133
      %p145 = scmp.eq.s32.totalorder %s34, 1
      %p146 = por %p144, %p145
      %p148 = scmp.ne.s32.totalorder %s133, %s147
      %p149 = scmp.eq.s32.totalorder %s34, 0
      %p150 = por %p148, %p149
      %s152 = sadd.s32 %s151, 1
      %p155 = scmp.eq.s32.totalorder %s28, 1
      %p156 = scmp.ne.s32.totalorder %s151, %s153
      %p157 = scmp.eq.s32.totalorder %s28, 0
      %p158 = por %p156, %p157
      %p159 = scmp.ne.s32.totalorder %s151, %s153
      %p160 = scmp.eq.s32.totalorder %s33, 1
      %p161 = por %p159, %p160
      %p162 = scmp.ne.s32.totalorder %s153, %s154
      %p163 = scmp.eq.s32.totalorder %s33, 0
      %p164 = por %p162, %p163
      %p165 = scmp.ne.s32.totalorder %s153, %s154
      %p166 = scmp.eq.s32.totalorder %s34, 1
      %p167 = por %p165, %p166
      %p169 = scmp.ne.s32.totalorder %s154, %s168
      %p170 = scmp.eq.s32.totalorder %s34, 0
      %p171 = por %p169, %p170
      %s173 = sadd.s32 %s172, 1
      %p176 = scmp.eq.s32.totalorder %s28, 1
      %p177 = scmp.ne.s32.totalorder %s172, %s174
      %p178 = scmp.eq.s32.totalorder %s28, 0
      %p179 = por %p177, %p178
      %p180 = scmp.ne.s32.totalorder %s172, %s174
      %p181 = scmp.eq.s32.totalorder %s33, 1
      %p182 = por %p180, %p181
      %p183 = scmp.ne.s32.totalorder %s174, %s175
      %p184 = scmp.eq.s32.totalorder %s33, 0
      %p185 = por %p183, %p184
      %p186 = scmp.ne.s32.totalorder %s174, %s175
      %p187 = scmp.eq.s32.totalorder %s34, 1
      %p188 = por %p186, %p187
      %p190 = scmp.ne.s32.totalorder %s175, %s189
      %p191 = scmp.eq.s32.totalorder %s34, 0
      %p192 = por %p190, %p191
      %s194 = sadd.s32 %s193, 1
      %p197 = scmp.eq.s32.totalorder %s28, 1
      %p198 = scmp.ne.s32.totalorder %s193, %s195
      %p199 = scmp.eq.s32.totalorder %s28, 0
      %p200 = por %p198, %p199
      %p201 = scmp.ne.s32.totalorder %s193, %s195
      %p202 = scmp.eq.s32.totalorder %s33, 1
      %p203 = por %p201, %p202
      %p204 = scmp.ne.s32.totalorder %s195, %s196
      %p205 = scmp.eq.s32.totalorder %s33, 0
      %p206 = por %p204, %p205
      %p207 = scmp.ne.s32.totalorder %s195, %s196
      %p208 = scmp.eq.s32.totalorder %s34, 1
      %p209 = por %p207, %p208
      %p211 = scmp.ne.s32.totalorder %s196, %s210
      %p212 = scmp.eq.s32.totalorder %s34, 0
      %p213 = por %p211, %p212
      %s215 = sadd.s32 %s214, 1
      %p218 = scmp.eq.s32.totalorder %s28, 1
      %p219 = scmp.ne.s32.totalorder %s214, %s216
      %p220 = scmp.eq.s32.totalorder %s28, 0
      %p221 = por %p219, %p220
      %p222 = scmp.ne.s32.totalorder %s214, %s216
      %p223 = scmp.eq.s32.totalorder %s33, 1
      %p224 = por %p222, %p223
      %p225 = scmp.ne.s32.totalorder %s216, %s217
      %p226 = scmp.eq.s32.totalorder %s33, 0
      %p227 = por %p225, %p226
      %p228 = scmp.ne.s32.totalorder %s216, %s217
      %p229 = scmp.eq.s32.totalorder %s34, 1
      %p230 = por %p228, %p229
      %p232 = scmp.ne.s32.totalorder %s217, %s231
      %p233 = scmp.eq.s32.totalorder %s34, 0
      %p234 = por %p232, %p233
      %s236 = sadd.s32 %s235, 1
      %p239 = scmp.eq.s32.totalorder %s28, 1
      %p240 = scmp.ne.s32.totalorder %s235, %s237
      %p241 = scmp.eq.s32.totalorder %s28, 0
      %p242 = por %p240, %p241
      %p243 = scmp.ne.s32.totalorder %s235, %s237
      %p244 = scmp.eq.s32.totalorder %s33, 1
      %p245 = por %p243, %p244
      %p246 = scmp.ne.s32.totalorder %s237, %s238
      %p247 = scmp.eq.s32.totalorder %s33, 0
      %p248 = por %p246, %p247
      %p249 = scmp.ne.s32.totalorder %s237, %s238
      %p250 = scmp.eq.s32.totalorder %s34, 1
      %p251 = por %p249, %p250
      %p253 = scmp.ne.s32.totalorder %s238, %s252
      %p254 = scmp.eq.s32.totalorder %s34, 0
      %p255 = por %p253, %p254
      %s257 = sadd.s32 %s256, 1
      %p260 = scmp.eq.s32.totalorder %s28, 1
      %p261 = scmp.ne.s32.totalorder %s256, %s258
      %p262 = scmp.eq.s32.totalorder %s28, 0
      %p263 = por %p261, %p262
      %p264 = scmp.ne.s32.totalorder %s256, %s258
      %p265 = scmp.eq.s32.totalorder %s33, 1
      %p266 = por %p264, %p265
      %p267 = scmp.ne.s32.totalorder %s258, %s259
      %p268 = scmp.eq.s32.totalorder %s33, 0
      %p269 = por %p267, %p268
      %p270 = scmp.ne.s32.totalorder %s258, %s259
      %p271 = scmp.eq.s32.totalorder %s34, 1
      %p272 = por %p270, %p271
      %p274 = scmp.ne.s32.totalorder %s259, %s273
      %p275 = scmp.eq.s32.totalorder %s34, 0
      %p276 = por %p274, %p275
      %s277 = ssub.s32 %s28, %s35
      %p278 = scmp.eq.s32.totalorder %s277, 0
      %s280 = sadd.s32 %s279, 1
      %s281 = scalar_select %p278, %s279, %s280
      %p284 = pneg %p278
      %p285 = scmp.eq.s32.totalorder %s28, 1
      %p286 = por %p284, %p285
      %p287 = scmp.ne.s32.totalorder %s279, %s282
      %p288 = scmp.eq.s32.totalorder %s28, 0
      %p289 = por %p287, %p288
      %p290 = scmp.ne.s32.totalorder %s279, %s282
      %p291 = scmp.eq.s32.totalorder %s33, 1
      %p292 = por %p290, %p291
      %p293 = scmp.ne.s32.totalorder %s282, %s283
      %p294 = scmp.eq.s32.totalorder %s33, 0
      %p295 = por %p293, %p294
      %p296 = scmp.ne.s32.totalorder %s282, %s283
      %p297 = scmp.eq.s32.totalorder %s34, 1
      %p298 = por %p296, %p297
      %p300 = scmp.ne.s32.totalorder %s283, %s299
      %p301 = scmp.eq.s32.totalorder %s34, 0
      %p302 = por %p300, %p301
      %p303 = scmp.le.s32.totalorder 1, %s28
      %p304 = scmp.lt.s32.totalorder %s28, 3
      %p305 = pnand %p303, %p304
      %p306 = pneg %p305
      // Predicated region
      $region9: #{tpu_custom_call.1} parent=5 // pred_check
        _
      $region10: #{tpu_custom_call.1} parent=5 // pred_check_branch
        %308 = sbr.rel (%p305) target = $region12
      $region11: #{tpu_custom_call.1} parent=5 // pred_region
        %s309 = ssub.s32 %s28, 1
        // Predicated region
        $region13: #{tpu_custom_call.1} parent=11 // pred_check
          %p310 = pneg %p101
        $region14: #{tpu_custom_call.1} parent=11 // pred_check_branch
          %312 = sbr.rel (%p310) target = $region16
        $region15: #{tpu_custom_call.1} parent=11 // pred_region
          %314 = vsyncadd [#allocation10], 0
          %s315 = sshll.u32 %s2, 4
          %s316 = int_to_ptr.hbm [resolvable:$true] %s315
          %s317 = sshll.u32 [#allocation11], 4
          %s318 = int_to_ptr.vmem [resolvable:$true] %s317
          %323 = dma.hbm_to_vmem [thread:$0]  %s316, 2048, %s318, [#allocation10], 128, 128, 8
        $region16: #{tpu_custom_call.1} parent=11 // pred_fallthru
          _
        // Predicated region
        $region17: #{tpu_custom_call.1} parent=11 // pred_check
          %p324 = pneg %p122
        $region18: #{tpu_custom_call.1} parent=11 // pred_check_branch
          %326 = sbr.rel (%p324) target = $region20
        $region19: #{tpu_custom_call.1} parent=11 // pred_region
          _
        $region20: #{tpu_custom_call.1} parent=11 // pred_fallthru
          _
        // Predicated region
        $region21: #{tpu_custom_call.1} parent=11 // pred_check
          %p327 = pneg %p143
        $region22: #{tpu_custom_call.1} parent=11 // pred_check_branch
          %329 = sbr.rel (%p327) target = $region24
        $region23: #{tpu_custom_call.1} parent=11 // pred_region
          _
        $region24: #{tpu_custom_call.1} parent=11 // pred_fallthru
          _
        // Predicated region
        $region25: #{tpu_custom_call.1} parent=11 // pred_check
          %p330 = pneg %p164
        $region26: #{tpu_custom_call.1} parent=11 // pred_check_branch
          %332 = sbr.rel (%p330) target = $region28
        $region27: #{tpu_custom_call.1} parent=11 // pred_region
          _
        $region28: #{tpu_custom_call.1} parent=11 // pred_fallthru
          _
        // Predicated region
        $region29: #{tpu_custom_call.1} parent=11 // pred_check
          %p333 = pneg %p185
        $region30: #{tpu_custom_call.1} parent=11 // pred_check_branch
          %335 = sbr.rel (%p333) target = $region32
        $region31: #{tpu_custom_call.1} parent=11 // pred_region
          %337 = vsyncadd [#allocation13], 0
          %s338 = sshll.u32 %s6, 4
          %s339 = int_to_ptr.hbm [resolvable:$true] %s338
          %s340 = sshll.u32 [#allocation12], 4
          %s341 = int_to_ptr.vmem [resolvable:$true] %s340
          %346 = dma.hbm_to_vmem [thread:$0]  %s339, 1024, %s341, [#allocation13], 64, 64, 4
        $region32: #{tpu_custom_call.1} parent=11 // pred_fallthru
          _
        // Predicated region
        $region33: #{tpu_custom_call.1} parent=11 // pred_check
          %p347 = pneg %p206
        $region34: #{tpu_custom_call.1} parent=11 // pred_check_branch
          %349 = sbr.rel (%p347) target = $region36
        $region35: #{tpu_custom_call.1} parent=11 // pred_region
          %351 = vsyncadd [#allocation13], 0
          %s352 = sshll.u32 %s7, 4
          %s353 = int_to_ptr.hbm [resolvable:$true] %s352
          %s354 = sshll.u32 [#allocation14], 4
          %s355 = int_to_ptr.vmem [resolvable:$true] %s354
          %360 = dma.hbm_to_vmem [thread:$0]  %s353, 2048, %s355, [#allocation13], 128, 128, 8
        $region36: #{tpu_custom_call.1} parent=11 // pred_fallthru
          _
        // Predicated region
        $region37: #{tpu_custom_call.1} parent=11 // pred_check
          %p361 = pneg %p227
        $region38: #{tpu_custom_call.1} parent=11 // pred_check_branch
          %363 = sbr.rel (%p361) target = $region40
        $region39: #{tpu_custom_call.1} parent=11 // pred_region
          _
        $region40: #{tpu_custom_call.1} parent=11 // pred_fallthru
          _
        // Predicated region
        $region41: #{tpu_custom_call.1} parent=11 // pred_check
          %p364 = pneg %p248
        $region42: #{tpu_custom_call.1} parent=11 // pred_check_branch
          %366 = sbr.rel (%p364) target = $region44
        $region43: #{tpu_custom_call.1} parent=11 // pred_region
          %368 = vsyncadd [#allocation16], 0
          %s369 = sshll.u32 %s9, 4
          %s370 = int_to_ptr.hbm [resolvable:$true] %s369
          %s371 = sshll.u32 [#allocation15], 4
          %s372 = int_to_ptr.vmem [resolvable:$true] %s371
          %377 = dma.hbm_to_vmem [thread:$0]  %s370, 2048, %s372, [#allocation16], 128, 128, 8
        $region44: #{tpu_custom_call.1} parent=11 // pred_fallthru
          _
        // Predicated region
        $region45: #{tpu_custom_call.1} parent=11 // pred_check
          %p378 = pneg %p269
        $region46: #{tpu_custom_call.1} parent=11 // pred_check_branch
          %380 = sbr.rel (%p378) target = $region48
        $region47: #{tpu_custom_call.1} parent=11 // pred_region
          _
        $region48: #{tpu_custom_call.1} parent=11 // pred_fallthru
          _
      $region12: #{tpu_custom_call.1} parent=5 // pred_fallthru
        _
      %p381 = scmp.lt.s32.totalorder %s28, 2
      // Predicated region
      $region49: #{tpu_custom_call.1} parent=5 // pred_check
        %p382 = pneg %p381
      $region50: #{tpu_custom_call.1} parent=5 // pred_check_branch
        %384 = sbr.rel (%p382) target = $region52
      $region51: #{tpu_custom_call.1} parent=5 // pred_region
        // Predicated region
        $region53: #{tpu_custom_call.1} parent=51 // pred_check
          %p385 = pneg %p48
        $region54: #{tpu_custom_call.1} parent=51 // pred_check_branch
          %387 = sbr.rel (%p385) target = $region56
        $region55: #{tpu_custom_call.1} parent=51 // pred_region
          %s388 = sand.u32 %s38, 1
          %s389 = scalar_lea.sflag [#allocation7], %s388
          %s390 = sand.u32 %s38, 1
          %s391 = smul.addr %s390, 8
          %s392 = scalar_lea.vmem [#allocation6], %s391
          %394 = vsyncadd %s389, 0
          %s395 = smul.addr %s28, 8
          %s396 = scalar_lea.hbm %s0, %s395
          %s398 = sshll.u32 %s396, 4
          %s399 = int_to_ptr.hbm [resolvable:$true] %s398
          %s400 = sshll.u32 %s392, 4
          %s401 = int_to_ptr.vmem [resolvable:$true] %s400
          %403 = dma.hbm_to_vmem [thread:$0]  %s399, 128, %s401, %s389
        $region56: #{tpu_custom_call.1} parent=51 // pred_fallthru
          _
        // Predicated region
        $region57: #{tpu_custom_call.1} parent=51 // pred_check
          %p404 = pneg %p74
        $region58: #{tpu_custom_call.1} parent=51 // pred_check_branch
          %406 = sbr.rel (%p404) target = $region60
        $region59: #{tpu_custom_call.1} parent=51 // pred_region
          %s407 = sand.u32 %s28, 1
          %s408 = scalar_lea.sflag [#allocation10], %s407
          %s409 = sand.u32 %s64, 1
          %s410 = smul.addr %s409, 16
          %s411 = scalar_lea.vmem [#allocation9], %s410
          %s412 = smul.u32 2, %s28
          %414 = vsyncadd %s408, 0
          %s415 = smul.addr %s412, 8
          %s416 = scalar_lea.hbm %s1, %s415
          %s417 = sshll.u32 %s416, 4
          %s418 = int_to_ptr.hbm [resolvable:$true] %s417
          %s419 = sshll.u32 %s411, 4
          %s420 = int_to_ptr.vmem [resolvable:$true] %s419
          %425 = dma.hbm_to_vmem [thread:$0]  %s418, 256, %s420, %s408, 128, 128, 8
        $region60: #{tpu_custom_call.1} parent=51 // pred_fallthru
          _
      $region52: #{tpu_custom_call.1} parent=5 // pred_fallthru
        _
      %p426 = scmp.le.s32.totalorder 1, %s28
      %p427 = scmp.lt.s32.totalorder %s28, 3
      %p428 = pnand %p426, %p427
      %p429 = pneg %p428
      // Predicated region
      $region61: #{tpu_custom_call.1} parent=5 // pred_check
        _
      $region62: #{tpu_custom_call.1} parent=5 // pred_check_branch
        %431 = sbr.rel (%p428) target = $region64
      $region63: #{tpu_custom_call.1} parent=5 // pred_region
        %s432 = ssub.s32 %s28, 1
        %s433 = sand.u32 %s41, 1
        %s434 = scalar_lea.sflag [#allocation7], %s433
        %s435 = sand.u32 %s41, 1
        %s436 = smul.addr %s435, 8
        %s437 = scalar_lea.vmem [#allocation6], %s436
        // Predicated region
        $region65: #{tpu_custom_call.1} parent=63 // pred_check
          %p438 = pneg %p54
        $region66: #{tpu_custom_call.1} parent=63 // pred_check_branch
          %440 = sbr.rel (%p438) target = $region68
        $region67: #{tpu_custom_call.1} parent=63 // pred_region
          %442 = dma.done %s434, 128
        $region68: #{tpu_custom_call.1} parent=63 // pred_fallthru
          _
        %s443 = sand.u32 %s33, 1
        %s444 = scalar_lea.sflag [#allocation10], %s443
        %s445 = sand.u32 %s67, 1
        %s446 = smul.addr %s445, 16
        %s447 = scalar_lea.vmem [#allocation9], %s446
        // Predicated region
        $region69: #{tpu_custom_call.1} parent=63 // pred_check
          %p448 = pneg %p80
        $region70: #{tpu_custom_call.1} parent=63 // pred_check_branch
          %450 = sbr.rel (%p448) target = $region72
        $region71: #{tpu_custom_call.1} parent=63 // pred_region
          %452 = dma.done %s444, 256
        $region72: #{tpu_custom_call.1} parent=63 // pred_fallthru
          _
        // Predicated region
        $region73: #{tpu_custom_call.1} parent=63 // pred_check
          %p453 = pneg %p101
        $region74: #{tpu_custom_call.1} parent=63 // pred_check_branch
          %455 = sbr.rel (%p453) target = $region76
        $region75: #{tpu_custom_call.1} parent=63 // pred_region
          %457 = dma.done [#allocation10], 2048
        $region76: #{tpu_custom_call.1} parent=63 // pred_fallthru
          _
        // Predicated region
        $region77: #{tpu_custom_call.1} parent=63 // pred_check
          %p458 = pneg %p185
        $region78: #{tpu_custom_call.1} parent=63 // pred_check_branch
          %460 = sbr.rel (%p458) target = $region80
        $region79: #{tpu_custom_call.1} parent=63 // pred_region
          %462 = dma.done [#allocation13], 1024
        $region80: #{tpu_custom_call.1} parent=63 // pred_fallthru
          _
        // Predicated region
        $region81: #{tpu_custom_call.1} parent=63 // pred_check
          %p463 = pneg %p206
        $region82: #{tpu_custom_call.1} parent=63 // pred_check_branch
          %465 = sbr.rel (%p463) target = $region84
        $region83: #{tpu_custom_call.1} parent=63 // pred_region
          %467 = dma.done [#allocation13], 2048
        $region84: #{tpu_custom_call.1} parent=63 // pred_fallthru
          _
        // Predicated region
        $region85: #{tpu_custom_call.1} parent=63 // pred_check
          %p468 = pneg %p248
        $region86: #{tpu_custom_call.1} parent=63 // pred_check_branch
          %470 = sbr.rel (%p468) target = $region88
        $region87: #{tpu_custom_call.1} parent=63 // pred_region
          %472 = dma.done [#allocation16], 2048
        $region88: #{tpu_custom_call.1} parent=63 // pred_fallthru
          _
        %s473 = sand.u32 %s41, 1
        %s474 = scalar_lea.sflag [#allocation7], %s473
        %s475 = sand.u32 %s41, 1
        %s476 = smul.addr %s475, 8
        %s477 = scalar_lea.vmem [#allocation6], %s476
        %p478 = pneg %p54
        %p479 = pneg %p51
        %s480 = sand.u32 %s33, 1
        %s481 = scalar_lea.sflag [#allocation10], %s480
        %s482 = sand.u32 %s67, 1
        %s483 = smul.addr %s482, 16
        %s484 = scalar_lea.vmem [#allocation9], %s483
        %p485 = pneg %p80
        %p486 = pneg %p77
        %p487 = pneg %p101
        %p488 = pneg %p98
        %p489 = pneg %p122
        %p490 = pneg %p119
        %p491 = pneg %p143
        %p492 = pneg %p140
        %p493 = pneg %p164
        %p494 = pneg %p161
        %p495 = pneg %p185
        %p496 = pneg %p182
        %p497 = pneg %p206
        %p498 = pneg %p203
        %p499 = pneg %p227
        %p500 = pneg %p224
        %p501 = pneg %p248
        %p502 = pneg %p245
        %p503 = pneg %p269
        %p504 = pneg %p266
        %p505 = pneg %p295
        %p506 = pneg %p292
        %s507 = sand.u32 %s282, 1
        %s508 = scalar_lea.sflag [#allocation8], %s507
        %s509 = sand.u32 %s282, 1
        %s510 = smul.addr %s509, 16
        %s511 = scalar_lea.vmem [#allocation17], %s510
        %s512 = smul.u32 2, %s33
        %s513 = smul.u32 2, %s33
        %v515 = vld [vmem:[%s447] sm:$0xff]
        %v516 = vld [vmem:[%s447 + $0x8] sm:$0xff]
        %v517 = vpack.c.bf16 %v516, %v515
        %v518 = vld [vmem:[#allocation11] sm:$0xff]
        %v519 = vld [vmem:[#allocation11 + $0x8] sm:$0xff]
        %v520 = vld [vmem:[#allocation11 + $0x10] sm:$0xff]
        %v521 = vld [vmem:[#allocation11 + $0x18] sm:$0xff]
        %v522 = vld [vmem:[#allocation11 + $0x20] sm:$0xff]
        %v523 = vld [vmem:[#allocation11 + $0x28] sm:$0xff]
        %v524 = vld [vmem:[#allocation11 + $0x30] sm:$0xff]
        %v525 = vld [vmem:[#allocation11 + $0x38] sm:$0xff]
        %v526 = vld [vmem:[#allocation11 + $0x40] sm:$0xff]
        %v527 = vld [vmem:[#allocation11 + $0x48] sm:$0xff]
        %v528 = vld [vmem:[#allocation11 + $0x50] sm:$0xff]
        %v529 = vld [vmem:[#allocation11 + $0x58] sm:$0xff]
        %v530 = vld [vmem:[#allocation11 + $0x60] sm:$0xff]
        %v531 = vld [vmem:[#allocation11 + $0x68] sm:$0xff]
        %v532 = vld [vmem:[#allocation11 + $0x70] sm:$0xff]
        %v533 = vld [vmem:[#allocation11 + $0x78] sm:$0xff]
        %v550 = vunpack.c.l.b16 %v518
        %v551 = vunpack.c.h.b16 %v518
        %v552 = vunpack.c.l.b16 %v519
        %v553 = vunpack.c.h.b16 %v519
        %v554 = vunpack.c.l.b16 %v520
        %v555 = vunpack.c.h.b16 %v520
        %v556 = vunpack.c.l.b16 %v521
        %v557 = vunpack.c.h.b16 %v521
        %v558 = vunpack.c.l.b16 %v522
        %v559 = vunpack.c.h.b16 %v522
        %v560 = vunpack.c.l.b16 %v523
        %v561 = vunpack.c.h.b16 %v523
        %v562 = vunpack.c.l.b16 %v524
        %v563 = vunpack.c.h.b16 %v524
        %v564 = vunpack.c.l.b16 %v525
        %v565 = vunpack.c.h.b16 %v525
        %v566 = vunpack.c.l.b16 %v526
        %v567 = vunpack.c.h.b16 %v526
        %v568 = vunpack.c.l.b16 %v527
        %v569 = vunpack.c.h.b16 %v527
        %v570 = vunpack.c.l.b16 %v528
        %v571 = vunpack.c.h.b16 %v528
        %v572 = vunpack.c.l.b16 %v529
        %v573 = vunpack.c.h.b16 %v529
        %v574 = vunpack.c.l.b16 %v530
        %v575 = vunpack.c.h.b16 %v530
        %v576 = vunpack.c.l.b16 %v531
        %v577 = vunpack.c.h.b16 %v531
        %v578 = vunpack.c.l.b16 %v532
        %v579 = vunpack.c.h.b16 %v532
        %v580 = vunpack.c.l.b16 %v533
        %v581 = vunpack.c.h.b16 %v533
        %v582 = vpack.c.b16 %v552, %v550
        %v583 = vpack.c.b16 %v553, %v551
        %v584 = vpack.c.b16 %v556, %v554
        %v585 = vpack.c.b16 %v557, %v555
        %v586 = vpack.c.b16 %v560, %v558
        %v587 = vpack.c.b16 %v561, %v559
        %v588 = vpack.c.b16 %v564, %v562
        %v589 = vpack.c.b16 %v565, %v563
        %v590 = vpack.c.b16 %v568, %v566
        %v591 = vpack.c.b16 %v569, %v567
        %v592 = vpack.c.b16 %v572, %v570
        %v593 = vpack.c.b16 %v573, %v571
        %v594 = vpack.c.b16 %v576, %v574
        %v595 = vpack.c.b16 %v577, %v575
        %v596 = vpack.c.b16 %v580, %v578
        %v597 = vpack.c.b16 %v581, %v579
        %614 = vmatpush.bf16.msra.mxu0 %v596
        %615 = vmatpush.bf16.msra.mxu0 %v594
        %616 = vmatpush.bf16.msra.mxu0 %v592
        %617 = vmatpush.bf16.msra.mxu0 %v590
        %618 = vmatpush.bf16.msra.mxu0 %v588
        %619 = vmatpush.bf16.msra.mxu0 %v586
        %620 = vmatpush.bf16.msra.mxu0 %v584
        %621 = vmatpush.bf16.msra.mxu0 %v582
        %622 = vmatmul.bf16.gmra.mxu0 %v517
        %v623 = vpop.f32.mrf.mxu0
        %v624 = vadd.f32 0.0, %v623
        %v625 = vpop.f32.mrf.mxu0
        %v626 = vadd.f32 0.0, %v625
        %627 = vdwg.mxu0
        %628 = vmatpush.bf16.msra.mxu0 %v597
        %629 = vmatpush.bf16.msra.mxu0 %v595
        %630 = vmatpush.bf16.msra.mxu0 %v593
        %631 = vmatpush.bf16.msra.mxu0 %v591
        %632 = vmatpush.bf16.msra.mxu0 %v589
        %633 = vmatpush.bf16.msra.mxu0 %v587
        %634 = vmatpush.bf16.msra.mxu0 %v585
        %635 = vmatpush.bf16.msra.mxu0 %v583
        %636 = vmatmul.bf16.gmra.mxu0 %v517
        %v637 = vpop.f32.mrf.mxu0
        %v638 = vadd.f32 0.0, %v637
        %v639 = vpop.f32.mrf.mxu0
        %v640 = vadd.f32 0.0, %v639
        %641 = vdwg.mxu0
        %v642 = vld [vmem:[%s3] sm:$0x1]
        %v644 = vperm.slane %v642, 0
        %v646 = vadd.f32 %v624, %v644
        %v647 = vadd.f32 %v626, %v644
        %648 = vst [vmem:[#allocation2] sm:$0xff] %v646
        %649 = vst [vmem:[#allocation2 + $0x8] sm:$0xff] %v647
        %650 = vst [vmem:[#allocation3] sm:$0xff] %v638
        %651 = vst [vmem:[#allocation3 + $0x8] sm:$0xff] %v640
        %v652 = vld [vmem:[%s437] sm:$0xff]
        %v653 = vpack.c.bf16 %v652, %v652
        %v654 = vld [vmem:[%s4] sm:$0xf]
        %v655 = vld [vmem:[%s4 + $0x4] sm:$0xf]
        %v656 = vld [vmem:[%s4 + $0x8] sm:$0xf]
        %v657 = vld [vmem:[%s4 + $0xc] sm:$0xf]
        %v658 = vld [vmem:[%s4 + $0x10] sm:$0xf]
        %v659 = vld [vmem:[%s4 + $0x14] sm:$0xf]
        %v660 = vld [vmem:[%s4 + $0x18] sm:$0xf]
        %v661 = vld [vmem:[%s4 + $0x1c] sm:$0xf]
        %v662 = vld [vmem:[%s4 + $0x20] sm:$0xf]
        %v663 = vld [vmem:[%s4 + $0x24] sm:$0xf]
        %v664 = vld [vmem:[%s4 + $0x28] sm:$0xf]
        %v665 = vld [vmem:[%s4 + $0x2c] sm:$0xf]
        %v666 = vld [vmem:[%s4 + $0x30] sm:$0xf]
        %v667 = vld [vmem:[%s4 + $0x34] sm:$0xf]
        %v668 = vld [vmem:[%s4 + $0x38] sm:$0xf]
        %v669 = vld [vmem:[%s4 + $0x3c] sm:$0xf]
        %v686 = vunpack.c.l.b16 %v654
        %v687 = vunpack.c.l.b16 %v655
        %v688 = vunpack.c.l.b16 %v656
        %v689 = vunpack.c.l.b16 %v657
        %v690 = vunpack.c.l.b16 %v658
        %v691 = vunpack.c.l.b16 %v659
        %v692 = vunpack.c.l.b16 %v660
        %v693 = vunpack.c.l.b16 %v661
        %v694 = vunpack.c.l.b16 %v662
        %v695 = vunpack.c.l.b16 %v663
        %v696 = vunpack.c.l.b16 %v664
        %v697 = vunpack.c.l.b16 %v665
        %v698 = vunpack.c.l.b16 %v666
        %v699 = vunpack.c.l.b16 %v667
        %v700 = vunpack.c.l.b16 %v668
        %v701 = vunpack.c.l.b16 %v669
        %v702 = vpack.c.b16 %v687, %v686
        %v703 = vpack.c.b16 %v689, %v688
        %v704 = vpack.c.b16 %v691, %v690
        %v705 = vpack.c.b16 %v693, %v692
        %v706 = vpack.c.b16 %v695, %v694
        %v707 = vpack.c.b16 %v697, %v696
        %v708 = vpack.c.b16 %v699, %v698
        %v709 = vpack.c.b16 %v701, %v700
        %718 = vmatpush.bf16.msra.mxu0 %v709
        %719 = vmatpush.bf16.msra.mxu0 %v708
        %720 = vmatpush.bf16.msra.mxu0 %v707
        %721 = vmatpush.bf16.msra.mxu0 %v706
        %722 = vmatpush.bf16.msra.mxu0 %v705
        %723 = vmatpush.bf16.msra.mxu0 %v704
        %724 = vmatpush.bf16.msra.mxu0 %v703
        %725 = vmatpush.bf16.msra.mxu0 %v702
        %726 = vmatmul.bf16.gmra.mxu0 %v653
        %v727 = vpop.f32.mrf.mxu0
        %v728 = vadd.f32 0.0, %v727
        %v729 = vpop.f32.mrf.mxu0
        %730 = vdwg.mxu0
        %731 = vst [vmem:[#allocation4] sm:$0xff] %v728
        %v732 = vld [vmem:[#allocation2] sm:$0xff]
        %v733 = vld [vmem:[#allocation2 + $0x8] sm:$0xff]
        %v734 = vld [vmem:[#allocation4] sm:$0xff]
        %v737 = vrot.slane %v732, 1
        %v738 = vrot.slane %v732, 2
        %v739 = vrot.slane %v732, 3
        %v740 = vrot.slane %v732, 4
        %v741 = vrot.slane %v732, 5
        %v742 = vrot.slane %v732, 6
        %v743 = vrot.slane %v732, 7
        %v744 = vrot.slane %v733, 1
        %v745 = vrot.slane %v733, 2
        %v746 = vrot.slane %v733, 3
        %v747 = vrot.slane %v733, 4
        %v748 = vrot.slane %v733, 5
        %v749 = vrot.slane %v733, 6
        %v750 = vrot.slane %v733, 7
        %v751 = vperm.slane %v732, 0
        %v752 = vperm.slane %v737, 0
        %v753 = vperm.slane %v738, 0
        %v754 = vperm.slane %v739, 0
        %v755 = vperm.slane %v740, 0
        %v756 = vperm.slane %v741, 0
        %v757 = vperm.slane %v742, 0
        %v758 = vperm.slane %v743, 0
        %v759 = vperm.slane %v733, 0
        %v760 = vperm.slane %v744, 0
        %v761 = vperm.slane %v745, 0
        %v762 = vperm.slane %v746, 0
        %v763 = vperm.slane %v747, 0
        %v764 = vperm.slane %v748, 0
        %v765 = vperm.slane %v749, 0
        %v766 = vperm.slane %v750, 0
        %v783 = vadd.f32 %v751, %v734
        %v784 = vadd.f32 %v752, %v734
        %v785 = vadd.f32 %v753, %v734
        %v786 = vadd.f32 %v754, %v734
        %v787 = vadd.f32 %v755, %v734
        %v788 = vadd.f32 %v756, %v734
        %v789 = vadd.f32 %v757, %v734
        %v790 = vadd.f32 %v758, %v734
        %v791 = vadd.f32 %v759, %v734
        %v792 = vadd.f32 %v760, %v734
        %v793 = vadd.f32 %v761, %v734
        %v794 = vadd.f32 %v762, %v734
        %v795 = vadd.f32 %v763, %v734
        %v796 = vadd.f32 %v764, %v734
        %v797 = vadd.f32 %v765, %v734
        %v798 = vadd.f32 %v766, %v734
        %v799 = vtanh.pop %v783
        %v800 = vtanh.pop %v784
        %v801 = vtanh.pop %v785
        %v802 = vtanh.pop %v786
        %v803 = vtanh.pop %v787
        %v804 = vtanh.pop %v788
        %v805 = vtanh.pop %v789
        %v806 = vtanh.pop %v790
        %v807 = vtanh.pop %v791
        %v808 = vtanh.pop %v792
        %v809 = vtanh.pop %v793
        %v810 = vtanh.pop %v794
        %v811 = vtanh.pop %v795
        %v812 = vtanh.pop %v796
        %v813 = vtanh.pop %v797
        %v814 = vtanh.pop %v798
        %v815 = vpack.c.bf16 %v800, %v799
        %v816 = vpack.c.bf16 %v802, %v801
        %v817 = vpack.c.bf16 %v804, %v803
        %v818 = vpack.c.bf16 %v806, %v805
        %v819 = vpack.c.bf16 %v808, %v807
        %v820 = vpack.c.bf16 %v810, %v809
        %v821 = vpack.c.bf16 %v812, %v811
        %v822 = vpack.c.bf16 %v814, %v813
        %v823 = vld [vmem:[%s5] sm:$0xf]
        %v824 = vld [vmem:[%s5 + $0x4] sm:$0xf]
        %v825 = vld [vmem:[%s5 + $0x8] sm:$0xf]
        %v826 = vld [vmem:[%s5 + $0xc] sm:$0xf]
        %v827 = vld [vmem:[%s5 + $0x10] sm:$0xf]
        %v828 = vld [vmem:[%s5 + $0x14] sm:$0xf]
        %v829 = vld [vmem:[%s5 + $0x18] sm:$0xf]
        %v830 = vld [vmem:[%s5 + $0x1c] sm:$0xf]
        %v831 = vld [vmem:[%s5 + $0x20] sm:$0xf]
        %v832 = vld [vmem:[%s5 + $0x24] sm:$0xf]
        %v833 = vld [vmem:[%s5 + $0x28] sm:$0xf]
        %v834 = vld [vmem:[%s5 + $0x2c] sm:$0xf]
        %v835 = vld [vmem:[%s5 + $0x30] sm:$0xf]
        %v836 = vld [vmem:[%s5 + $0x34] sm:$0xf]
        %v837 = vld [vmem:[%s5 + $0x38] sm:$0xf]
        %v838 = vld [vmem:[%s5 + $0x3c] sm:$0xf]
        %v855 = vunpack.c.l.b16 %v823
        %v856 = vunpack.c.l.b16 %v824
        %v857 = vunpack.c.l.b16 %v825
        %v858 = vunpack.c.l.b16 %v826
        %v859 = vunpack.c.l.b16 %v827
        %v860 = vunpack.c.l.b16 %v828
        %v861 = vunpack.c.l.b16 %v829
        %v862 = vunpack.c.l.b16 %v830
        %v863 = vunpack.c.l.b16 %v831
        %v864 = vunpack.c.l.b16 %v832
        %v865 = vunpack.c.l.b16 %v833
        %v866 = vunpack.c.l.b16 %v834
        %v867 = vunpack.c.l.b16 %v835
        %v868 = vunpack.c.l.b16 %v836
        %v869 = vunpack.c.l.b16 %v837
        %v870 = vunpack.c.l.b16 %v838
        %v871 = vpack.c.b16 %v856, %v855
        %v872 = vpack.c.b16 %v858, %v857
        %v873 = vpack.c.b16 %v860, %v859
        %v874 = vpack.c.b16 %v862, %v861
        %v875 = vpack.c.b16 %v864, %v863
        %v876 = vpack.c.b16 %v866, %v865
        %v877 = vpack.c.b16 %v868, %v867
        %v878 = vpack.c.b16 %v870, %v869
        %887 = vmatpush.bf16.msra.mxu0 %v878
        %888 = vmatpush.bf16.msra.mxu0 %v877
        %889 = vmatpush.bf16.msra.mxu0 %v876
        %890 = vmatpush.bf16.msra.mxu0 %v875
        %891 = vmatpush.bf16.msra.mxu0 %v874
        %892 = vmatpush.bf16.msra.mxu0 %v873
        %893 = vmatpush.bf16.msra.mxu0 %v872
        %894 = vmatpush.bf16.msra.mxu0 %v871
        %895 = vmatmul.bf16.gmra.mxu0 %v815
        %v896 = vpop.f32.mrf.mxu0
        %v897 = vadd.f32 0.0, %v896
        %v898 = vpop.f32.mrf.mxu0
        %v899 = vadd.f32 0.0, %v898
        %900 = vmatmul.bf16.gmra.mxu0 %v816
        %v901 = vpop.f32.mrf.mxu0
        %v902 = vadd.f32 0.0, %v901
        %v903 = vpop.f32.mrf.mxu0
        %v904 = vadd.f32 0.0, %v903
        %905 = vmatmul.bf16.gmra.mxu0 %v817
        %v906 = vpop.f32.mrf.mxu0
        %v907 = vadd.f32 0.0, %v906
        %v908 = vpop.f32.mrf.mxu0
        %v909 = vadd.f32 0.0, %v908
        %910 = vmatmul.bf16.gmra.mxu0 %v818
        %v911 = vpop.f32.mrf.mxu0
        %v912 = vadd.f32 0.0, %v911
        %v913 = vpop.f32.mrf.mxu0
        %v914 = vadd.f32 0.0, %v913
        %915 = vmatmul.bf16.gmra.mxu0 %v819
        %v916 = vpop.f32.mrf.mxu0
        %v917 = vadd.f32 0.0, %v916
        %v918 = vpop.f32.mrf.mxu0
        %v919 = vadd.f32 0.0, %v918
        %920 = vmatmul.bf16.gmra.mxu0 %v820
        %v921 = vpop.f32.mrf.mxu0
        %v922 = vadd.f32 0.0, %v921
        %v923 = vpop.f32.mrf.mxu0
        %v924 = vadd.f32 0.0, %v923
        %925 = vmatmul.bf16.gmra.mxu0 %v821
        %v926 = vpop.f32.mrf.mxu0
        %v927 = vadd.f32 0.0, %v926
        %v928 = vpop.f32.mrf.mxu0
        %v929 = vadd.f32 0.0, %v928
        %930 = vmatmul.bf16.gmra.mxu0 %v822
        %v931 = vpop.f32.mrf.mxu0
        %v932 = vadd.f32 0.0, %v931
        %v933 = vpop.f32.mrf.mxu0
        %v934 = vadd.f32 0.0, %v933
        %935 = vdwg.mxu0
        %952 = vset.pattern.permute.xlu0 0
        %953 = vperm.xlu0 %952, %v897
        %v954 = vpop.permute.xlu0 %953
        %955 = vset.pattern.permute.xlu0 0
        %956 = vperm.xlu0 %955, %v899
        %v957 = vpop.permute.xlu0 %956
        %958 = vset.pattern.permute.xlu0 0
        %959 = vperm.xlu0 %958, %v902
        %v960 = vpop.permute.xlu0 %959
        %961 = vset.pattern.permute.xlu0 0
        %962 = vperm.xlu0 %961, %v904
        %v963 = vpop.permute.xlu0 %962
        %964 = vset.pattern.permute.xlu0 0
        %965 = vperm.xlu0 %964, %v907
        %v966 = vpop.permute.xlu0 %965
        %967 = vset.pattern.permute.xlu0 0
        %968 = vperm.xlu0 %967, %v909
        %v969 = vpop.permute.xlu0 %968
        %970 = vset.pattern.permute.xlu0 0
        %971 = vperm.xlu0 %970, %v912
        %v972 = vpop.permute.xlu0 %971
        %973 = vset.pattern.permute.xlu0 0
        %974 = vperm.xlu0 %973, %v914
        %v975 = vpop.permute.xlu0 %974
        %976 = vset.pattern.permute.xlu0 0
        %977 = vperm.xlu0 %976, %v917
        %v978 = vpop.permute.xlu0 %977
        %979 = vset.pattern.permute.xlu0 0
        %980 = vperm.xlu0 %979, %v919
        %v981 = vpop.permute.xlu0 %980
        %982 = vset.pattern.permute.xlu0 0
        %983 = vperm.xlu0 %982, %v922
        %v984 = vpop.permute.xlu0 %983
        %985 = vset.pattern.permute.xlu0 0
        %986 = vperm.xlu0 %985, %v924
        %v987 = vpop.permute.xlu0 %986
        %988 = vset.pattern.permute.xlu0 0
        %989 = vperm.xlu0 %988, %v927
        %v990 = vpop.permute.xlu0 %989
        %991 = vset.pattern.permute.xlu0 0
        %992 = vperm.xlu0 %991, %v929
        %v993 = vpop.permute.xlu0 %992
        %994 = vset.pattern.permute.xlu0 0
        %995 = vperm.xlu0 %994, %v932
        %v996 = vpop.permute.xlu0 %995
        %997 = vset.pattern.permute.xlu0 0
        %998 = vperm.xlu0 %997, %v934
        %v999 = vpop.permute.xlu0 %998
        %v1000 = vlaneseq
        %v1001 = vand.u32 %v1000, 127
        %v1002 = vperm.slane %v954, %v1001
        %v1003 = vperm.slane %v957, %v1001
        %v1004 = vperm.slane %v960, %v1001
        %v1005 = vperm.slane %v963, %v1001
        %v1006 = vperm.slane %v966, %v1001
        %v1007 = vperm.slane %v969, %v1001
        %v1008 = vperm.slane %v972, %v1001
        %v1009 = vperm.slane %v975, %v1001
        %v1010 = vperm.slane %v978, %v1001
        %v1011 = vperm.slane %v981, %v1001
        %v1012 = vperm.slane %v984, %v1001
        %v1013 = vperm.slane %v987, %v1001
        %v1014 = vperm.slane %v990, %v1001
        %v1015 = vperm.slane %v993, %v1001
        %v1016 = vperm.slane %v996, %v1001
        %v1017 = vperm.slane %v999, %v1001
        %vm1018 = vcmask 1041409
        %v1019 = vsel %vm1018, %v1003, %v1002
        %vm1020 = vcmask 1042434
        %v1021 = vsel %vm1020, %v1004, %v1019
        %vm1022 = vcmask 1043459
        %v1023 = vsel %vm1022, %v1005, %v1021
        %vm1024 = vcmask 1044484
        %v1025 = vsel %vm1024, %v1006, %v1023
        %vm1026 = vcmask 1045509
        %v1027 = vsel %vm1026, %v1007, %v1025
        %vm1028 = vcmask 1046534
        %v1029 = vsel %vm1028, %v1008, %v1027
        %vm1030 = vcmask 1047559
        %v1031 = vsel %vm1030, %v1009, %v1029
        %v1032 = vsel %vm1018, %v1011, %v1010
        %v1033 = vsel %vm1020, %v1012, %v1032
        %v1034 = vsel %vm1022, %v1013, %v1033
        %v1035 = vsel %vm1024, %v1014, %v1034
        %v1036 = vsel %vm1026, %v1015, %v1035
        %v1037 = vsel %vm1028, %v1016, %v1036
        %v1038 = vsel %vm1030, %v1017, %v1037
        %vm1041 = vcmask 64512
        %v1042 = vsel %vm1041, %v1031, -inf
        %1043 = vmax.xlane.f32.xlu0 %v1042
        %v1044 = vpop.xlane.xlu0 %1043
        %v1045 = vsel %vm1041, %v1038, -inf
        %1046 = vmax.xlane.f32.xlu0 %v1045
        %v1047 = vpop.xlane.xlu0 %1046
        %v1050 = vperm.slane %v1044, 0
        %v1051 = vperm.slane %v1044, 1
        %v1052 = vperm.slane %v1044, 2
        %v1053 = vperm.slane %v1044, 3
        %v1054 = vperm.slane %v1044, 4
        %v1055 = vperm.slane %v1044, 5
        %v1056 = vperm.slane %v1044, 6
        %v1057 = vperm.slane %v1044, 7
        %v1058 = vperm.slane %v1047, 0
        %v1059 = vperm.slane %v1047, 1
        %v1060 = vperm.slane %v1047, 2
        %v1061 = vperm.slane %v1047, 3
        %v1062 = vperm.slane %v1047, 4
        %v1063 = vperm.slane %v1047, 5
        %v1064 = vperm.slane %v1047, 6
        %v1065 = vperm.slane %v1047, 7
        %v1082 = vsub.f32 %v897, %v1050
        %v1083 = vsub.f32 %v899, %v1051
        %v1084 = vsub.f32 %v902, %v1052
        %v1085 = vsub.f32 %v904, %v1053
        %v1086 = vsub.f32 %v907, %v1054
        %v1087 = vsub.f32 %v909, %v1055
        %v1088 = vsub.f32 %v912, %v1056
        %v1089 = vsub.f32 %v914, %v1057
        %v1090 = vsub.f32 %v917, %v1058
        %v1091 = vsub.f32 %v919, %v1059
        %v1092 = vsub.f32 %v922, %v1060
        %v1093 = vsub.f32 %v924, %v1061
        %v1094 = vsub.f32 %v927, %v1062
        %v1095 = vsub.f32 %v929, %v1063
        %v1096 = vsub.f32 %v932, %v1064
        %v1097 = vsub.f32 %v934, %v1065
        %v1098 = vmul.f32 %v1082, 1.442695
        %v1099 = vpow.pop %v1098
        %v1100 = vmul.f32 %v1083, 1.442695
        %v1101 = vpow.pop %v1100
        %v1102 = vmul.f32 %v1084, 1.442695
        %v1103 = vpow.pop %v1102
        %v1104 = vmul.f32 %v1085, 1.442695
        %v1105 = vpow.pop %v1104
        %v1106 = vmul.f32 %v1086, 1.442695
        %v1107 = vpow.pop %v1106
        %v1108 = vmul.f32 %v1087, 1.442695
        %v1109 = vpow.pop %v1108
        %v1110 = vmul.f32 %v1088, 1.442695
        %v1111 = vpow.pop %v1110
        %v1112 = vmul.f32 %v1089, 1.442695
        %v1113 = vpow.pop %v1112
        %v1114 = vmul.f32 %v1090, 1.442695
        %v1115 = vpow.pop %v1114
        %v1116 = vmul.f32 %v1091, 1.442695
        %v1117 = vpow.pop %v1116
        %v1118 = vmul.f32 %v1092, 1.442695
        %v1119 = vpow.pop %v1118
        %v1120 = vmul.f32 %v1093, 1.442695
        %v1121 = vpow.pop %v1120
        %v1122 = vmul.f32 %v1094, 1.442695
        %v1123 = vpow.pop %v1122
        %v1124 = vmul.f32 %v1095, 1.442695
        %v1125 = vpow.pop %v1124
        %v1126 = vmul.f32 %v1096, 1.442695
        %v1127 = vpow.pop %v1126
        %v1128 = vmul.f32 %v1097, 1.442695
        %v1129 = vpow.pop %v1128
        %1146 = vset.pattern.permute.xlu0 0
        %1147 = vperm.xlu0 %1146, %v1099
        %v1148 = vpop.permute.xlu0 %1147
        %1149 = vset.pattern.permute.xlu0 0
        %1150 = vperm.xlu0 %1149, %v1101
        %v1151 = vpop.permute.xlu0 %1150
        %1152 = vset.pattern.permute.xlu0 0
        %1153 = vperm.xlu0 %1152, %v1103
        %v1154 = vpop.permute.xlu0 %1153
        %1155 = vset.pattern.permute.xlu0 0
        %1156 = vperm.xlu0 %1155, %v1105
        %v1157 = vpop.permute.xlu0 %1156
        %1158 = vset.pattern.permute.xlu0 0
        %1159 = vperm.xlu0 %1158, %v1107
        %v1160 = vpop.permute.xlu0 %1159
        %1161 = vset.pattern.permute.xlu0 0
        %1162 = vperm.xlu0 %1161, %v1109
        %v1163 = vpop.permute.xlu0 %1162
        %1164 = vset.pattern.permute.xlu0 0
        %1165 = vperm.xlu0 %1164, %v1111
        %v1166 = vpop.permute.xlu0 %1165
        %1167 = vset.pattern.permute.xlu0 0
        %1168 = vperm.xlu0 %1167, %v1113
        %v1169 = vpop.permute.xlu0 %1168
        %1170 = vset.pattern.permute.xlu0 0
        %1171 = vperm.xlu0 %1170, %v1115
        %v1172 = vpop.permute.xlu0 %1171
        %1173 = vset.pattern.permute.xlu0 0
        %1174 = vperm.xlu0 %1173, %v1117
        %v1175 = vpop.permute.xlu0 %1174
        %1176 = vset.pattern.permute.xlu0 0
        %1177 = vperm.xlu0 %1176, %v1119
        %v1178 = vpop.permute.xlu0 %1177
        %1179 = vset.pattern.permute.xlu0 0
        %1180 = vperm.xlu0 %1179, %v1121
        %v1181 = vpop.permute.xlu0 %1180
        %1182 = vset.pattern.permute.xlu0 0
        %1183 = vperm.xlu0 %1182, %v1123
        %v1184 = vpop.permute.xlu0 %1183
        %1185 = vset.pattern.permute.xlu0 0
        %1186 = vperm.xlu0 %1185, %v1125
        %v1187 = vpop.permute.xlu0 %1186
        %1188 = vset.pattern.permute.xlu0 0
        %1189 = vperm.xlu0 %1188, %v1127
        %v1190 = vpop.permute.xlu0 %1189
        %1191 = vset.pattern.permute.xlu0 0
        %1192 = vperm.xlu0 %1191, %v1129
        %v1193 = vpop.permute.xlu0 %1192
        %v1194 = vperm.slane %v1148, %v1001
        %v1195 = vperm.slane %v1151, %v1001
        %v1196 = vperm.slane %v1154, %v1001
        %v1197 = vperm.slane %v1157, %v1001
        %v1198 = vperm.slane %v1160, %v1001
        %v1199 = vperm.slane %v1163, %v1001
        %v1200 = vperm.slane %v1166, %v1001
        %v1201 = vperm.slane %v1169, %v1001
        %v1202 = vperm.slane %v1172, %v1001
        %v1203 = vperm.slane %v1175, %v1001
        %v1204 = vperm.slane %v1178, %v1001
        %v1205 = vperm.slane %v1181, %v1001
        %v1206 = vperm.slane %v1184, %v1001
        %v1207 = vperm.slane %v1187, %v1001
        %v1208 = vperm.slane %v1190, %v1001
        %v1209 = vperm.slane %v1193, %v1001
        %v1210 = vsel %vm1018, %v1195, %v1194
        %v1211 = vsel %vm1020, %v1196, %v1210
        %v1212 = vsel %vm1022, %v1197, %v1211
        %v1213 = vsel %vm1024, %v1198, %v1212
        %v1214 = vsel %vm1026, %v1199, %v1213
        %v1215 = vsel %vm1028, %v1200, %v1214
        %v1216 = vsel %vm1030, %v1201, %v1215
        %v1217 = vsel %vm1018, %v1203, %v1202
        %v1218 = vsel %vm1020, %v1204, %v1217
        %v1219 = vsel %vm1022, %v1205, %v1218
        %v1220 = vsel %vm1024, %v1206, %v1219
        %v1221 = vsel %vm1026, %v1207, %v1220
        %v1222 = vsel %vm1028, %v1208, %v1221
        %v1223 = vsel %vm1030, %v1209, %v1222
        %v1226 = vsel %vm1041, %v1216, 0.0
        %1227 = vadd.xlane.f32.xlu0 %v1226
        %v1228 = vpop.xlane.xlu0 %1227
        %v1229 = vsel %vm1041, %v1223, 0.0
        %1230 = vadd.xlane.f32.xlu0 %v1229
        %v1231 = vpop.xlane.xlu0 %1230
        %v1234 = vperm.slane %v1228, 0
        %v1235 = vperm.slane %v1228, 1
        %v1236 = vperm.slane %v1228, 2
        %v1237 = vperm.slane %v1228, 3
        %v1238 = vperm.slane %v1228, 4
        %v1239 = vperm.slane %v1228, 5
        %v1240 = vperm.slane %v1228, 6
        %v1241 = vperm.slane %v1228, 7
        %v1242 = vperm.slane %v1231, 0
        %v1243 = vperm.slane %v1231, 1
        %v1244 = vperm.slane %v1231, 2
        %v1245 = vperm.slane %v1231, 3
        %v1246 = vperm.slane %v1231, 4
        %v1247 = vperm.slane %v1231, 5
        %v1248 = vperm.slane %v1231, 6
        %v1249 = vperm.slane %v1231, 7
        %v1266 = vrcp.pop %v1234
        %v1267 = vmul.f32 %v1234, %v1266
        %v1268 = vsub.f32 1.0, %v1267
        %v1269 = vmul.f32 %v1266, %v1268
        %v1270 = vadd.f32 %v1266, %v1269
        %vm1271 = vweird.f32 %v1234
        %vm1272 = vweird.f32 %v1266
        %vm1273 = vmor %vm1271, %vm1272
        %v1274 = vsel %vm1273, %v1266, %v1270
        %v1275 = vand.u32 2147483647, %v1234
        %vm1276 = vcmp.eq.f32.partialorder %v1275, 8.507059e+37
        %v1277 = vand.u32 %v1234, 2147483648
        %v1278 = vor.u32 1.1754944e-38, %v1277
        %v1279 = vsel %vm1276, %v1278, %v1274
        %v1280 = vmul.f32 %v1099, %v1279
        %v1281 = vrcp.pop %v1235
        %v1282 = vmul.f32 %v1235, %v1281
        %v1283 = vsub.f32 1.0, %v1282
        %v1284 = vmul.f32 %v1281, %v1283
        %v1285 = vadd.f32 %v1281, %v1284
        %vm1286 = vweird.f32 %v1235
        %vm1287 = vweird.f32 %v1281
        %vm1288 = vmor %vm1286, %vm1287
        %v1289 = vsel %vm1288, %v1281, %v1285
        %v1290 = vand.u32 2147483647, %v1235
        %vm1291 = vcmp.eq.f32.partialorder %v1290, 8.507059e+37
        %v1292 = vand.u32 %v1235, 2147483648
        %v1293 = vor.u32 1.1754944e-38, %v1292
        %v1294 = vsel %vm1291, %v1293, %v1289
        %v1295 = vmul.f32 %v1101, %v1294
        %v1296 = vrcp.pop %v1236
        %v1297 = vmul.f32 %v1236, %v1296
        %v1298 = vsub.f32 1.0, %v1297
        %v1299 = vmul.f32 %v1296, %v1298
        %v1300 = vadd.f32 %v1296, %v1299
        %vm1301 = vweird.f32 %v1236
        %vm1302 = vweird.f32 %v1296
        %vm1303 = vmor %vm1301, %vm1302
        %v1304 = vsel %vm1303, %v1296, %v1300
        %v1305 = vand.u32 2147483647, %v1236
        %vm1306 = vcmp.eq.f32.partialorder %v1305, 8.507059e+37
        %v1307 = vand.u32 %v1236, 2147483648
        %v1308 = vor.u32 1.1754944e-38, %v1307
        %v1309 = vsel %vm1306, %v1308, %v1304
        %v1310 = vmul.f32 %v1103, %v1309
        %v1311 = vrcp.pop %v1237
        %v1312 = vmul.f32 %v1237, %v1311
        %v1313 = vsub.f32 1.0, %v1312
        %v1314 = vmul.f32 %v1311, %v1313
        %v1315 = vadd.f32 %v1311, %v1314
        %vm1316 = vweird.f32 %v1237
        %vm1317 = vweird.f32 %v1311
        %vm1318 = vmor %vm1316, %vm1317
        %v1319 = vsel %vm1318, %v1311, %v1315
        %v1320 = vand.u32 2147483647, %v1237
        %vm1321 = vcmp.eq.f32.partialorder %v1320, 8.507059e+37
        %v1322 = vand.u32 %v1237, 2147483648
        %v1323 = vor.u32 1.1754944e-38, %v1322
        %v1324 = vsel %vm1321, %v1323, %v1319
        %v1325 = vmul.f32 %v1105, %v1324
        %v1326 = vrcp.pop %v1238
        %v1327 = vmul.f32 %v1238, %v1326
        %v1328 = vsub.f32 1.0, %v1327
        %v1329 = vmul.f32 %v1326, %v1328
        %v1330 = vadd.f32 %v1326, %v1329
        %vm1331 = vweird.f32 %v1238
        %vm1332 = vweird.f32 %v1326
        %vm1333 = vmor %vm1331, %vm1332
        %v1334 = vsel %vm1333, %v1326, %v1330
        %v1335 = vand.u32 2147483647, %v1238
        %vm1336 = vcmp.eq.f32.partialorder %v1335, 8.507059e+37
        %v1337 = vand.u32 %v1238, 2147483648
        %v1338 = vor.u32 1.1754944e-38, %v1337
        %v1339 = vsel %vm1336, %v1338, %v1334
        %v1340 = vmul.f32 %v1107, %v1339
        %v1341 = vrcp.pop %v1239
        %v1342 = vmul.f32 %v1239, %v1341
        %v1343 = vsub.f32 1.0, %v1342
        %v1344 = vmul.f32 %v1341, %v1343
        %v1345 = vadd.f32 %v1341, %v1344
        %vm1346 = vweird.f32 %v1239
        %vm1347 = vweird.f32 %v1341
        %vm1348 = vmor %vm1346, %vm1347
        %v1349 = vsel %vm1348, %v1341, %v1345
        %v1350 = vand.u32 2147483647, %v1239
        %vm1351 = vcmp.eq.f32.partialorder %v1350, 8.507059e+37
        %v1352 = vand.u32 %v1239, 2147483648
        %v1353 = vor.u32 1.1754944e-38, %v1352
        %v1354 = vsel %vm1351, %v1353, %v1349
        %v1355 = vmul.f32 %v1109, %v1354
        %v1356 = vrcp.pop %v1240
        %v1357 = vmul.f32 %v1240, %v1356
        %v1358 = vsub.f32 1.0, %v1357
        %v1359 = vmul.f32 %v1356, %v1358
        %v1360 = vadd.f32 %v1356, %v1359
        %vm1361 = vweird.f32 %v1240
        %vm1362 = vweird.f32 %v1356
        %vm1363 = vmor %vm1361, %vm1362
        %v1364 = vsel %vm1363, %v1356, %v1360
        %v1365 = vand.u32 2147483647, %v1240
        %vm1366 = vcmp.eq.f32.partialorder %v1365, 8.507059e+37
        %v1367 = vand.u32 %v1240, 2147483648
        %v1368 = vor.u32 1.1754944e-38, %v1367
        %v1369 = vsel %vm1366, %v1368, %v1364
        %v1370 = vmul.f32 %v1111, %v1369
        %v1371 = vrcp.pop %v1241
        %v1372 = vmul.f32 %v1241, %v1371
        %v1373 = vsub.f32 1.0, %v1372
        %v1374 = vmul.f32 %v1371, %v1373
        %v1375 = vadd.f32 %v1371, %v1374
        %vm1376 = vweird.f32 %v1241
        %vm1377 = vweird.f32 %v1371
        %vm1378 = vmor %vm1376, %vm1377
        %v1379 = vsel %vm1378, %v1371, %v1375
        %v1380 = vand.u32 2147483647, %v1241
        %vm1381 = vcmp.eq.f32.partialorder %v1380, 8.507059e+37
        %v1382 = vand.u32 %v1241, 2147483648
        %v1383 = vor.u32 1.1754944e-38, %v1382
        %v1384 = vsel %vm1381, %v1383, %v1379
        %v1385 = vmul.f32 %v1113, %v1384
        %v1386 = vrcp.pop %v1242
        %v1387 = vmul.f32 %v1242, %v1386
        %v1388 = vsub.f32 1.0, %v1387
        %v1389 = vmul.f32 %v1386, %v1388
        %v1390 = vadd.f32 %v1386, %v1389
        %vm1391 = vweird.f32 %v1242
        %vm1392 = vweird.f32 %v1386
        %vm1393 = vmor %vm1391, %vm1392
        %v1394 = vsel %vm1393, %v1386, %v1390
        %v1395 = vand.u32 2147483647, %v1242
        %vm1396 = vcmp.eq.f32.partialorder %v1395, 8.507059e+37
        %v1397 = vand.u32 %v1242, 2147483648
        %v1398 = vor.u32 1.1754944e-38, %v1397
        %v1399 = vsel %vm1396, %v1398, %v1394
        %v1400 = vmul.f32 %v1115, %v1399
        %v1401 = vrcp.pop %v1243
        %v1402 = vmul.f32 %v1243, %v1401
        %v1403 = vsub.f32 1.0, %v1402
        %v1404 = vmul.f32 %v1401, %v1403
        %v1405 = vadd.f32 %v1401, %v1404
        %vm1406 = vweird.f32 %v1243
        %vm1407 = vweird.f32 %v1401
        %vm1408 = vmor %vm1406, %vm1407
        %v1409 = vsel %vm1408, %v1401, %v1405
        %v1410 = vand.u32 2147483647, %v1243
        %vm1411 = vcmp.eq.f32.partialorder %v1410, 8.507059e+37
        %v1412 = vand.u32 %v1243, 2147483648
        %v1413 = vor.u32 1.1754944e-38, %v1412
        %v1414 = vsel %vm1411, %v1413, %v1409
        %v1415 = vmul.f32 %v1117, %v1414
        %v1416 = vrcp.pop %v1244
        %v1417 = vmul.f32 %v1244, %v1416
        %v1418 = vsub.f32 1.0, %v1417
        %v1419 = vmul.f32 %v1416, %v1418
        %v1420 = vadd.f32 %v1416, %v1419
        %vm1421 = vweird.f32 %v1244
        %vm1422 = vweird.f32 %v1416
        %vm1423 = vmor %vm1421, %vm1422
        %v1424 = vsel %vm1423, %v1416, %v1420
        %v1425 = vand.u32 2147483647, %v1244
        %vm1426 = vcmp.eq.f32.partialorder %v1425, 8.507059e+37
        %v1427 = vand.u32 %v1244, 2147483648
        %v1428 = vor.u32 1.1754944e-38, %v1427
        %v1429 = vsel %vm1426, %v1428, %v1424
        %v1430 = vmul.f32 %v1119, %v1429
        %v1431 = vrcp.pop %v1245
        %v1432 = vmul.f32 %v1245, %v1431
        %v1433 = vsub.f32 1.0, %v1432
        %v1434 = vmul.f32 %v1431, %v1433
        %v1435 = vadd.f32 %v1431, %v1434
        %vm1436 = vweird.f32 %v1245
        %vm1437 = vweird.f32 %v1431
        %vm1438 = vmor %vm1436, %vm1437
        %v1439 = vsel %vm1438, %v1431, %v1435
        %v1440 = vand.u32 2147483647, %v1245
        %vm1441 = vcmp.eq.f32.partialorder %v1440, 8.507059e+37
        %v1442 = vand.u32 %v1245, 2147483648
        %v1443 = vor.u32 1.1754944e-38, %v1442
        %v1444 = vsel %vm1441, %v1443, %v1439
        %v1445 = vmul.f32 %v1121, %v1444
        %v1446 = vrcp.pop %v1246
        %v1447 = vmul.f32 %v1246, %v1446
        %v1448 = vsub.f32 1.0, %v1447
        %v1449 = vmul.f32 %v1446, %v1448
        %v1450 = vadd.f32 %v1446, %v1449
        %vm1451 = vweird.f32 %v1246
        %vm1452 = vweird.f32 %v1446
        %vm1453 = vmor %vm1451, %vm1452
        %v1454 = vsel %vm1453, %v1446, %v1450
        %v1455 = vand.u32 2147483647, %v1246
        %vm1456 = vcmp.eq.f32.partialorder %v1455, 8.507059e+37
        %v1457 = vand.u32 %v1246, 2147483648
        %v1458 = vor.u32 1.1754944e-38, %v1457
        %v1459 = vsel %vm1456, %v1458, %v1454
        %v1460 = vmul.f32 %v1123, %v1459
        %v1461 = vrcp.pop %v1247
        %v1462 = vmul.f32 %v1247, %v1461
        %v1463 = vsub.f32 1.0, %v1462
        %v1464 = vmul.f32 %v1461, %v1463
        %v1465 = vadd.f32 %v1461, %v1464
        %vm1466 = vweird.f32 %v1247
        %vm1467 = vweird.f32 %v1461
        %vm1468 = vmor %vm1466, %vm1467
        %v1469 = vsel %vm1468, %v1461, %v1465
        %v1470 = vand.u32 2147483647, %v1247
        %vm1471 = vcmp.eq.f32.partialorder %v1470, 8.507059e+37
        %v1472 = vand.u32 %v1247, 2147483648
        %v1473 = vor.u32 1.1754944e-38, %v1472
        %v1474 = vsel %vm1471, %v1473, %v1469
        %v1475 = vmul.f32 %v1125, %v1474
        %v1476 = vrcp.pop %v1248
        %v1477 = vmul.f32 %v1248, %v1476
        %v1478 = vsub.f32 1.0, %v1477
        %v1479 = vmul.f32 %v1476, %v1478
        %v1480 = vadd.f32 %v1476, %v1479
        %vm1481 = vweird.f32 %v1248
        %vm1482 = vweird.f32 %v1476
        %vm1483 = vmor %vm1481, %vm1482
        %v1484 = vsel %vm1483, %v1476, %v1480
        %v1485 = vand.u32 2147483647, %v1248
        %vm1486 = vcmp.eq.f32.partialorder %v1485, 8.507059e+37
        %v1487 = vand.u32 %v1248, 2147483648
        %v1488 = vor.u32 1.1754944e-38, %v1487
        %v1489 = vsel %vm1486, %v1488, %v1484
        %v1490 = vmul.f32 %v1127, %v1489
        %v1491 = vrcp.pop %v1249
        %v1492 = vmul.f32 %v1249, %v1491
        %v1493 = vsub.f32 1.0, %v1492
        %v1494 = vmul.f32 %v1491, %v1493
        %v1495 = vadd.f32 %v1491, %v1494
        %vm1496 = vweird.f32 %v1249
        %vm1497 = vweird.f32 %v1491
        %vm1498 = vmor %vm1496, %vm1497
        %v1499 = vsel %vm1498, %v1491, %v1495
        %v1500 = vand.u32 2147483647, %v1249
        %vm1501 = vcmp.eq.f32.partialorder %v1500, 8.507059e+37
        %v1502 = vand.u32 %v1249, 2147483648
        %v1503 = vor.u32 1.1754944e-38, %v1502
        %v1504 = vsel %vm1501, %v1503, %v1499
        %v1505 = vmul.f32 %v1129, %v1504
        %v1506 = vld [vmem:[%s437] sm:$0xff]
        %v1507 = vpack.c.bf16 %v1506, %v1506
        %v1508 = vpack.c.bf16 %v1280, %v1280
        %v1509 = vpack.c.bf16 %v1295, %v1295
        %v1510 = vpack.c.bf16 %v1310, %v1310
        %v1511 = vpack.c.bf16 %v1325, %v1325
        %v1512 = vpack.c.bf16 %v1340, %v1340
        %v1513 = vpack.c.bf16 %v1355, %v1355
        %v1514 = vpack.c.bf16 %v1370, %v1370
        %v1515 = vpack.c.bf16 %v1385, %v1385
        %v1516 = vpack.c.bf16 %v1400, %v1400
        %v1517 = vpack.c.bf16 %v1415, %v1415
        %v1518 = vpack.c.bf16 %v1430, %v1430
        %v1519 = vpack.c.bf16 %v1445, %v1445
        %v1520 = vpack.c.bf16 %v1460, %v1460
        %v1521 = vpack.c.bf16 %v1475, %v1475
        %v1522 = vpack.c.bf16 %v1490, %v1490
        %v1523 = vpack.c.bf16 %v1505, %v1505
        %v1540 = vunpack.c.l.b16 %v1508
        %v1541 = vunpack.c.l.b16 %v1509
        %v1542 = vunpack.c.l.b16 %v1510
        %v1543 = vunpack.c.l.b16 %v1511
        %v1544 = vunpack.c.l.b16 %v1512
        %v1545 = vunpack.c.l.b16 %v1513
        %v1546 = vunpack.c.l.b16 %v1514
        %v1547 = vunpack.c.l.b16 %v1515
        %v1548 = vunpack.c.l.b16 %v1516
        %v1549 = vunpack.c.l.b16 %v1517
        %v1550 = vunpack.c.l.b16 %v1518
        %v1551 = vunpack.c.l.b16 %v1519
        %v1552 = vunpack.c.l.b16 %v1520
        %v1553 = vunpack.c.l.b16 %v1521
        %v1554 = vunpack.c.l.b16 %v1522
        %v1555 = vunpack.c.l.b16 %v1523
        %1556 = vset.pattern.permute.xlu0 0
        %1557 = vperm.xlu0 %1556, %v1540
        %v1558 = vpop.permute.xlu0 %1557
        %1559 = vset.pattern.permute.xlu0 0
        %1560 = vperm.xlu0 %1559, %v1541
        %v1561 = vpop.permute.xlu0 %1560
        %1562 = vset.pattern.permute.xlu0 0
        %1563 = vperm.xlu0 %1562, %v1542
        %v1564 = vpop.permute.xlu0 %1563
        %1565 = vset.pattern.permute.xlu0 0
        %1566 = vperm.xlu0 %1565, %v1543
        %v1567 = vpop.permute.xlu0 %1566
        %1568 = vset.pattern.permute.xlu0 0
        %1569 = vperm.xlu0 %1568, %v1544
        %v1570 = vpop.permute.xlu0 %1569
        %1571 = vset.pattern.permute.xlu0 0
        %1572 = vperm.xlu0 %1571, %v1545
        %v1573 = vpop.permute.xlu0 %1572
        %1574 = vset.pattern.permute.xlu0 0
        %1575 = vperm.xlu0 %1574, %v1546
        %v1576 = vpop.permute.xlu0 %1575
        %1577 = vset.pattern.permute.xlu0 0
        %1578 = vperm.xlu0 %1577, %v1547
        %v1579 = vpop.permute.xlu0 %1578
        %1580 = vset.pattern.permute.xlu0 0
        %1581 = vperm.xlu0 %1580, %v1548
        %v1582 = vpop.permute.xlu0 %1581
        %1583 = vset.pattern.permute.xlu0 0
        %1584 = vperm.xlu0 %1583, %v1549
        %v1585 = vpop.permute.xlu0 %1584
        %1586 = vset.pattern.permute.xlu0 0
        %1587 = vperm.xlu0 %1586, %v1550
        %v1588 = vpop.permute.xlu0 %1587
        %1589 = vset.pattern.permute.xlu0 0
        %1590 = vperm.xlu0 %1589, %v1551
        %v1591 = vpop.permute.xlu0 %1590
        %1592 = vset.pattern.permute.xlu0 0
        %1593 = vperm.xlu0 %1592, %v1552
        %v1594 = vpop.permute.xlu0 %1593
        %1595 = vset.pattern.permute.xlu0 0
        %1596 = vperm.xlu0 %1595, %v1553
        %v1597 = vpop.permute.xlu0 %1596
        %1598 = vset.pattern.permute.xlu0 0
        %1599 = vperm.xlu0 %1598, %v1554
        %v1600 = vpop.permute.xlu0 %1599
        %1601 = vset.pattern.permute.xlu0 0
        %1602 = vperm.xlu0 %1601, %v1555
        %v1603 = vpop.permute.xlu0 %1602
        %v1604 = vperm.slane %v1558, %v1001
        %v1605 = vperm.slane %v1561, %v1001
        %v1606 = vperm.slane %v1564, %v1001
        %v1607 = vperm.slane %v1567, %v1001
        %v1608 = vperm.slane %v1570, %v1001
        %v1609 = vperm.slane %v1573, %v1001
        %v1610 = vperm.slane %v1576, %v1001
        %v1611 = vperm.slane %v1579, %v1001
        %v1612 = vperm.slane %v1582, %v1001
        %v1613 = vperm.slane %v1585, %v1001
        %v1614 = vperm.slane %v1588, %v1001
        %v1615 = vperm.slane %v1591, %v1001
        %v1616 = vperm.slane %v1594, %v1001
        %v1617 = vperm.slane %v1597, %v1001
        %v1618 = vperm.slane %v1600, %v1001
        %v1619 = vperm.slane %v1603, %v1001
        %v1620 = vsel %vm1018, %v1605, %v1604
        %v1621 = vsel %vm1020, %v1606, %v1620
        %v1622 = vsel %vm1022, %v1607, %v1621
        %v1623 = vsel %vm1024, %v1608, %v1622
        %v1624 = vsel %vm1026, %v1609, %v1623
        %v1625 = vsel %vm1028, %v1610, %v1624
        %v1626 = vsel %vm1030, %v1611, %v1625
        %v1627 = vsel %vm1018, %v1613, %v1612
        %v1628 = vsel %vm1020, %v1614, %v1627
        %v1629 = vsel %vm1022, %v1615, %v1628
        %v1630 = vsel %vm1024, %v1616, %v1629
        %v1631 = vsel %vm1026, %v1617, %v1630
        %v1632 = vsel %vm1028, %v1618, %v1631
        %v1633 = vsel %vm1030, %v1619, %v1632
        %v1634 = vpack.c.b16 %v1633, %v1626
        %v1636 = vsel %vm1041, %v1634, 0
        %vm1638 = vcmask 1043456
        %v1640 = vsel %vm1638, %v1507, 0
        %1642 = vmatpush.bf16.msra.mxu0 0
        %1643 = vmatpush.bf16.msra.mxu0 0
        %1644 = vmatpush.bf16.msra.mxu0 0
        %1645 = vmatpush.bf16.msra.mxu0 0
        %1646 = vmatpush.bf16.msra.mxu0 0
        %1647 = vmatpush.bf16.msra.mxu0 0
        %1648 = vmatpush.bf16.msra.mxu0 0
        %1649 = vmatpush.bf16.msra.mxu0 %v1640
        %1650 = vmatmul.bf16.gmra.mxu0 %v1636
        %v1651 = vpop.f32.mrf.mxu0
        %v1652 = vadd.f32 0.0, %v1651
        %v1653 = vpop.f32.mrf.mxu0
        %v1654 = vadd.f32 0.0, %v1653
        %1655 = vdwg.mxu0
        %1656 = vst [vmem:[#allocation5] sm:$0xff] %v1652
        %1657 = vst [vmem:[#allocation5 + $0x8] sm:$0xff] %v1654
        %v1658 = vld [vmem:[%s447] sm:$0xff]
        %v1659 = vld [vmem:[%s447 + $0x8] sm:$0xff]
        %v1660 = vld [vmem:[#allocation5] sm:$0xff]
        %v1661 = vld [vmem:[#allocation5 + $0x8] sm:$0xff]
        %v1662 = vpack.c.bf16 %v1661, %v1660
        %v1663 = vld [vmem:[#allocation12] sm:$0xf]
        %v1664 = vld [vmem:[#allocation12 + $0x4] sm:$0xf]
        %v1665 = vld [vmem:[#allocation12 + $0x8] sm:$0xf]
        %v1666 = vld [vmem:[#allocation12 + $0xc] sm:$0xf]
        %v1667 = vld [vmem:[#allocation12 + $0x10] sm:$0xf]
        %v1668 = vld [vmem:[#allocation12 + $0x14] sm:$0xf]
        %v1669 = vld [vmem:[#allocation12 + $0x18] sm:$0xf]
        %v1670 = vld [vmem:[#allocation12 + $0x1c] sm:$0xf]
        %v1671 = vld [vmem:[#allocation12 + $0x20] sm:$0xf]
        %v1672 = vld [vmem:[#allocation12 + $0x24] sm:$0xf]
        %v1673 = vld [vmem:[#allocation12 + $0x28] sm:$0xf]
        %v1674 = vld [vmem:[#allocation12 + $0x2c] sm:$0xf]
        %v1675 = vld [vmem:[#allocation12 + $0x30] sm:$0xf]
        %v1676 = vld [vmem:[#allocation12 + $0x34] sm:$0xf]
        %v1677 = vld [vmem:[#allocation12 + $0x38] sm:$0xf]
        %v1678 = vld [vmem:[#allocation12 + $0x3c] sm:$0xf]
        %v1695 = vunpack.c.l.b16 %v1663
        %v1696 = vunpack.c.l.b16 %v1664
        %v1697 = vunpack.c.l.b16 %v1665
        %v1698 = vunpack.c.l.b16 %v1666
        %v1699 = vunpack.c.l.b16 %v1667
        %v1700 = vunpack.c.l.b16 %v1668
        %v1701 = vunpack.c.l.b16 %v1669
        %v1702 = vunpack.c.l.b16 %v1670
        %v1703 = vunpack.c.l.b16 %v1671
        %v1704 = vunpack.c.l.b16 %v1672
        %v1705 = vunpack.c.l.b16 %v1673
        %v1706 = vunpack.c.l.b16 %v1674
        %v1707 = vunpack.c.l.b16 %v1675
        %v1708 = vunpack.c.l.b16 %v1676
        %v1709 = vunpack.c.l.b16 %v1677
        %v1710 = vunpack.c.l.b16 %v1678
        %v1711 = vpack.c.b16 %v1696, %v1695
        %v1712 = vpack.c.b16 %v1698, %v1697
        %v1713 = vpack.c.b16 %v1700, %v1699
        %v1714 = vpack.c.b16 %v1702, %v1701
        %v1715 = vpack.c.b16 %v1704, %v1703
        %v1716 = vpack.c.b16 %v1706, %v1705
        %v1717 = vpack.c.b16 %v1708, %v1707
        %v1718 = vpack.c.b16 %v1710, %v1709
        %1727 = vmatpush.bf16.msra.mxu0 %v1718
        %1728 = vmatpush.bf16.msra.mxu0 %v1717
        %1729 = vmatpush.bf16.msra.mxu0 %v1716
        %1730 = vmatpush.bf16.msra.mxu0 %v1715
        %1731 = vmatpush.bf16.msra.mxu0 %v1714
        %1732 = vmatpush.bf16.msra.mxu0 %v1713
        %1733 = vmatpush.bf16.msra.mxu0 %v1712
        %1734 = vmatpush.bf16.msra.mxu0 %v1711
        %1735 = vmatmul.bf16.gmra.mxu0 %v1662
        %v1736 = vpop.f32.mrf.mxu0
        %v1737 = vadd.f32 0.0, %v1736
        %v1738 = vpop.f32.mrf.mxu0
        %v1739 = vadd.f32 0.0, %v1738
        %1740 = vdwg.mxu0
        %v1741 = vxor.u32 %v1737, 2147483648
        %v1742 = vxor.u32 %v1739, 2147483648
        %v1743 = vmul.f32 %v1741, 1.442695
        %v1744 = vpow.pop %v1743
        %v1745 = vmul.f32 %v1742, 1.442695
        %v1746 = vpow.pop %v1745
        %v1747 = vadd.f32 %v1744, 1.0
        %v1748 = vadd.f32 %v1746, 1.0
        %v1749 = vrcp.pop %v1747
        %v1750 = vmul.f32 %v1747, %v1749
        %v1751 = vsub.f32 1.0, %v1750
        %v1752 = vmul.f32 %v1749, %v1751
        %v1753 = vadd.f32 %v1749, %v1752
        %vm1754 = vweird.f32 %v1747
        %vm1755 = vweird.f32 %v1749
        %vm1756 = vmor %vm1754, %vm1755
        %v1757 = vsel %vm1756, %v1749, %v1753
        %v1758 = vand.u32 2147483647, %v1747
        %vm1759 = vcmp.eq.f32.partialorder %v1758, 8.507059e+37
        %v1760 = vand.u32 %v1747, 2147483648
        %v1761 = vor.u32 1.1754944e-38, %v1760
        %v1762 = vsel %vm1759, %v1761, %v1757
        %v1763 = vmul.f32 1.0, %v1762
        %v1764 = vrcp.pop %v1748
        %v1765 = vmul.f32 %v1748, %v1764
        %v1766 = vsub.f32 1.0, %v1765
        %v1767 = vmul.f32 %v1764, %v1766
        %v1768 = vadd.f32 %v1764, %v1767
        %vm1769 = vweird.f32 %v1748
        %vm1770 = vweird.f32 %v1764
        %vm1771 = vmor %vm1769, %vm1770
        %v1772 = vsel %vm1771, %v1764, %v1768
        %v1773 = vand.u32 2147483647, %v1748
        %vm1774 = vcmp.eq.f32.partialorder %v1773, 8.507059e+37
        %v1775 = vand.u32 %v1748, 2147483648
        %v1776 = vor.u32 1.1754944e-38, %v1775
        %v1777 = vsel %vm1774, %v1776, %v1772
        %v1778 = vmul.f32 1.0, %v1777
        %v1779 = vmul.f32 %v1763, %v1658
        %v1780 = vmul.f32 %v1778, %v1659
        %v1781 = vld [vmem:[#allocation3] sm:$0xff]
        %v1782 = vld [vmem:[#allocation3 + $0x8] sm:$0xff]
        %v1783 = vxor.u32 %v1781, 2147483648
        %v1784 = vxor.u32 %v1782, 2147483648
        %v1785 = vmul.f32 %v1783, 1.442695
        %v1786 = vpow.pop %v1785
        %v1787 = vmul.f32 %v1784, 1.442695
        %v1788 = vpow.pop %v1787
        %v1789 = vadd.f32 %v1786, 1.0
        %v1790 = vadd.f32 %v1788, 1.0
        %v1791 = vrcp.pop %v1789
        %v1792 = vmul.f32 %v1789, %v1791
        %v1793 = vsub.f32 1.0, %v1792
        %v1794 = vmul.f32 %v1791, %v1793
        %v1795 = vadd.f32 %v1791, %v1794
        %vm1796 = vweird.f32 %v1789
        %vm1797 = vweird.f32 %v1791
        %vm1798 = vmor %vm1796, %vm1797
        %v1799 = vsel %vm1798, %v1791, %v1795
        %v1800 = vand.u32 2147483647, %v1789
        %vm1801 = vcmp.eq.f32.partialorder %v1800, 8.507059e+37
        %v1802 = vand.u32 %v1789, 2147483648
        %v1803 = vor.u32 1.1754944e-38, %v1802
        %v1804 = vsel %vm1801, %v1803, %v1799
        %v1805 = vmul.f32 1.0, %v1804
        %v1806 = vrcp.pop %v1790
        %v1807 = vmul.f32 %v1790, %v1806
        %v1808 = vsub.f32 1.0, %v1807
        %v1809 = vmul.f32 %v1806, %v1808
        %v1810 = vadd.f32 %v1806, %v1809
        %vm1811 = vweird.f32 %v1790
        %vm1812 = vweird.f32 %v1806
        %vm1813 = vmor %vm1811, %vm1812
        %v1814 = vsel %vm1813, %v1806, %v1810
        %v1815 = vand.u32 2147483647, %v1790
        %vm1816 = vcmp.eq.f32.partialorder %v1815, 8.507059e+37
        %v1817 = vand.u32 %v1790, 2147483648
        %v1818 = vor.u32 1.1754944e-38, %v1817
        %v1819 = vsel %vm1816, %v1818, %v1814
        %v1820 = vmul.f32 1.0, %v1819
        %v1821 = vmul.f32 %v1805, %v1660
        %v1822 = vmul.f32 %v1820, %v1661
        %v1823 = vpack.c.bf16 %v1822, %v1821
        %v1824 = vld [vmem:[#allocation14] sm:$0xff]
        %v1825 = vld [vmem:[#allocation14 + $0x8] sm:$0xff]
        %v1826 = vld [vmem:[#allocation14 + $0x10] sm:$0xff]
        %v1827 = vld [vmem:[#allocation14 + $0x18] sm:$0xff]
        %v1828 = vld [vmem:[#allocation14 + $0x20] sm:$0xff]
        %v1829 = vld [vmem:[#allocation14 + $0x28] sm:$0xff]
        %v1830 = vld [vmem:[#allocation14 + $0x30] sm:$0xff]
        %v1831 = vld [vmem:[#allocation14 + $0x38] sm:$0xff]
        %v1832 = vld [vmem:[#allocation14 + $0x40] sm:$0xff]
        %v1833 = vld [vmem:[#allocation14 + $0x48] sm:$0xff]
        %v1834 = vld [vmem:[#allocation14 + $0x50] sm:$0xff]
        %v1835 = vld [vmem:[#allocation14 + $0x58] sm:$0xff]
        %v1836 = vld [vmem:[#allocation14 + $0x60] sm:$0xff]
        %v1837 = vld [vmem:[#allocation14 + $0x68] sm:$0xff]
        %v1838 = vld [vmem:[#allocation14 + $0x70] sm:$0xff]
        %v1839 = vld [vmem:[#allocation14 + $0x78] sm:$0xff]
        %v1840 = vld [vmem:[%s8] sm:$0x3]
        %v1842 = vperm.slane %v1840, 0
        %v1843 = vperm.slane %v1840, 1
        %v1862 = vunpack.c.l.b16 %v1824
        %v1863 = vunpack.c.h.b16 %v1824
        %v1864 = vunpack.c.l.b16 %v1825
        %v1865 = vunpack.c.h.b16 %v1825
        %v1866 = vunpack.c.l.b16 %v1826
        %v1867 = vunpack.c.h.b16 %v1826
        %v1868 = vunpack.c.l.b16 %v1827
        %v1869 = vunpack.c.h.b16 %v1827
        %v1870 = vunpack.c.l.b16 %v1828
        %v1871 = vunpack.c.h.b16 %v1828
        %v1872 = vunpack.c.l.b16 %v1829
        %v1873 = vunpack.c.h.b16 %v1829
        %v1874 = vunpack.c.l.b16 %v1830
        %v1875 = vunpack.c.h.b16 %v1830
        %v1876 = vunpack.c.l.b16 %v1831
        %v1877 = vunpack.c.h.b16 %v1831
        %v1878 = vunpack.c.l.b16 %v1832
        %v1879 = vunpack.c.h.b16 %v1832
        %v1880 = vunpack.c.l.b16 %v1833
        %v1881 = vunpack.c.h.b16 %v1833
        %v1882 = vunpack.c.l.b16 %v1834
        %v1883 = vunpack.c.h.b16 %v1834
        %v1884 = vunpack.c.l.b16 %v1835
        %v1885 = vunpack.c.h.b16 %v1835
        %v1886 = vunpack.c.l.b16 %v1836
        %v1887 = vunpack.c.h.b16 %v1836
        %v1888 = vunpack.c.l.b16 %v1837
        %v1889 = vunpack.c.h.b16 %v1837
        %v1890 = vunpack.c.l.b16 %v1838
        %v1891 = vunpack.c.h.b16 %v1838
        %v1892 = vunpack.c.l.b16 %v1839
        %v1893 = vunpack.c.h.b16 %v1839
        %v1894 = vpack.c.b16 %v1864, %v1862
        %v1895 = vpack.c.b16 %v1865, %v1863
        %v1896 = vpack.c.b16 %v1868, %v1866
        %v1897 = vpack.c.b16 %v1869, %v1867
        %v1898 = vpack.c.b16 %v1872, %v1870
        %v1899 = vpack.c.b16 %v1873, %v1871
        %v1900 = vpack.c.b16 %v1876, %v1874
        %v1901 = vpack.c.b16 %v1877, %v1875
        %v1902 = vpack.c.b16 %v1880, %v1878
        %v1903 = vpack.c.b16 %v1881, %v1879
        %v1904 = vpack.c.b16 %v1884, %v1882
        %v1905 = vpack.c.b16 %v1885, %v1883
        %v1906 = vpack.c.b16 %v1888, %v1886
        %v1907 = vpack.c.b16 %v1889, %v1887
        %v1908 = vpack.c.b16 %v1892, %v1890
        %v1909 = vpack.c.b16 %v1893, %v1891
        %1926 = vmatpush.bf16.msra.mxu0 %v1908
        %1927 = vmatpush.bf16.msra.mxu0 %v1906
        %1928 = vmatpush.bf16.msra.mxu0 %v1904
        %1929 = vmatpush.bf16.msra.mxu0 %v1902
        %1930 = vmatpush.bf16.msra.mxu0 %v1900
        %1931 = vmatpush.bf16.msra.mxu0 %v1898
        %1932 = vmatpush.bf16.msra.mxu0 %v1896
        %1933 = vmatpush.bf16.msra.mxu0 %v1894
        %1934 = vmatmul.bf16.gmra.mxu0 %v1823
        %v1935 = vpop.f32.mrf.mxu0
        %v1936 = vadd.f32 %v1842, %v1935
        %v1937 = vpop.f32.mrf.mxu0
        %v1938 = vadd.f32 %v1842, %v1937
        %1939 = vdwg.mxu0
        %1940 = vmatpush.bf16.msra.mxu0 %v1909
        %1941 = vmatpush.bf16.msra.mxu0 %v1907
        %1942 = vmatpush.bf16.msra.mxu0 %v1905
        %1943 = vmatpush.bf16.msra.mxu0 %v1903
        %1944 = vmatpush.bf16.msra.mxu0 %v1901
        %1945 = vmatpush.bf16.msra.mxu0 %v1899
        %1946 = vmatpush.bf16.msra.mxu0 %v1897
        %1947 = vmatpush.bf16.msra.mxu0 %v1895
        %1948 = vmatmul.bf16.gmra.mxu0 %v1823
        %v1949 = vpop.f32.mrf.mxu0
        %v1950 = vadd.f32 %v1843, %v1949
        %v1951 = vpop.f32.mrf.mxu0
        %v1952 = vadd.f32 %v1843, %v1951
        %1953 = vdwg.mxu0
        %v1954 = vpack.c.bf16 %v1780, %v1779
        %v1955 = vld [vmem:[#allocation15] sm:$0xff]
        %v1956 = vld [vmem:[#allocation15 + $0x8] sm:$0xff]
        %v1957 = vld [vmem:[#allocation15 + $0x10] sm:$0xff]
        %v1958 = vld [vmem:[#allocation15 + $0x18] sm:$0xff]
        %v1959 = vld [vmem:[#allocation15 + $0x20] sm:$0xff]
        %v1960 = vld [vmem:[#allocation15 + $0x28] sm:$0xff]
        %v1961 = vld [vmem:[#allocation15 + $0x30] sm:$0xff]
        %v1962 = vld [vmem:[#allocation15 + $0x38] sm:$0xff]
        %v1963 = vld [vmem:[#allocation15 + $0x40] sm:$0xff]
        %v1964 = vld [vmem:[#allocation15 + $0x48] sm:$0xff]
        %v1965 = vld [vmem:[#allocation15 + $0x50] sm:$0xff]
        %v1966 = vld [vmem:[#allocation15 + $0x58] sm:$0xff]
        %v1967 = vld [vmem:[#allocation15 + $0x60] sm:$0xff]
        %v1968 = vld [vmem:[#allocation15 + $0x68] sm:$0xff]
        %v1969 = vld [vmem:[#allocation15 + $0x70] sm:$0xff]
        %v1970 = vld [vmem:[#allocation15 + $0x78] sm:$0xff]
        %v1971 = vld [vmem:[%s10] sm:$0x3]
        %v1973 = vperm.slane %v1971, 0
        %v1974 = vperm.slane %v1971, 1
        %v1993 = vunpack.c.l.b16 %v1955
        %v1994 = vunpack.c.h.b16 %v1955
        %v1995 = vunpack.c.l.b16 %v1956
        %v1996 = vunpack.c.h.b16 %v1956
        %v1997 = vunpack.c.l.b16 %v1957
        %v1998 = vunpack.c.h.b16 %v1957
        %v1999 = vunpack.c.l.b16 %v1958
        %v2000 = vunpack.c.h.b16 %v1958
        %v2001 = vunpack.c.l.b16 %v1959
        %v2002 = vunpack.c.h.b16 %v1959
        %v2003 = vunpack.c.l.b16 %v1960
        %v2004 = vunpack.c.h.b16 %v1960
        %v2005 = vunpack.c.l.b16 %v1961
        %v2006 = vunpack.c.h.b16 %v1961
        %v2007 = vunpack.c.l.b16 %v1962
        %v2008 = vunpack.c.h.b16 %v1962
        %v2009 = vunpack.c.l.b16 %v1963
        %v2010 = vunpack.c.h.b16 %v1963
        %v2011 = vunpack.c.l.b16 %v1964
        %v2012 = vunpack.c.h.b16 %v1964
        %v2013 = vunpack.c.l.b16 %v1965
        %v2014 = vunpack.c.h.b16 %v1965
        %v2015 = vunpack.c.l.b16 %v1966
        %v2016 = vunpack.c.h.b16 %v1966
        %v2017 = vunpack.c.l.b16 %v1967
        %v2018 = vunpack.c.h.b16 %v1967
        %v2019 = vunpack.c.l.b16 %v1968
        %v2020 = vunpack.c.h.b16 %v1968
        %v2021 = vunpack.c.l.b16 %v1969
        %v2022 = vunpack.c.h.b16 %v1969
        %v2023 = vunpack.c.l.b16 %v1970
        %v2024 = vunpack.c.h.b16 %v1970
        %v2025 = vpack.c.b16 %v1995, %v1993
        %v2026 = vpack.c.b16 %v1996, %v1994
        %v2027 = vpack.c.b16 %v1999, %v1997
        %v2028 = vpack.c.b16 %v2000, %v1998
        %v2029 = vpack.c.b16 %v2003, %v2001
        %v2030 = vpack.c.b16 %v2004, %v2002
        %v2031 = vpack.c.b16 %v2007, %v2005
        %v2032 = vpack.c.b16 %v2008, %v2006
        %v2033 = vpack.c.b16 %v2011, %v2009
        %v2034 = vpack.c.b16 %v2012, %v2010
        %v2035 = vpack.c.b16 %v2015, %v2013
        %v2036 = vpack.c.b16 %v2016, %v2014
        %v2037 = vpack.c.b16 %v2019, %v2017
        %v2038 = vpack.c.b16 %v2020, %v2018
        %v2039 = vpack.c.b16 %v2023, %v2021
        %v2040 = vpack.c.b16 %v2024, %v2022
        %2057 = vmatpush.bf16.msra.mxu0 %v2039
        %2058 = vmatpush.bf16.msra.mxu0 %v2037
        %2059 = vmatpush.bf16.msra.mxu0 %v2035
        %2060 = vmatpush.bf16.msra.mxu0 %v2033
        %2061 = vmatpush.bf16.msra.mxu0 %v2031
        %2062 = vmatpush.bf16.msra.mxu0 %v2029
        %2063 = vmatpush.bf16.msra.mxu0 %v2027
        %2064 = vmatpush.bf16.msra.mxu0 %v2025
        %2065 = vmatmul.bf16.gmra.mxu0 %v1954
        %v2066 = vpop.f32.mrf.mxu0
        %v2067 = vadd.f32 %v1973, %v2066
        %v2068 = vpop.f32.mrf.mxu0
        %v2069 = vadd.f32 %v1973, %v2068
        %2070 = vdwg.mxu0
        %2071 = vmatpush.bf16.msra.mxu0 %v2040
        %2072 = vmatpush.bf16.msra.mxu0 %v2038
        %2073 = vmatpush.bf16.msra.mxu0 %v2036
        %2074 = vmatpush.bf16.msra.mxu0 %v2034
        %2075 = vmatpush.bf16.msra.mxu0 %v2032
        %2076 = vmatpush.bf16.msra.mxu0 %v2030
        %2077 = vmatpush.bf16.msra.mxu0 %v2028
        %2078 = vmatpush.bf16.msra.mxu0 %v2026
        %2079 = vmatmul.bf16.gmra.mxu0 %v1954
        %v2080 = vpop.f32.mrf.mxu0
        %v2081 = vadd.f32 %v1974, %v2080
        %v2082 = vpop.f32.mrf.mxu0
        %v2083 = vadd.f32 %v1974, %v2082
        %2084 = vdwg.mxu0
        %v2085 = vmul.f32 %v1936, %v2067
        %v2086 = vmul.f32 %v1938, %v2069
        %v2087 = vmul.f32 %v1950, %v2081
        %v2088 = vmul.f32 %v1952, %v2083
        %v2089 = vadd.f32 %v2085, %v2087
        %v2090 = vadd.f32 %v2086, %v2088
        %v2091 = vand.u32 2147483647, %v2089
        %v2092 = vand.u32 2147483647, %v2090
        %v2093 = vrsqrt.pop %v2091
        %v2094 = vmul.f32 %v2093, %v2091
        %v2095 = vmul.f32 %v2094, %v2093
        %v2096 = vmul.f32 0.5, %v2095
        %v2097 = vsub.f32 1.5, %v2096
        %v2098 = vmul.f32 %v2093, %v2097
        %v2099 = vmul.f32 %v2091, %v2098
        %vm2100 = vcmp.eq.f32.partialorder %v2091, inf
        %v2101 = vsel %vm2100, %v2091, %v2099
        %vm2102 = vcmp.eq.f32.partialorder %v2091, 0.0
        %v2103 = vand.u32 %v2091, 2147483648
        %v2104 = vsel %vm2102, %v2103, %v2101
        %v2105 = vrsqrt.pop %v2092
        %v2106 = vmul.f32 %v2105, %v2092
        %v2107 = vmul.f32 %v2106, %v2105
        %v2108 = vmul.f32 0.5, %v2107
        %v2109 = vsub.f32 1.5, %v2108
        %v2110 = vmul.f32 %v2105, %v2109
        %v2111 = vmul.f32 %v2092, %v2110
        %vm2112 = vcmp.eq.f32.partialorder %v2092, inf
        %v2113 = vsel %vm2112, %v2092, %v2111
        %vm2114 = vcmp.eq.f32.partialorder %v2092, 0.0
        %v2115 = vand.u32 %v2092, 2147483648
        %v2116 = vsel %vm2114, %v2115, %v2113
        %vm2117 = vcmp.lt.f32.partialorder %v2089, 0.0
        %vm2118 = vcmp.lt.f32.partialorder %v2090, 0.0
        %v2119 = vsub.f32 0.0, %v2104
        %v2120 = vsub.f32 0.0, %v2116
        %v2121 = vsel %vm2117, %v2119, %v2104
        %v2122 = vsel %vm2118, %v2120, %v2116
        %v2123 = vmul.f32 %v2121, %v2121
        %v2124 = vmul.f32 %v2122, %v2122
        %2125 = vadd.xlane.f32.xlu0 %v2123
        %v2126 = vpop.xlane.xlu0 %2125
        %2127 = vadd.xlane.f32.xlu0 %v2124
        %v2128 = vpop.xlane.xlu0 %2127
        %v2129 = vmax.f32 %v2126, 1e-24
        %v2130 = vmax.f32 %v2128, 1e-24
        %v2131 = vrsqrt.pop %v2129
        %v2132 = vmul.f32 %v2131, %v2129
        %v2133 = vmul.f32 %v2132, %v2131
        %v2134 = vmul.f32 0.5, %v2133
        %v2135 = vsub.f32 1.5, %v2134
        %v2136 = vmul.f32 %v2131, %v2135
        %vm2137 = vweird.f32 %v2129
        %vm2138 = vweird.f32 %v2131
        %vm2139 = vmor %vm2137, %vm2138
        %v2140 = vsel %vm2139, %v2131, %v2136
        %v2141 = vrsqrt.pop %v2130
        %v2142 = vmul.f32 %v2141, %v2130
        %v2143 = vmul.f32 %v2142, %v2141
        %v2144 = vmul.f32 0.5, %v2143
        %v2145 = vsub.f32 1.5, %v2144
        %v2146 = vmul.f32 %v2141, %v2145
        %vm2147 = vweird.f32 %v2130
        %vm2148 = vweird.f32 %v2141
        %vm2149 = vmor %vm2147, %vm2148
        %v2150 = vsel %vm2149, %v2141, %v2146
        %v2151 = vmul.f32 %v2121, %v2140
        %v2152 = vmul.f32 %v2122, %v2150
        %2153 = vst [vmem:[%s511] sm:$0xff] %v2151
        %2154 = vst [vmem:[%s511 + $0x8] sm:$0xff] %v2152
        %s2155 = sand.u32 %s282, 1
        %s2156 = scalar_lea.sflag [#allocation8], %s2155
        %s2157 = sand.u32 %s282, 1
        %s2158 = smul.addr %s2157, 16
        %s2159 = scalar_lea.vmem [#allocation17], %s2158
        // Predicated region
        $region89: #{tpu_custom_call.1} parent=63 // pred_check
          %p2160 = pneg %p292
        $region90: #{tpu_custom_call.1} parent=63 // pred_check_branch
          %2162 = sbr.rel (%p2160) target = $region92
        $region91: #{tpu_custom_call.1} parent=63 // pred_region
          %s2163 = smul.u32 2, %s33
          %2165 = vsyncadd %s2156, 0
          %s2166 = smul.addr %s2163, 8
          %s2167 = scalar_lea.hbm %s11, %s2166
          %s2168 = sshll.u32 %s2159, 4
          %s2169 = int_to_ptr.vmem [resolvable:$true] %s2168
          %s2170 = sshll.u32 %s2167, 4
          %s2171 = int_to_ptr.hbm [resolvable:$true] %s2170
          %2176 = dma.vmem_to_hbm [thread:$0]  %s2169, 256, %s2171, %s2156, 128, 128, 8
        $region92: #{tpu_custom_call.1} parent=63 // pred_fallthru
          _
      $region64: #{tpu_custom_call.1} parent=5 // pred_fallthru
        _
      %p2177 = scmp.le.s32.totalorder 2, %s28
      // Predicated region
      $region93: #{tpu_custom_call.1} parent=5 // pred_check
        %p2178 = pneg %p2177
      $region94: #{tpu_custom_call.1} parent=5 // pred_check_branch
        %2180 = sbr.rel (%p2178) target = $region96
      $region95: #{tpu_custom_call.1} parent=5 // pred_region
        %s2181 = ssub.s32 %s28, 2
        // Predicated region
        $region97: #{tpu_custom_call.1} parent=95 // pred_check
          %p2182 = pneg %p298
        $region98: #{tpu_custom_call.1} parent=95 // pred_check_branch
          %2184 = sbr.rel (%p2182) target = $region100
        $region99: #{tpu_custom_call.1} parent=95 // pred_region
          %s2185 = sand.u32 %s283, 1
          %s2186 = scalar_lea.sflag [#allocation8], %s2185
          %s2187 = sand.u32 %s283, 1
          %s2188 = smul.addr %s2187, 16
          %s2189 = scalar_lea.vmem [#allocation17], %s2188
          %2191 = dma.done %s2186, 256
        $region100: #{tpu_custom_call.1} parent=95 // pred_fallthru
          _
      $region96: #{tpu_custom_call.1} parent=5 // pred_fallthru
        _
    $region6: #{tpu_custom_call.1} parent=1 // loop_footer
      %s32 = sadd.s32 1, %s28
    $region7: #{tpu_custom_call.1} parent=1 // loop_footer_branch
      %27 = sbr.rel target = $region3
    $region8: #{tpu_custom_call.1} parent=1 // loop_exit
      _
    %2192 = vsyncpa [#allocation7], 1
    %s2193 = scalar_lea.sflag [#allocation7], 1
    %2194 = vsyncpa %s2193, 1
    %2195 = vsyncpa [#allocation10], 1
    %s2196 = scalar_lea.sflag [#allocation10], 1
    %2197 = vsyncpa %s2196, 1
    %2198 = vsyncpa [#allocation13], 1
    %2199 = vsyncpa [#allocation16], 1
    %2200 = vsyncpa [#allocation8], 1
    %s2201 = scalar_lea.sflag [#allocation8], 1
    %2202 = vsyncpa %s2201, 1

// kernel: tpu_custom_call.1
$region0: #{tpu_custom_call.1}
  #allocation0 [shape = 'u32[]', space=smem, size = 0x4, offset = 0x4, fixed_abs, tag = 'smem constant byte address 0x4 - core index']
  #allocation1 [shape = 'u32[72,128]{1,0:T(1,128)}', space=vmem, size = 0x9000, scoped, tag = 'internal scratch']
  #allocation2 [shape = 'f32[16,128]{1,0:T(8,128)}', space=vmem, size = 0x2000, scoped, tag = 'scratch operand']
  #allocation3 [shape = 'f32[16,128]{1,0:T(8,128)}', space=vmem, size = 0x2000, scoped, tag = 'scratch operand']
  #allocation4 [shape = 'f32[8,128]{1,0:T(8,128)}', space=vmem, size = 0x1000, scoped, tag = 'scratch operand']
  #allocation5 [shape = 'f32[16,128]{1,0:T(8,128)}', space=vmem, size = 0x2000, scoped, tag = 'scratch operand']
  %s0 = inlined_call_operand.hbm [shape: f32[2,8,128], index: 0, kind: input, shape index: {}]
  %s1 = inlined_call_operand.hbm [shape: f32[32,128], index: 1, kind: input, shape index: {}]
  %s2 = inlined_call_operand.hbm [shape: bf16[128,256], index: 2, kind: input, shape index: {}]
  %s3 = inlined_call_operand.vmem [shape: f32[1,128], index: 3, kind: input, shape index: {}]
  %s4 = inlined_call_operand.vmem [shape: bf16[128,128], index: 4, kind: input, shape index: {}]
  %s5 = inlined_call_operand.vmem [shape: bf16[128,1], index: 5, kind: input, shape index: {}]
  %s6 = inlined_call_operand.hbm [shape: bf16[128,128], index: 6, kind: input, shape index: {}]
  %s7 = inlined_call_operand.hbm [shape: bf16[128,256], index: 7, kind: input, shape index: {}]
  %s8 = inlined_call_operand.vmem [shape: f32[1,256], index: 8, kind: input, shape index: {}]
  %s9 = inlined_call_operand.hbm [shape: bf16[128,256], index: 9, kind: input, shape index: {}]
  %s10 = inlined_call_operand.vmem [shape: f32[1,256], index: 10, kind: input, shape index: {}]
  %s11 = inlined_call_operand.hbm [shape: f32[32,128], index: 11, kind: output, shape index: {}]
  %s12 = sld [smem:[#allocation0]]
  $region101: #{tpu_custom_call.1} parent=0
    _
  %s14 = ssub.s32 1, %s12
  %s15 = scalar_select 0, %s14, %s12
  $region1: #{tpu_custom_call.1} parent=0
    #allocation6 [shape = 'u8[8192]{0}', space=vmem, size = 0x2000, scoped, tag = 'input window, operand 0']
    #allocation7 [shape = 's32[2]{0}', space=sflag, size = 0x8, scoped, tag = 'scoped memory for tpu_custom_call.1']
    #allocation8 [shape = 's32[2]{0}', space=sflag, size = 0x8, scoped, tag = 'scoped memory for tpu_custom_call.1']
    #allocation9 [shape = 'u8[16384]{0}', space=vmem, size = 0x4000, scoped, tag = 'input window, operand 1']
    #allocation10 [shape = 's32[2]{0}', space=sflag, size = 0x8, scoped, tag = 'scoped memory for tpu_custom_call.1']
    #allocation11 [shape = 'u8[65536]{0}', space=vmem, size = 0x10000, scoped, tag = 'input window, operand 2, single buffered']
    #allocation12 [shape = 'u8[32768]{0}', space=vmem, size = 0x8000, scoped, tag = 'input window, operand 6, single buffered']
    #allocation13 [shape = 's32[1]{0}', space=sflag, size = 0x4, scoped, tag = 'scoped memory for tpu_custom_call.1']
    #allocation14 [shape = 'u8[65536]{0}', space=vmem, size = 0x10000, scoped, tag = 'input window, operand 7, single buffered']
    #allocation15 [shape = 'u8[65536]{0}', space=vmem, size = 0x10000, scoped, tag = 'input window, operand 9, single buffered']
    #allocation16 [shape = 's32[1]{0}', space=sflag, size = 0x4, scoped, tag = 'scoped memory for tpu_custom_call.1']
    #allocation17 [shape = 'u8[16384]{0}', space=vmem, size = 0x4000, scoped, tag = 'output window, operand 0']
    %16 = vsyncpa [#allocation7], 0
    %s17 = scalar_lea.sflag [#allocation7], 1
    %18 = vsyncpa %s17, 0
    %19 = vsyncpa [#allocation10], 0
    %s20 = scalar_lea.sflag [#allocation10], 1
    %21 = vsyncpa %s20, 0
    %22 = vsyncpa [#allocation13], 0
    %23 = vsyncpa [#allocation16], 0
    %24 = vsyncpa [#allocation8], 0
    %s25 = scalar_lea.sflag [#allocation8], 1
    %26 = vsyncpa %s25, 0
    loop: start=0, step=1, limit=4
    $region2: #{tpu_custom_call.1} parent=1 // loop_pre_header
      _
    $region3: #{tpu_custom_call.1} parent=1 // loop_header
      %s28 = sphi 0, %s32
      %p29 = scmp.ge.s32.totalorder %s28, 4
      %s38 = sphi 0, %s40
      %s41 = sphi 0, %s38
      %s42 = sphi 0, %s41
      %s58 = sphi 0, %s42
      %s64 = sphi 0, %s66
      %s67 = sphi 0, %s64
      %s68 = sphi 0, %s67
      %s84 = sphi 0, %s68
      %s88 = sphi 0, %s88
      %s90 = sphi 0, %s88
      %s91 = sphi 0, %s90
      %s105 = sphi 0, %s91
      %s109 = sphi 0, %s109
      %s111 = sphi 0, %s109
      %s112 = sphi 0, %s111
      %s126 = sphi 0, %s112
      %s130 = sphi 0, %s130
      %s132 = sphi 0, %s130
      %s133 = sphi 0, %s132
      %s147 = sphi 0, %s133
      %s151 = sphi 0, %s151
      %s153 = sphi 0, %s151
      %s154 = sphi 0, %s153
      %s168 = sphi 0, %s154
      %s172 = sphi 0, %s172
      %s174 = sphi 0, %s172
      %s175 = sphi 0, %s174
      %s189 = sphi 0, %s175
      %s193 = sphi 0, %s193
      %s195 = sphi 0, %s193
      %s196 = sphi 0, %s195
      %s210 = sphi 0, %s196
      %s214 = sphi 0, %s214
      %s216 = sphi 0, %s214
      %s217 = sphi 0, %s216
      %s231 = sphi 0, %s217
      %s235 = sphi 0, %s235
      %s237 = sphi 0, %s235
      %s238 = sphi 0, %s237
      %s252 = sphi 0, %s238
      %s256 = sphi 0, %s256
      %s258 = sphi 0, %s256
      %s259 = sphi 0, %s258
      %s273 = sphi 0, %s259
      %s279 = sphi 0, %s281
      %s282 = sphi 0, %s279
      %s283 = sphi 0, %s282
      %s299 = sphi 0, %s283
    $region4: #{tpu_custom_call.1} parent=1 // loop_header_branch
      %31 = sbr.rel (%p29) target = $region8
    $region5: #{tpu_custom_call.1} parent=1 // loop_body
      %s33 = ssub.s32 %s28, 1
      %s34 = ssub.s32 %s28, 2
      %s35 = sadd.s32 %s28, 1
      %s36 = ssub.s32 %s28, %s35
      %p37 = scmp.eq.s32.totalorder %s36, 0
      %s39 = sadd.s32 %s38, 1
      %s40 = scalar_select %p37, %s38, %s39
      %p43 = pneg %p37
      %p44 = scmp.eq.s32.totalorder %s28, 1
      %p45 = por %p43, %p44
      %p46 = scmp.ne.s32.totalorder %s38, %s41
      %p47 = scmp.eq.s32.totalorder %s28, 0
      %p48 = por %p46, %p47
      %p49 = scmp.ne.s32.totalorder %s38, %s41
      %p50 = scmp.eq.s32.totalorder %s33, 1
      %p51 = por %p49, %p50
      %p52 = scmp.ne.s32.totalorder %s41, %s42
      %p53 = scmp.eq.s32.totalorder %s33, 0
      %p54 = por %p52, %p53
      %p55 = scmp.ne.s32.totalorder %s41, %s42
      %p56 = scmp.eq.s32.totalorder %s34, 1
      %p57 = por %p55, %p56
      %p59 = scmp.ne.s32.totalorder %s42, %s58
      %p60 = scmp.eq.s32.totalorder %s34, 0
      %p61 = por %p59, %p60
      %s62 = ssub.s32 %s28, %s35
      %p63 = scmp.eq.s32.totalorder %s62, 0
      %s65 = sadd.s32 %s64, 1
      %s66 = scalar_select %p63, %s64, %s65
      %p69 = pneg %p63
      %p70 = scmp.eq.s32.totalorder %s28, 1
      %p71 = por %p69, %p70
      %p72 = scmp.ne.s32.totalorder %s64, %s67
      %p73 = scmp.eq.s32.totalorder %s28, 0
      %p74 = por %p72, %p73
      %p75 = scmp.ne.s32.totalorder %s64, %s67
      %p76 = scmp.eq.s32.totalorder %s33, 1
      %p77 = por %p75, %p76
      %p78 = scmp.ne.s32.totalorder %s67, %s68
      %p79 = scmp.eq.s32.totalorder %s33, 0
      %p80 = por %p78, %p79
      %p81 = scmp.ne.s32.totalorder %s67, %s68
      %p82 = scmp.eq.s32.totalorder %s34, 1
      %p83 = por %p81, %p82
      %p85 = scmp.ne.s32.totalorder %s68, %s84
      %p86 = scmp.eq.s32.totalorder %s34, 0
      %p87 = por %p85, %p86
      %s89 = sadd.s32 %s88, 1
      %p92 = scmp.eq.s32.totalorder %s28, 1
      %p93 = scmp.ne.s32.totalorder %s88, %s90
      %p94 = scmp.eq.s32.totalorder %s28, 0
      %p95 = por %p93, %p94
      %p96 = scmp.ne.s32.totalorder %s88, %s90
      %p97 = scmp.eq.s32.totalorder %s33, 1
      %p98 = por %p96, %p97
      %p99 = scmp.ne.s32.totalorder %s90, %s91
      %p100 = scmp.eq.s32.totalorder %s33, 0
      %p101 = por %p99, %p100
      %p102 = scmp.ne.s32.totalorder %s90, %s91
      %p103 = scmp.eq.s32.totalorder %s34, 1
      %p104 = por %p102, %p103
      %p106 = scmp.ne.s32.totalorder %s91, %s105
      %p107 = scmp.eq.s32.totalorder %s34, 0
      %p108 = por %p106, %p107
      %s110 = sadd.s32 %s109, 1
      %p113 = scmp.eq.s32.totalorder %s28, 1
      %p114 = scmp.ne.s32.totalorder %s109, %s111
      %p115 = scmp.eq.s32.totalorder %s28, 0
      %p116 = por %p114, %p115
      %p117 = scmp.ne.s32.totalorder %s109, %s111
      %p118 = scmp.eq.s32.totalorder %s33, 1
      %p119 = por %p117, %p118
      %p120 = scmp.ne.s32.totalorder %s111, %s112
      %p121 = scmp.eq.s32.totalorder %s33, 0
      %p122 = por %p120, %p121
      %p123 = scmp.ne.s32.totalorder %s111, %s112
      %p124 = scmp.eq.s32.totalorder %s34, 1
      %p125 = por %p123, %p124
      %p127 = scmp.ne.s32.totalorder %s112, %s126
      %p128 = scmp.eq.s32.totalorder %s34, 0
      %p129 = por %p127, %p128
      %s131 = sadd.s32 %s130, 1
      %p134 = scmp.eq.s32.totalorder %s28, 1
      %p135 = scmp.ne.s32.totalorder %s130, %s132
      %p136 = scmp.eq.s32.totalorder %s28, 0
      %p137 = por %p135, %p136
      %p138 = scmp.ne.s32.totalorder %s130, %s132
      %p139 = scmp.eq.s32.totalorder %s33, 1
      %p140 = por %p138, %p139
      %p141 = scmp.ne.s32.totalorder %s132, %s133
      %p142 = scmp.eq.s32.totalorder %s33, 0
      %p143 = por %p141, %p142
      %p144 = scmp.ne.s32.totalorder %s132, %s133
      %p145 = scmp.eq.s32.totalorder %s34, 1
      %p146 = por %p144, %p145
      %p148 = scmp.ne.s32.totalorder %s133, %s147
      %p149 = scmp.eq.s32.totalorder %s34, 0
      %p150 = por %p148, %p149
      %s152 = sadd.s32 %s151, 1
      %p155 = scmp.eq.s32.totalorder %s28, 1
      %p156 = scmp.ne.s32.totalorder %s151, %s153
      %p157 = scmp.eq.s32.totalorder %s28, 0
      %p158 = por %p156, %p157
      %p159 = scmp.ne.s32.totalorder %s151, %s153
      %p160 = scmp.eq.s32.totalorder %s33, 1
      %p161 = por %p159, %p160
      %p162 = scmp.ne.s32.totalorder %s153, %s154
      %p163 = scmp.eq.s32.totalorder %s33, 0
      %p164 = por %p162, %p163
      %p165 = scmp.ne.s32.totalorder %s153, %s154
      %p166 = scmp.eq.s32.totalorder %s34, 1
      %p167 = por %p165, %p166
      %p169 = scmp.ne.s32.totalorder %s154, %s168
      %p170 = scmp.eq.s32.totalorder %s34, 0
      %p171 = por %p169, %p170
      %s173 = sadd.s32 %s172, 1
      %p176 = scmp.eq.s32.totalorder %s28, 1
      %p177 = scmp.ne.s32.totalorder %s172, %s174
      %p178 = scmp.eq.s32.totalorder %s28, 0
      %p179 = por %p177, %p178
      %p180 = scmp.ne.s32.totalorder %s172, %s174
      %p181 = scmp.eq.s32.totalorder %s33, 1
      %p182 = por %p180, %p181
      %p183 = scmp.ne.s32.totalorder %s174, %s175
      %p184 = scmp.eq.s32.totalorder %s33, 0
      %p185 = por %p183, %p184
      %p186 = scmp.ne.s32.totalorder %s174, %s175
      %p187 = scmp.eq.s32.totalorder %s34, 1
      %p188 = por %p186, %p187
      %p190 = scmp.ne.s32.totalorder %s175, %s189
      %p191 = scmp.eq.s32.totalorder %s34, 0
      %p192 = por %p190, %p191
      %s194 = sadd.s32 %s193, 1
      %p197 = scmp.eq.s32.totalorder %s28, 1
      %p198 = scmp.ne.s32.totalorder %s193, %s195
      %p199 = scmp.eq.s32.totalorder %s28, 0
      %p200 = por %p198, %p199
      %p201 = scmp.ne.s32.totalorder %s193, %s195
      %p202 = scmp.eq.s32.totalorder %s33, 1
      %p203 = por %p201, %p202
      %p204 = scmp.ne.s32.totalorder %s195, %s196
      %p205 = scmp.eq.s32.totalorder %s33, 0
      %p206 = por %p204, %p205
      %p207 = scmp.ne.s32.totalorder %s195, %s196
      %p208 = scmp.eq.s32.totalorder %s34, 1
      %p209 = por %p207, %p208
      %p211 = scmp.ne.s32.totalorder %s196, %s210
      %p212 = scmp.eq.s32.totalorder %s34, 0
      %p213 = por %p211, %p212
      %s215 = sadd.s32 %s214, 1
      %p218 = scmp.eq.s32.totalorder %s28, 1
      %p219 = scmp.ne.s32.totalorder %s214, %s216
      %p220 = scmp.eq.s32.totalorder %s28, 0
      %p221 = por %p219, %p220
      %p222 = scmp.ne.s32.totalorder %s214, %s216
      %p223 = scmp.eq.s32.totalorder %s33, 1
      %p224 = por %p222, %p223
      %p225 = scmp.ne.s32.totalorder %s216, %s217
      %p226 = scmp.eq.s32.totalorder %s33, 0
      %p227 = por %p225, %p226
      %p228 = scmp.ne.s32.totalorder %s216, %s217
      %p229 = scmp.eq.s32.totalorder %s34, 1
      %p230 = por %p228, %p229
      %p232 = scmp.ne.s32.totalorder %s217, %s231
      %p233 = scmp.eq.s32.totalorder %s34, 0
      %p234 = por %p232, %p233
      %s236 = sadd.s32 %s235, 1
      %p239 = scmp.eq.s32.totalorder %s28, 1
      %p240 = scmp.ne.s32.totalorder %s235, %s237
      %p241 = scmp.eq.s32.totalorder %s28, 0
      %p242 = por %p240, %p241
      %p243 = scmp.ne.s32.totalorder %s235, %s237
      %p244 = scmp.eq.s32.totalorder %s33, 1
      %p245 = por %p243, %p244
      %p246 = scmp.ne.s32.totalorder %s237, %s238
      %p247 = scmp.eq.s32.totalorder %s33, 0
      %p248 = por %p246, %p247
      %p249 = scmp.ne.s32.totalorder %s237, %s238
      %p250 = scmp.eq.s32.totalorder %s34, 1
      %p251 = por %p249, %p250
      %p253 = scmp.ne.s32.totalorder %s238, %s252
      %p254 = scmp.eq.s32.totalorder %s34, 0
      %p255 = por %p253, %p254
      %s257 = sadd.s32 %s256, 1
      %p260 = scmp.eq.s32.totalorder %s28, 1
      %p261 = scmp.ne.s32.totalorder %s256, %s258
      %p262 = scmp.eq.s32.totalorder %s28, 0
      %p263 = por %p261, %p262
      %p264 = scmp.ne.s32.totalorder %s256, %s258
      %p265 = scmp.eq.s32.totalorder %s33, 1
      %p266 = por %p264, %p265
      %p267 = scmp.ne.s32.totalorder %s258, %s259
      %p268 = scmp.eq.s32.totalorder %s33, 0
      %p269 = por %p267, %p268
      %p270 = scmp.ne.s32.totalorder %s258, %s259
      %p271 = scmp.eq.s32.totalorder %s34, 1
      %p272 = por %p270, %p271
      %p274 = scmp.ne.s32.totalorder %s259, %s273
      %p275 = scmp.eq.s32.totalorder %s34, 0
      %p276 = por %p274, %p275
      %s277 = ssub.s32 %s28, %s35
      %p278 = scmp.eq.s32.totalorder %s277, 0
      %s280 = sadd.s32 %s279, 1
      %s281 = scalar_select %p278, %s279, %s280
      %p284 = pneg %p278
      %p285 = scmp.eq.s32.totalorder %s28, 1
      %p286 = por %p284, %p285
      %p287 = scmp.ne.s32.totalorder %s279, %s282
      %p288 = scmp.eq.s32.totalorder %s28, 0
      %p289 = por %p287, %p288
      %p290 = scmp.ne.s32.totalorder %s279, %s282
      %p291 = scmp.eq.s32.totalorder %s33, 1
      %p292 = por %p290, %p291
      %p293 = scmp.ne.s32.totalorder %s282, %s283
      %p294 = scmp.eq.s32.totalorder %s33, 0
      %p295 = por %p293, %p294
      %p296 = scmp.ne.s32.totalorder %s282, %s283
      %p297 = scmp.eq.s32.totalorder %s34, 1
      %p298 = por %p296, %p297
      %p300 = scmp.ne.s32.totalorder %s283, %s299
      %p301 = scmp.eq.s32.totalorder %s34, 0
      %p302 = por %p300, %p301
      %p303 = scmp.le.s32.totalorder 1, %s28
      %p304 = scmp.lt.s32.totalorder %s28, 3
      %p305 = pnand %p303, %p304
      %p306 = pneg %p305
      // Predicated region
      $region9: #{tpu_custom_call.1} parent=5 // pred_check
        _
      $region10: #{tpu_custom_call.1} parent=5 // pred_check_branch
        %308 = sbr.rel (%p305) target = $region12
      $region11: #{tpu_custom_call.1} parent=5 // pred_region
        %s309 = ssub.s32 %s28, 1
        // Predicated region
        $region13: #{tpu_custom_call.1} parent=11 // pred_check
          %p310 = pneg %p101
        $region14: #{tpu_custom_call.1} parent=11 // pred_check_branch
          %312 = sbr.rel (%p310) target = $region16
        $region15: #{tpu_custom_call.1} parent=11 // pred_region
          %314 = vsyncadd [#allocation10], 0
          %s315 = sshll.u32 %s2, 4
          %s316 = int_to_ptr.hbm [resolvable:$true] %s315
          %s317 = sshll.u32 [#allocation11], 4
          %s318 = int_to_ptr.vmem [resolvable:$true] %s317
          %323 = dma.hbm_to_vmem [thread:$0]  %s316, 2048, %s318, [#allocation10], 128, 128, 8
        $region16: #{tpu_custom_call.1} parent=11 // pred_fallthru
          _
        // Predicated region
        $region17: #{tpu_custom_call.1} parent=11 // pred_check
          %p324 = pneg %p122
        $region18: #{tpu_custom_call.1} parent=11 // pred_check_branch
          %326 = sbr.rel (%p324) target = $region20
        $region19: #{tpu_custom_call.1} parent=11 // pred_region
          _
        $region20: #{tpu_custom_call.1} parent=11 // pred_fallthru
          _
        // Predicated region
        $region21: #{tpu_custom_call.1} parent=11 // pred_check
          %p327 = pneg %p143
        $region22: #{tpu_custom_call.1} parent=11 // pred_check_branch
          %329 = sbr.rel (%p327) target = $region24
        $region23: #{tpu_custom_call.1} parent=11 // pred_region
          _
        $region24: #{tpu_custom_call.1} parent=11 // pred_fallthru
          _
        // Predicated region
        $region25: #{tpu_custom_call.1} parent=11 // pred_check
          %p330 = pneg %p164
        $region26: #{tpu_custom_call.1} parent=11 // pred_check_branch
          %332 = sbr.rel (%p330) target = $region28
        $region27: #{tpu_custom_call.1} parent=11 // pred_region
          _
        $region28: #{tpu_custom_call.1} parent=11 // pred_fallthru
          _
        // Predicated region
        $region29: #{tpu_custom_call.1} parent=11 // pred_check
          %p333 = pneg %p185
        $region30: #{tpu_custom_call.1} parent=11 // pred_check_branch
          %335 = sbr.rel (%p333) target = $region32
        $region31: #{tpu_custom_call.1} parent=11 // pred_region
          %337 = vsyncadd [#allocation13], 0
          %s338 = sshll.u32 %s6, 4
          %s339 = int_to_ptr.hbm [resolvable:$true] %s338
          %s340 = sshll.u32 [#allocation12], 4
          %s341 = int_to_ptr.vmem [resolvable:$true] %s340
          %346 = dma.hbm_to_vmem [thread:$0]  %s339, 1024, %s341, [#allocation13], 64, 64, 4
        $region32: #{tpu_custom_call.1} parent=11 // pred_fallthru
          _
        // Predicated region
        $region33: #{tpu_custom_call.1} parent=11 // pred_check
          %p347 = pneg %p206
        $region34: #{tpu_custom_call.1} parent=11 // pred_check_branch
          %349 = sbr.rel (%p347) target = $region36
        $region35: #{tpu_custom_call.1} parent=11 // pred_region
          %351 = vsyncadd [#allocation13], 0
          %s352 = sshll.u32 %s7, 4
          %s353 = int_to_ptr.hbm [resolvable:$true] %s352
          %s354 = sshll.u32 [#allocation14], 4
          %s355 = int_to_ptr.vmem [resolvable:$true] %s354
          %360 = dma.hbm_to_vmem [thread:$0]  %s353, 2048, %s355, [#allocation13], 128, 128, 8
        $region36: #{tpu_custom_call.1} parent=11 // pred_fallthru
          _
        // Predicated region
        $region37: #{tpu_custom_call.1} parent=11 // pred_check
          %p361 = pneg %p227
        $region38: #{tpu_custom_call.1} parent=11 // pred_check_branch
          %363 = sbr.rel (%p361) target = $region40
        $region39: #{tpu_custom_call.1} parent=11 // pred_region
          _
        $region40: #{tpu_custom_call.1} parent=11 // pred_fallthru
          _
        // Predicated region
        $region41: #{tpu_custom_call.1} parent=11 // pred_check
          %p364 = pneg %p248
        $region42: #{tpu_custom_call.1} parent=11 // pred_check_branch
          %366 = sbr.rel (%p364) target = $region44
        $region43: #{tpu_custom_call.1} parent=11 // pred_region
          %368 = vsyncadd [#allocation16], 0
          %s369 = sshll.u32 %s9, 4
          %s370 = int_to_ptr.hbm [resolvable:$true] %s369
          %s371 = sshll.u32 [#allocation15], 4
          %s372 = int_to_ptr.vmem [resolvable:$true] %s371
          %377 = dma.hbm_to_vmem [thread:$0]  %s370, 2048, %s372, [#allocation16], 128, 128, 8
        $region44: #{tpu_custom_call.1} parent=11 // pred_fallthru
          _
        // Predicated region
        $region45: #{tpu_custom_call.1} parent=11 // pred_check
          %p378 = pneg %p269
        $region46: #{tpu_custom_call.1} parent=11 // pred_check_branch
          %380 = sbr.rel (%p378) target = $region48
        $region47: #{tpu_custom_call.1} parent=11 // pred_region
          _
        $region48: #{tpu_custom_call.1} parent=11 // pred_fallthru
          _
      $region12: #{tpu_custom_call.1} parent=5 // pred_fallthru
        _
      %p381 = scmp.lt.s32.totalorder %s28, 2
      // Predicated region
      $region49: #{tpu_custom_call.1} parent=5 // pred_check
        %p382 = pneg %p381
      $region50: #{tpu_custom_call.1} parent=5 // pred_check_branch
        %384 = sbr.rel (%p382) target = $region52
      $region51: #{tpu_custom_call.1} parent=5 // pred_region
        // Predicated region
        $region53: #{tpu_custom_call.1} parent=51 // pred_check
          %p385 = pneg %p48
        $region54: #{tpu_custom_call.1} parent=51 // pred_check_branch
          %387 = sbr.rel (%p385) target = $region56
        $region55: #{tpu_custom_call.1} parent=51 // pred_region
          %s388 = sand.u32 %s38, 1
          %s389 = scalar_lea.sflag [#allocation7], %s388
          %s390 = sand.u32 %s38, 1
          %s391 = smul.addr %s390, 8
          %s392 = scalar_lea.vmem [#allocation6], %s391
          %394 = vsyncadd %s389, 0
          %s395 = smul.addr %s28, 8
          %s396 = scalar_lea.hbm %s0, %s395
          %s398 = sshll.u32 %s396, 4
          %s399 = int_to_ptr.hbm [resolvable:$true] %s398
          %s400 = sshll.u32 %s392, 4
          %s401 = int_to_ptr.vmem [resolvable:$true] %s400
          %403 = dma.hbm_to_vmem [thread:$0]  %s399, 128, %s401, %s389
        $region56: #{tpu_custom_call.1} parent=51 // pred_fallthru
          _
        // Predicated region
        $region57: #{tpu_custom_call.1} parent=51 // pred_check
          %p404 = pneg %p74
        $region58: #{tpu_custom_call.1} parent=51 // pred_check_branch
          %406 = sbr.rel (%p404) target = $region60
        $region59: #{tpu_custom_call.1} parent=51 // pred_region
          %s407 = sand.u32 %s28, 1
          %s408 = scalar_lea.sflag [#allocation10], %s407
          %s409 = sand.u32 %s64, 1
          %s410 = smul.addr %s409, 16
          %s411 = scalar_lea.vmem [#allocation9], %s410
          %s412 = smul.u32 2, %s28
          %414 = vsyncadd %s408, 0
          %s415 = smul.addr %s412, 8
          %s416 = scalar_lea.hbm %s1, %s415
          %s417 = sshll.u32 %s416, 4
          %s418 = int_to_ptr.hbm [resolvable:$true] %s417
          %s419 = sshll.u32 %s411, 4
          %s420 = int_to_ptr.vmem [resolvable:$true] %s419
          %425 = dma.hbm_to_vmem [thread:$0]  %s418, 256, %s420, %s408, 128, 128, 8
        $region60: #{tpu_custom_call.1} parent=51 // pred_fallthru
          _
      $region52: #{tpu_custom_call.1} parent=5 // pred_fallthru
        _
      %p426 = scmp.le.s32.totalorder 1, %s28
      %p427 = scmp.lt.s32.totalorder %s28, 3
      %p428 = pnand %p426, %p427
      %p429 = pneg %p428
      // Predicated region
      $region61: #{tpu_custom_call.1} parent=5 // pred_check
        _
      $region62: #{tpu_custom_call.1} parent=5 // pred_check_branch
        %431 = sbr.rel (%p428) target = $region64
      $region63: #{tpu_custom_call.1} parent=5 // pred_region
        %s432 = ssub.s32 %s28, 1
        %s433 = sand.u32 %s41, 1
        %s434 = scalar_lea.sflag [#allocation7], %s433
        %s435 = sand.u32 %s41, 1
        %s436 = smul.addr %s435, 8
        %s437 = scalar_lea.vmem [#allocation6], %s436
        // Predicated region
        $region65: #{tpu_custom_call.1} parent=63 // pred_check
          %p438 = pneg %p54
        $region66: #{tpu_custom_call.1} parent=63 // pred_check_branch
          %440 = sbr.rel (%p438) target = $region68
        $region67: #{tpu_custom_call.1} parent=63 // pred_region
          %442 = dma.done %s434, 128
        $region68: #{tpu_custom_call.1} parent=63 // pred_fallthru
          _
        %s443 = sand.u32 %s33, 1
        %s444 = scalar_lea.sflag [#allocation10], %s443
        %s445 = sand.u32 %s67, 1
        %s446 = smul.addr %s445, 16
        %s447 = scalar_lea.vmem [#allocation9], %s446
        // Predicated region
        $region69: #{tpu_custom_call.1} parent=63 // pred_check
          %p448 = pneg %p80
        $region70: #{tpu_custom_call.1} parent=63 // pred_check_branch
          %450 = sbr.rel (%p448) target = $region72
        $region71: #{tpu_custom_call.1} parent=63 // pred_region
          %452 = dma.done %s444, 256
        $region72: #{tpu_custom_call.1} parent=63 // pred_fallthru
          _
        // Predicated region
        $region73: #{tpu_custom_call.1} parent=63 // pred_check
          %p453 = pneg %p101
        $region74: #{tpu_custom_call.1} parent=63 // pred_check_branch
          %455 = sbr.rel (%p453) target = $region76
        $region75: #{tpu_custom_call.1} parent=63 // pred_region
          %457 = dma.done [#allocation10], 2048
        $region76: #{tpu_custom_call.1} parent=63 // pred_fallthru
          _
        // Predicated region
        $region77: #{tpu_custom_call.1} parent=63 // pred_check
          %p458 = pneg %p185
        $region78: #{tpu_custom_call.1} parent=63 // pred_check_branch
          %460 = sbr.rel (%p458) target = $region80
        $region79: #{tpu_custom_call.1} parent=63 // pred_region
          %462 = dma.done [#allocation13], 1024
        $region80: #{tpu_custom_call.1} parent=63 // pred_fallthru
          _
        // Predicated region
        $region81: #{tpu_custom_call.1} parent=63 // pred_check
          %p463 = pneg %p206
        $region82: #{tpu_custom_call.1} parent=63 // pred_check_branch
          %465 = sbr.rel (%p463) target = $region84
        $region83: #{tpu_custom_call.1} parent=63 // pred_region
          %467 = dma.done [#allocation13], 2048
        $region84: #{tpu_custom_call.1} parent=63 // pred_fallthru
          _
        // Predicated region
        $region85: #{tpu_custom_call.1} parent=63 // pred_check
          %p468 = pneg %p248
        $region86: #{tpu_custom_call.1} parent=63 // pred_check_branch
          %470 = sbr.rel (%p468) target = $region88
        $region87: #{tpu_custom_call.1} parent=63 // pred_region
          %472 = dma.done [#allocation16], 2048
        $region88: #{tpu_custom_call.1} parent=63 // pred_fallthru
          _
        %s473 = sand.u32 %s41, 1
        %s474 = scalar_lea.sflag [#allocation7], %s473
        %s475 = sand.u32 %s41, 1
        %s476 = smul.addr %s475, 8
        %s477 = scalar_lea.vmem [#allocation6], %s476
        %p478 = pneg %p54
        %p479 = pneg %p51
        %s480 = sand.u32 %s33, 1
        %s481 = scalar_lea.sflag [#allocation10], %s480
        %s482 = sand.u32 %s67, 1
        %s483 = smul.addr %s482, 16
        %s484 = scalar_lea.vmem [#allocation9], %s483
        %p485 = pneg %p80
        %p486 = pneg %p77
        %p487 = pneg %p101
        %p488 = pneg %p98
        %p489 = pneg %p122
        %p490 = pneg %p119
        %p491 = pneg %p143
        %p492 = pneg %p140
        %p493 = pneg %p164
        %p494 = pneg %p161
        %p495 = pneg %p185
        %p496 = pneg %p182
        %p497 = pneg %p206
        %p498 = pneg %p203
        %p499 = pneg %p227
        %p500 = pneg %p224
        %p501 = pneg %p248
        %p502 = pneg %p245
        %p503 = pneg %p269
        %p504 = pneg %p266
        %p505 = pneg %p295
        %p506 = pneg %p292
        %s507 = sand.u32 %s282, 1
        %s508 = scalar_lea.sflag [#allocation8], %s507
        %s509 = sand.u32 %s282, 1
        %s510 = smul.addr %s509, 16
        %s511 = scalar_lea.vmem [#allocation17], %s510
        %s512 = smul.u32 2, %s33
        %s513 = smul.u32 2, %s33
        %v515 = vld [vmem:[%s447] sm:$0xff]
        %v516 = vld [vmem:[%s447 + $0x8] sm:$0xff]
        %v517 = vpack.c.bf16 %v516, %v515
        %v518 = vld [vmem:[#allocation11] sm:$0xff]
        %v519 = vld [vmem:[#allocation11 + $0x8] sm:$0xff]
        %v520 = vld [vmem:[#allocation11 + $0x10] sm:$0xff]
        %v521 = vld [vmem:[#allocation11 + $0x18] sm:$0xff]
        %v522 = vld [vmem:[#allocation11 + $0x20] sm:$0xff]
        %v523 = vld [vmem:[#allocation11 + $0x28] sm:$0xff]
        %v524 = vld [vmem:[#allocation11 + $0x30] sm:$0xff]
        %v525 = vld [vmem:[#allocation11 + $0x38] sm:$0xff]
        %v526 = vld [vmem:[#allocation11 + $0x40] sm:$0xff]
        %v527 = vld [vmem:[#allocation11 + $0x48] sm:$0xff]
        %v528 = vld [vmem:[#allocation11 + $0x50] sm:$0xff]
        %v529 = vld [vmem:[#allocation11 + $0x58] sm:$0xff]
        %v530 = vld [vmem:[#allocation11 + $0x60] sm:$0xff]
        %v531 = vld [vmem:[#allocation11 + $0x68] sm:$0xff]
        %v532 = vld [vmem:[#allocation11 + $0x70] sm:$0xff]
        %v533 = vld [vmem:[#allocation11 + $0x78] sm:$0xff]
        %v550 = vunpack.c.l.b16 %v518
        %v551 = vunpack.c.h.b16 %v518
        %v552 = vunpack.c.l.b16 %v519
        %v553 = vunpack.c.h.b16 %v519
        %v554 = vunpack.c.l.b16 %v520
        %v555 = vunpack.c.h.b16 %v520
        %v556 = vunpack.c.l.b16 %v521
        %v557 = vunpack.c.h.b16 %v521
        %v558 = vunpack.c.l.b16 %v522
        %v559 = vunpack.c.h.b16 %v522
        %v560 = vunpack.c.l.b16 %v523
        %v561 = vunpack.c.h.b16 %v523
        %v562 = vunpack.c.l.b16 %v524
        %v563 = vunpack.c.h.b16 %v524
        %v564 = vunpack.c.l.b16 %v525
        %v565 = vunpack.c.h.b16 %v525
        %v566 = vunpack.c.l.b16 %v526
        %v567 = vunpack.c.h.b16 %v526
        %v568 = vunpack.c.l.b16 %v527
        %v569 = vunpack.c.h.b16 %v527
        %v570 = vunpack.c.l.b16 %v528
        %v571 = vunpack.c.h.b16 %v528
        %v572 = vunpack.c.l.b16 %v529
        %v573 = vunpack.c.h.b16 %v529
        %v574 = vunpack.c.l.b16 %v530
        %v575 = vunpack.c.h.b16 %v530
        %v576 = vunpack.c.l.b16 %v531
        %v577 = vunpack.c.h.b16 %v531
        %v578 = vunpack.c.l.b16 %v532
        %v579 = vunpack.c.h.b16 %v532
        %v580 = vunpack.c.l.b16 %v533
        %v581 = vunpack.c.h.b16 %v533
        %v582 = vpack.c.b16 %v552, %v550
        %v583 = vpack.c.b16 %v553, %v551
        %v584 = vpack.c.b16 %v556, %v554
        %v585 = vpack.c.b16 %v557, %v555
        %v586 = vpack.c.b16 %v560, %v558
        %v587 = vpack.c.b16 %v561, %v559
        %v588 = vpack.c.b16 %v564, %v562
        %v589 = vpack.c.b16 %v565, %v563
        %v590 = vpack.c.b16 %v568, %v566
        %v591 = vpack.c.b16 %v569, %v567
        %v592 = vpack.c.b16 %v572, %v570
        %v593 = vpack.c.b16 %v573, %v571
        %v594 = vpack.c.b16 %v576, %v574
        %v595 = vpack.c.b16 %v577, %v575
        %v596 = vpack.c.b16 %v580, %v578
        %v597 = vpack.c.b16 %v581, %v579
        %614 = vmatpush.bf16.msra.mxu0 %v596
        %615 = vmatpush.bf16.msra.mxu0 %v594
        %616 = vmatpush.bf16.msra.mxu0 %v592
        %617 = vmatpush.bf16.msra.mxu0 %v590
        %618 = vmatpush.bf16.msra.mxu0 %v588
        %619 = vmatpush.bf16.msra.mxu0 %v586
        %620 = vmatpush.bf16.msra.mxu0 %v584
        %621 = vmatpush.bf16.msra.mxu0 %v582
        %622 = vmatmul.bf16.gmra.mxu0 %v517
        %v623 = vpop.f32.mrf.mxu0
        %v624 = vadd.f32 0.0, %v623
        %v625 = vpop.f32.mrf.mxu0
        %v626 = vadd.f32 0.0, %v625
        %627 = vdwg.mxu0
        %628 = vmatpush.bf16.msra.mxu0 %v597
        %629 = vmatpush.bf16.msra.mxu0 %v595
        %630 = vmatpush.bf16.msra.mxu0 %v593
        %631 = vmatpush.bf16.msra.mxu0 %v591
        %632 = vmatpush.bf16.msra.mxu0 %v589
        %633 = vmatpush.bf16.msra.mxu0 %v587
        %634 = vmatpush.bf16.msra.mxu0 %v585
        %635 = vmatpush.bf16.msra.mxu0 %v583
        %636 = vmatmul.bf16.gmra.mxu0 %v517
        %v637 = vpop.f32.mrf.mxu0
        %v638 = vadd.f32 0.0, %v637
        %v639 = vpop.f32.mrf.mxu0
        %v640 = vadd.f32 0.0, %v639
        %641 = vdwg.mxu0
        %v642 = vld [vmem:[%s3] sm:$0x1]
        %v644 = vperm.slane %v642, 0
        %v646 = vadd.f32 %v624, %v644
        %v647 = vadd.f32 %v626, %v644
        %648 = vst [vmem:[#allocation2] sm:$0xff] %v646
        %649 = vst [vmem:[#allocation2 + $0x8] sm:$0xff] %v647
        %650 = vst [vmem:[#allocation3] sm:$0xff] %v638
        %651 = vst [vmem:[#allocation3 + $0x8] sm:$0xff] %v640
        %v652 = vld [vmem:[%s437] sm:$0xff]
        %v653 = vpack.c.bf16 %v652, %v652
        %v654 = vld [vmem:[%s4] sm:$0xf]
        %v655 = vld [vmem:[%s4 + $0x4] sm:$0xf]
        %v656 = vld [vmem:[%s4 + $0x8] sm:$0xf]
        %v657 = vld [vmem:[%s4 + $0xc] sm:$0xf]
        %v658 = vld [vmem:[%s4 + $0x10] sm:$0xf]
        %v659 = vld [vmem:[%s4 + $0x14] sm:$0xf]
        %v660 = vld [vmem:[%s4 + $0x18] sm:$0xf]
        %v661 = vld [vmem:[%s4 + $0x1c] sm:$0xf]
        %v662 = vld [vmem:[%s4 + $0x20] sm:$0xf]
        %v663 = vld [vmem:[%s4 + $0x24] sm:$0xf]
        %v664 = vld [vmem:[%s4 + $0x28] sm:$0xf]
        %v665 = vld [vmem:[%s4 + $0x2c] sm:$0xf]
        %v666 = vld [vmem:[%s4 + $0x30] sm:$0xf]
        %v667 = vld [vmem:[%s4 + $0x34] sm:$0xf]
        %v668 = vld [vmem:[%s4 + $0x38] sm:$0xf]
        %v669 = vld [vmem:[%s4 + $0x3c] sm:$0xf]
        %v686 = vunpack.c.l.b16 %v654
        %v687 = vunpack.c.l.b16 %v655
        %v688 = vunpack.c.l.b16 %v656
        %v689 = vunpack.c.l.b16 %v657
        %v690 = vunpack.c.l.b16 %v658
        %v691 = vunpack.c.l.b16 %v659
        %v692 = vunpack.c.l.b16 %v660
        %v693 = vunpack.c.l.b16 %v661
        %v694 = vunpack.c.l.b16 %v662
        %v695 = vunpack.c.l.b16 %v663
        %v696 = vunpack.c.l.b16 %v664
        %v697 = vunpack.c.l.b16 %v665
        %v698 = vunpack.c.l.b16 %v666
        %v699 = vunpack.c.l.b16 %v667
        %v700 = vunpack.c.l.b16 %v668
        %v701 = vunpack.c.l.b16 %v669
        %v702 = vpack.c.b16 %v687, %v686
        %v703 = vpack.c.b16 %v689, %v688
        %v704 = vpack.c.b16 %v691, %v690
        %v705 = vpack.c.b16 %v693, %v692
        %v706 = vpack.c.b16 %v695, %v694
        %v707 = vpack.c.b16 %v697, %v696
        %v708 = vpack.c.b16 %v699, %v698
        %v709 = vpack.c.b16 %v701, %v700
        %718 = vmatpush.bf16.msra.mxu0 %v709
        %719 = vmatpush.bf16.msra.mxu0 %v708
        %720 = vmatpush.bf16.msra.mxu0 %v707
        %721 = vmatpush.bf16.msra.mxu0 %v706
        %722 = vmatpush.bf16.msra.mxu0 %v705
        %723 = vmatpush.bf16.msra.mxu0 %v704
        %724 = vmatpush.bf16.msra.mxu0 %v703
        %725 = vmatpush.bf16.msra.mxu0 %v702
        %726 = vmatmul.bf16.gmra.mxu0 %v653
        %v727 = vpop.f32.mrf.mxu0
        %v728 = vadd.f32 0.0, %v727
        %v729 = vpop.f32.mrf.mxu0
        %730 = vdwg.mxu0
        %731 = vst [vmem:[#allocation4] sm:$0xff] %v728
        %v732 = vld [vmem:[#allocation2] sm:$0xff]
        %v733 = vld [vmem:[#allocation2 + $0x8] sm:$0xff]
        %v734 = vld [vmem:[#allocation4] sm:$0xff]
        %v737 = vrot.slane %v732, 1
        %v738 = vrot.slane %v732, 2
        %v739 = vrot.slane %v732, 3
        %v740 = vrot.slane %v732, 4
        %v741 = vrot.slane %v732, 5
        %v742 = vrot.slane %v732, 6
        %v743 = vrot.slane %v732, 7
        %v744 = vrot.slane %v733, 1
        %v745 = vrot.slane %v733, 2
        %v746 = vrot.slane %v733, 3
        %v747 = vrot.slane %v733, 4
        %v748 = vrot.slane %v733, 5
        %v749 = vrot.slane %v733, 6
        %v750 = vrot.slane %v733, 7
        %v751 = vperm.slane %v732, 0
        %v752 = vperm.slane %v737, 0
        %v753 = vperm.slane %v738, 0
        %v754 = vperm.slane %v739, 0
        %v755 = vperm.slane %v740, 0
        %v756 = vperm.slane %v741, 0
        %v757 = vperm.slane %v742, 0
        %v758 = vperm.slane %v743, 0
        %v759 = vperm.slane %v733, 0
        %v760 = vperm.slane %v744, 0
        %v761 = vperm.slane %v745, 0
        %v762 = vperm.slane %v746, 0
        %v763 = vperm.slane %v747, 0
        %v764 = vperm.slane %v748, 0
        %v765 = vperm.slane %v749, 0
        %v766 = vperm.slane %v750, 0
        %v783 = vadd.f32 %v751, %v734
        %v784 = vadd.f32 %v752, %v734
        %v785 = vadd.f32 %v753, %v734
        %v786 = vadd.f32 %v754, %v734
        %v787 = vadd.f32 %v755, %v734
        %v788 = vadd.f32 %v756, %v734
        %v789 = vadd.f32 %v757, %v734
        %v790 = vadd.f32 %v758, %v734
        %v791 = vadd.f32 %v759, %v734
        %v792 = vadd.f32 %v760, %v734
        %v793 = vadd.f32 %v761, %v734
        %v794 = vadd.f32 %v762, %v734
        %v795 = vadd.f32 %v763, %v734
        %v796 = vadd.f32 %v764, %v734
        %v797 = vadd.f32 %v765, %v734
        %v798 = vadd.f32 %v766, %v734
        %v799 = vtanh.pop %v783
        %v800 = vtanh.pop %v784
        %v801 = vtanh.pop %v785
        %v802 = vtanh.pop %v786
        %v803 = vtanh.pop %v787
        %v804 = vtanh.pop %v788
        %v805 = vtanh.pop %v789
        %v806 = vtanh.pop %v790
        %v807 = vtanh.pop %v791
        %v808 = vtanh.pop %v792
        %v809 = vtanh.pop %v793
        %v810 = vtanh.pop %v794
        %v811 = vtanh.pop %v795
        %v812 = vtanh.pop %v796
        %v813 = vtanh.pop %v797
        %v814 = vtanh.pop %v798
        %v815 = vpack.c.bf16 %v800, %v799
        %v816 = vpack.c.bf16 %v802, %v801
        %v817 = vpack.c.bf16 %v804, %v803
        %v818 = vpack.c.bf16 %v806, %v805
        %v819 = vpack.c.bf16 %v808, %v807
        %v820 = vpack.c.bf16 %v810, %v809
        %v821 = vpack.c.bf16 %v812, %v811
        %v822 = vpack.c.bf16 %v814, %v813
        %v823 = vld [vmem:[%s5] sm:$0xf]
        %v824 = vld [vmem:[%s5 + $0x4] sm:$0xf]
        %v825 = vld [vmem:[%s5 + $0x8] sm:$0xf]
        %v826 = vld [vmem:[%s5 + $0xc] sm:$0xf]
        %v827 = vld [vmem:[%s5 + $0x10] sm:$0xf]
        %v828 = vld [vmem:[%s5 + $0x14] sm:$0xf]
        %v829 = vld [vmem:[%s5 + $0x18] sm:$0xf]
        %v830 = vld [vmem:[%s5 + $0x1c] sm:$0xf]
        %v831 = vld [vmem:[%s5 + $0x20] sm:$0xf]
        %v832 = vld [vmem:[%s5 + $0x24] sm:$0xf]
        %v833 = vld [vmem:[%s5 + $0x28] sm:$0xf]
        %v834 = vld [vmem:[%s5 + $0x2c] sm:$0xf]
        %v835 = vld [vmem:[%s5 + $0x30] sm:$0xf]
        %v836 = vld [vmem:[%s5 + $0x34] sm:$0xf]
        %v837 = vld [vmem:[%s5 + $0x38] sm:$0xf]
        %v838 = vld [vmem:[%s5 + $0x3c] sm:$0xf]
        %v855 = vunpack.c.l.b16 %v823
        %v856 = vunpack.c.l.b16 %v824
        %v857 = vunpack.c.l.b16 %v825
        %v858 = vunpack.c.l.b16 %v826
        %v859 = vunpack.c.l.b16 %v827
        %v860 = vunpack.c.l.b16 %v828
        %v861 = vunpack.c.l.b16 %v829
        %v862 = vunpack.c.l.b16 %v830
        %v863 = vunpack.c.l.b16 %v831
        %v864 = vunpack.c.l.b16 %v832
        %v865 = vunpack.c.l.b16 %v833
        %v866 = vunpack.c.l.b16 %v834
        %v867 = vunpack.c.l.b16 %v835
        %v868 = vunpack.c.l.b16 %v836
        %v869 = vunpack.c.l.b16 %v837
        %v870 = vunpack.c.l.b16 %v838
        %v871 = vpack.c.b16 %v856, %v855
        %v872 = vpack.c.b16 %v858, %v857
        %v873 = vpack.c.b16 %v860, %v859
        %v874 = vpack.c.b16 %v862, %v861
        %v875 = vpack.c.b16 %v864, %v863
        %v876 = vpack.c.b16 %v866, %v865
        %v877 = vpack.c.b16 %v868, %v867
        %v878 = vpack.c.b16 %v870, %v869
        %887 = vmatpush.bf16.msra.mxu0 %v878
        %888 = vmatpush.bf16.msra.mxu0 %v877
        %889 = vmatpush.bf16.msra.mxu0 %v876
        %890 = vmatpush.bf16.msra.mxu0 %v875
        %891 = vmatpush.bf16.msra.mxu0 %v874
        %892 = vmatpush.bf16.msra.mxu0 %v873
        %893 = vmatpush.bf16.msra.mxu0 %v872
        %894 = vmatpush.bf16.msra.mxu0 %v871
        %895 = vmatmul.bf16.gmra.mxu0 %v815
        %v896 = vpop.f32.mrf.mxu0
        %v897 = vadd.f32 0.0, %v896
        %v898 = vpop.f32.mrf.mxu0
        %v899 = vadd.f32 0.0, %v898
        %900 = vmatmul.bf16.gmra.mxu0 %v816
        %v901 = vpop.f32.mrf.mxu0
        %v902 = vadd.f32 0.0, %v901
        %v903 = vpop.f32.mrf.mxu0
        %v904 = vadd.f32 0.0, %v903
        %905 = vmatmul.bf16.gmra.mxu0 %v817
        %v906 = vpop.f32.mrf.mxu0
        %v907 = vadd.f32 0.0, %v906
        %v908 = vpop.f32.mrf.mxu0
        %v909 = vadd.f32 0.0, %v908
        %910 = vmatmul.bf16.gmra.mxu0 %v818
        %v911 = vpop.f32.mrf.mxu0
        %v912 = vadd.f32 0.0, %v911
        %v913 = vpop.f32.mrf.mxu0
        %v914 = vadd.f32 0.0, %v913
        %915 = vmatmul.bf16.gmra.mxu0 %v819
        %v916 = vpop.f32.mrf.mxu0
        %v917 = vadd.f32 0.0, %v916
        %v918 = vpop.f32.mrf.mxu0
        %v919 = vadd.f32 0.0, %v918
        %920 = vmatmul.bf16.gmra.mxu0 %v820
        %v921 = vpop.f32.mrf.mxu0
        %v922 = vadd.f32 0.0, %v921
        %v923 = vpop.f32.mrf.mxu0
        %v924 = vadd.f32 0.0, %v923
        %925 = vmatmul.bf16.gmra.mxu0 %v821
        %v926 = vpop.f32.mrf.mxu0
        %v927 = vadd.f32 0.0, %v926
        %v928 = vpop.f32.mrf.mxu0
        %v929 = vadd.f32 0.0, %v928
        %930 = vmatmul.bf16.gmra.mxu0 %v822
        %v931 = vpop.f32.mrf.mxu0
        %v932 = vadd.f32 0.0, %v931
        %v933 = vpop.f32.mrf.mxu0
        %v934 = vadd.f32 0.0, %v933
        %935 = vdwg.mxu0
        %952 = vset.pattern.permute.xlu0 0
        %953 = vperm.xlu0 %952, %v897
        %v954 = vpop.permute.xlu0 %953
        %955 = vset.pattern.permute.xlu0 0
        %956 = vperm.xlu0 %955, %v899
        %v957 = vpop.permute.xlu0 %956
        %958 = vset.pattern.permute.xlu0 0
        %959 = vperm.xlu0 %958, %v902
        %v960 = vpop.permute.xlu0 %959
        %961 = vset.pattern.permute.xlu0 0
        %962 = vperm.xlu0 %961, %v904
        %v963 = vpop.permute.xlu0 %962
        %964 = vset.pattern.permute.xlu0 0
        %965 = vperm.xlu0 %964, %v907
        %v966 = vpop.permute.xlu0 %965
        %967 = vset.pattern.permute.xlu0 0
        %968 = vperm.xlu0 %967, %v909
        %v969 = vpop.permute.xlu0 %968
        %970 = vset.pattern.permute.xlu0 0
        %971 = vperm.xlu0 %970, %v912
        %v972 = vpop.permute.xlu0 %971
        %973 = vset.pattern.permute.xlu0 0
        %974 = vperm.xlu0 %973, %v914
        %v975 = vpop.permute.xlu0 %974
        %976 = vset.pattern.permute.xlu0 0
        %977 = vperm.xlu0 %976, %v917
        %v978 = vpop.permute.xlu0 %977
        %979 = vset.pattern.permute.xlu0 0
        %980 = vperm.xlu0 %979, %v919
        %v981 = vpop.permute.xlu0 %980
        %982 = vset.pattern.permute.xlu0 0
        %983 = vperm.xlu0 %982, %v922
        %v984 = vpop.permute.xlu0 %983
        %985 = vset.pattern.permute.xlu0 0
        %986 = vperm.xlu0 %985, %v924
        %v987 = vpop.permute.xlu0 %986
        %988 = vset.pattern.permute.xlu0 0
        %989 = vperm.xlu0 %988, %v927
        %v990 = vpop.permute.xlu0 %989
        %991 = vset.pattern.permute.xlu0 0
        %992 = vperm.xlu0 %991, %v929
        %v993 = vpop.permute.xlu0 %992
        %994 = vset.pattern.permute.xlu0 0
        %995 = vperm.xlu0 %994, %v932
        %v996 = vpop.permute.xlu0 %995
        %997 = vset.pattern.permute.xlu0 0
        %998 = vperm.xlu0 %997, %v934
        %v999 = vpop.permute.xlu0 %998
        %v1000 = vlaneseq
        %v1001 = vand.u32 %v1000, 127
        %v1002 = vperm.slane %v954, %v1001
        %v1003 = vperm.slane %v957, %v1001
        %v1004 = vperm.slane %v960, %v1001
        %v1005 = vperm.slane %v963, %v1001
        %v1006 = vperm.slane %v966, %v1001
        %v1007 = vperm.slane %v969, %v1001
        %v1008 = vperm.slane %v972, %v1001
        %v1009 = vperm.slane %v975, %v1001
        %v1010 = vperm.slane %v978, %v1001
        %v1011 = vperm.slane %v981, %v1001
        %v1012 = vperm.slane %v984, %v1001
        %v1013 = vperm.slane %v987, %v1001
        %v1014 = vperm.slane %v990, %v1001
        %v1015 = vperm.slane %v993, %v1001
        %v1016 = vperm.slane %v996, %v1001
        %v1017 = vperm.slane %v999, %v1001
        %vm1018 = vcmask 1041409
        %v1019 = vsel %vm1018, %v1003, %v1002
        %vm1020 = vcmask 1042434
        %v1021 = vsel %vm1020, %v1004, %v1019
        %vm1022 = vcmask 1043459
        %v1023 = vsel %vm1022, %v1005, %v1021
        %vm1024 = vcmask 1044484
        %v1025 = vsel %vm1024, %v1006, %v1023
        %vm1026 = vcmask 1045509
        %v1027 = vsel %vm1026, %v1007, %v1025
        %vm1028 = vcmask 1046534
        %v1029 = vsel %vm1028, %v1008, %v1027
        %vm1030 = vcmask 1047559
        %v1031 = vsel %vm1030, %v1009, %v1029
        %v1032 = vsel %vm1018, %v1011, %v1010
        %v1033 = vsel %vm1020, %v1012, %v1032
        %v1034 = vsel %vm1022, %v1013, %v1033
        %v1035 = vsel %vm1024, %v1014, %v1034
        %v1036 = vsel %vm1026, %v1015, %v1035
        %v1037 = vsel %vm1028, %v1016, %v1036
        %v1038 = vsel %vm1030, %v1017, %v1037
        %vm1041 = vcmask 64512
        %v1042 = vsel %vm1041, %v1031, -inf
        %1043 = vmax.xlane.f32.xlu0 %v1042
        %v1044 = vpop.xlane.xlu0 %1043
        %v1045 = vsel %vm1041, %v1038, -inf
        %1046 = vmax.xlane.f32.xlu0 %v1045
        %v1047 = vpop.xlane.xlu0 %1046
        %v1050 = vperm.slane %v1044, 0
        %v1051 = vperm.slane %v1044, 1
        %v1052 = vperm.slane %v1044, 2
        %v1053 = vperm.slane %v1044, 3
        %v1054 = vperm.slane %v1044, 4
        %v1055 = vperm.slane %v1044, 5
        %v1056 = vperm.slane %v1044, 6
        %v1057 = vperm.slane %v1044, 7
        %v1058 = vperm.slane %v1047, 0
        %v1059 = vperm.slane %v1047, 1
        %v1060 = vperm.slane %v1047, 2
        %v1061 = vperm.slane %v1047, 3
        %v1062 = vperm.slane %v1047, 4
        %v1063 = vperm.slane %v1047, 5
        %v1064 = vperm.slane %v1047, 6
        %v1065 = vperm.slane %v1047, 7
        %v1082 = vsub.f32 %v897, %v1050
        %v1083 = vsub.f32 %v899, %v1051
        %v1084 = vsub.f32 %v902, %v1052
        %v1085 = vsub.f32 %v904, %v1053
        %v1086 = vsub.f32 %v907, %v1054
        %v1087 = vsub.f32 %v909, %v1055
        %v1088 = vsub.f32 %v912, %v1056
        %v1089 = vsub.f32 %v914, %v1057
        %v1090 = vsub.f32 %v917, %v1058
        %v1091 = vsub.f32 %v919, %v1059
        %v1092 = vsub.f32 %v922, %v1060
        %v1093 = vsub.f32 %v924, %v1061
        %v1094 = vsub.f32 %v927, %v1062
        %v1095 = vsub.f32 %v929, %v1063
        %v1096 = vsub.f32 %v932, %v1064
        %v1097 = vsub.f32 %v934, %v1065
        %v1098 = vmul.f32 %v1082, 1.442695
        %v1099 = vpow.pop %v1098
        %v1100 = vmul.f32 %v1083, 1.442695
        %v1101 = vpow.pop %v1100
        %v1102 = vmul.f32 %v1084, 1.442695
        %v1103 = vpow.pop %v1102
        %v1104 = vmul.f32 %v1085, 1.442695
        %v1105 = vpow.pop %v1104
        %v1106 = vmul.f32 %v1086, 1.442695
        %v1107 = vpow.pop %v1106
        %v1108 = vmul.f32 %v1087, 1.442695
        %v1109 = vpow.pop %v1108
        %v1110 = vmul.f32 %v1088, 1.442695
        %v1111 = vpow.pop %v1110
        %v1112 = vmul.f32 %v1089, 1.442695
        %v1113 = vpow.pop %v1112
        %v1114 = vmul.f32 %v1090, 1.442695
        %v1115 = vpow.pop %v1114
        %v1116 = vmul.f32 %v1091, 1.442695
        %v1117 = vpow.pop %v1116
        %v1118 = vmul.f32 %v1092, 1.442695
        %v1119 = vpow.pop %v1118
        %v1120 = vmul.f32 %v1093, 1.442695
        %v1121 = vpow.pop %v1120
        %v1122 = vmul.f32 %v1094, 1.442695
        %v1123 = vpow.pop %v1122
        %v1124 = vmul.f32 %v1095, 1.442695
        %v1125 = vpow.pop %v1124
        %v1126 = vmul.f32 %v1096, 1.442695
        %v1127 = vpow.pop %v1126
        %v1128 = vmul.f32 %v1097, 1.442695
        %v1129 = vpow.pop %v1128
        %1146 = vset.pattern.permute.xlu0 0
        %1147 = vperm.xlu0 %1146, %v1099
        %v1148 = vpop.permute.xlu0 %1147
        %1149 = vset.pattern.permute.xlu0 0
        %1150 = vperm.xlu0 %1149, %v1101
        %v1151 = vpop.permute.xlu0 %1150
        %1152 = vset.pattern.permute.xlu0 0
        %1153 = vperm.xlu0 %1152, %v1103
        %v1154 = vpop.permute.xlu0 %1153
        %1155 = vset.pattern.permute.xlu0 0
        %1156 = vperm.xlu0 %1155, %v1105
        %v1157 = vpop.permute.xlu0 %1156
        %1158 = vset.pattern.permute.xlu0 0
        %1159 = vperm.xlu0 %1158, %v1107
        %v1160 = vpop.permute.xlu0 %1159
        %1161 = vset.pattern.permute.xlu0 0
        %1162 = vperm.xlu0 %1161, %v1109
        %v1163 = vpop.permute.xlu0 %1162
        %1164 = vset.pattern.permute.xlu0 0
        %1165 = vperm.xlu0 %1164, %v1111
        %v1166 = vpop.permute.xlu0 %1165
        %1167 = vset.pattern.permute.xlu0 0
        %1168 = vperm.xlu0 %1167, %v1113
        %v1169 = vpop.permute.xlu0 %1168
        %1170 = vset.pattern.permute.xlu0 0
        %1171 = vperm.xlu0 %1170, %v1115
        %v1172 = vpop.permute.xlu0 %1171
        %1173 = vset.pattern.permute.xlu0 0
        %1174 = vperm.xlu0 %1173, %v1117
        %v1175 = vpop.permute.xlu0 %1174
        %1176 = vset.pattern.permute.xlu0 0
        %1177 = vperm.xlu0 %1176, %v1119
        %v1178 = vpop.permute.xlu0 %1177
        %1179 = vset.pattern.permute.xlu0 0
        %1180 = vperm.xlu0 %1179, %v1121
        %v1181 = vpop.permute.xlu0 %1180
        %1182 = vset.pattern.permute.xlu0 0
        %1183 = vperm.xlu0 %1182, %v1123
        %v1184 = vpop.permute.xlu0 %1183
        %1185 = vset.pattern.permute.xlu0 0
        %1186 = vperm.xlu0 %1185, %v1125
        %v1187 = vpop.permute.xlu0 %1186
        %1188 = vset.pattern.permute.xlu0 0
        %1189 = vperm.xlu0 %1188, %v1127
        %v1190 = vpop.permute.xlu0 %1189
        %1191 = vset.pattern.permute.xlu0 0
        %1192 = vperm.xlu0 %1191, %v1129
        %v1193 = vpop.permute.xlu0 %1192
        %v1194 = vperm.slane %v1148, %v1001
        %v1195 = vperm.slane %v1151, %v1001
        %v1196 = vperm.slane %v1154, %v1001
        %v1197 = vperm.slane %v1157, %v1001
        %v1198 = vperm.slane %v1160, %v1001
        %v1199 = vperm.slane %v1163, %v1001
        %v1200 = vperm.slane %v1166, %v1001
        %v1201 = vperm.slane %v1169, %v1001
        %v1202 = vperm.slane %v1172, %v1001
        %v1203 = vperm.slane %v1175, %v1001
        %v1204 = vperm.slane %v1178, %v1001
        %v1205 = vperm.slane %v1181, %v1001
        %v1206 = vperm.slane %v1184, %v1001
        %v1207 = vperm.slane %v1187, %v1001
        %v1208 = vperm.slane %v1190, %v1001
        %v1209 = vperm.slane %v1193, %v1001
        %v1210 = vsel %vm1018, %v1195, %v1194
        %v1211 = vsel %vm1020, %v1196, %v1210
        %v1212 = vsel %vm1022, %v1197, %v1211
        %v1213 = vsel %vm1024, %v1198, %v1212
        %v1214 = vsel %vm1026, %v1199, %v1213
        %v1215 = vsel %vm1028, %v1200, %v1214
        %v1216 = vsel %vm1030, %v1201, %v1215
        %v1217 = vsel %vm1018, %v1203, %v1202
        %v1218 = vsel %vm1020, %v1204, %v1217
        %v1219 = vsel %vm1022, %v1205, %v1218
        %v1220 = vsel %vm1024, %v1206, %v1219
        %v1221 = vsel %vm1026, %v1207, %v1220
        %v1222 = vsel %vm1028, %v1208, %v1221
        %v1223 = vsel %vm1030, %v1209, %v1222
        %v1226 = vsel %vm1041, %v1216, 0.0
        %1227 = vadd.xlane.f32.xlu0 %v1226
        %v1228 = vpop.xlane.xlu0 %1227
        %v1229 = vsel %vm1041, %v1223, 0.0
        %1230 = vadd.xlane.f32.xlu0 %v1229
        %v1231 = vpop.xlane.xlu0 %1230
        %v1234 = vperm.slane %v1228, 0
        %v1235 = vperm.slane %v1228, 1
        %v1236 = vperm.slane %v1228, 2
        %v1237 = vperm.slane %v1228, 3
        %v1238 = vperm.slane %v1228, 4
        %v1239 = vperm.slane %v1228, 5
        %v1240 = vperm.slane %v1228, 6
        %v1241 = vperm.slane %v1228, 7
        %v1242 = vperm.slane %v1231, 0
        %v1243 = vperm.slane %v1231, 1
        %v1244 = vperm.slane %v1231, 2
        %v1245 = vperm.slane %v1231, 3
        %v1246 = vperm.slane %v1231, 4
        %v1247 = vperm.slane %v1231, 5
        %v1248 = vperm.slane %v1231, 6
        %v1249 = vperm.slane %v1231, 7
        %v1266 = vrcp.pop %v1234
        %v1267 = vmul.f32 %v1234, %v1266
        %v1268 = vsub.f32 1.0, %v1267
        %v1269 = vmul.f32 %v1266, %v1268
        %v1270 = vadd.f32 %v1266, %v1269
        %vm1271 = vweird.f32 %v1234
        %vm1272 = vweird.f32 %v1266
        %vm1273 = vmor %vm1271, %vm1272
        %v1274 = vsel %vm1273, %v1266, %v1270
        %v1275 = vand.u32 2147483647, %v1234
        %vm1276 = vcmp.eq.f32.partialorder %v1275, 8.507059e+37
        %v1277 = vand.u32 %v1234, 2147483648
        %v1278 = vor.u32 1.1754944e-38, %v1277
        %v1279 = vsel %vm1276, %v1278, %v1274
        %v1280 = vmul.f32 %v1099, %v1279
        %v1281 = vrcp.pop %v1235
        %v1282 = vmul.f32 %v1235, %v1281
        %v1283 = vsub.f32 1.0, %v1282
        %v1284 = vmul.f32 %v1281, %v1283
        %v1285 = vadd.f32 %v1281, %v1284
        %vm1286 = vweird.f32 %v1235
        %vm1287 = vweird.f32 %v1281
        %vm1288 = vmor %vm1286, %vm1287
        %v1289 = vsel %vm1288, %v1281, %v1285
        %v1290 = vand.u32 2147483647, %v1235
        %vm1291 = vcmp.eq.f32.partialorder %v1290, 8.507059e+37
        %v1292 = vand.u32 %v1235, 2147483648
        %v1293 = vor.u32 1.1754944e-38, %v1292
        %v1294 = vsel %vm1291, %v1293, %v1289
        %v1295 = vmul.f32 %v1101, %v1294
        %v1296 = vrcp.pop %v1236
        %v1297 = vmul.f32 %v1236, %v1296
        %v1298 = vsub.f32 1.0, %v1297
        %v1299 = vmul.f32 %v1296, %v1298
        %v1300 = vadd.f32 %v1296, %v1299
        %vm1301 = vweird.f32 %v1236
        %vm1302 = vweird.f32 %v1296
        %vm1303 = vmor %vm1301, %vm1302
        %v1304 = vsel %vm1303, %v1296, %v1300
        %v1305 = vand.u32 2147483647, %v1236
        %vm1306 = vcmp.eq.f32.partialorder %v1305, 8.507059e+37
        %v1307 = vand.u32 %v1236, 2147483648
        %v1308 = vor.u32 1.1754944e-38, %v1307
        %v1309 = vsel %vm1306, %v1308, %v1304
        %v1310 = vmul.f32 %v1103, %v1309
        %v1311 = vrcp.pop %v1237
        %v1312 = vmul.f32 %v1237, %v1311
        %v1313 = vsub.f32 1.0, %v1312
        %v1314 = vmul.f32 %v1311, %v1313
        %v1315 = vadd.f32 %v1311, %v1314
        %vm1316 = vweird.f32 %v1237
        %vm1317 = vweird.f32 %v1311
        %vm1318 = vmor %vm1316, %vm1317
        %v1319 = vsel %vm1318, %v1311, %v1315
        %v1320 = vand.u32 2147483647, %v1237
        %vm1321 = vcmp.eq.f32.partialorder %v1320, 8.507059e+37
        %v1322 = vand.u32 %v1237, 2147483648
        %v1323 = vor.u32 1.1754944e-38, %v1322
        %v1324 = vsel %vm1321, %v1323, %v1319
        %v1325 = vmul.f32 %v1105, %v1324
        %v1326 = vrcp.pop %v1238
        %v1327 = vmul.f32 %v1238, %v1326
        %v1328 = vsub.f32 1.0, %v1327
        %v1329 = vmul.f32 %v1326, %v1328
        %v1330 = vadd.f32 %v1326, %v1329
        %vm1331 = vweird.f32 %v1238
        %vm1332 = vweird.f32 %v1326
        %vm1333 = vmor %vm1331, %vm1332
        %v1334 = vsel %vm1333, %v1326, %v1330
        %v1335 = vand.u32 2147483647, %v1238
        %vm1336 = vcmp.eq.f32.partialorder %v1335, 8.507059e+37
        %v1337 = vand.u32 %v1238, 2147483648
        %v1338 = vor.u32 1.1754944e-38, %v1337
        %v1339 = vsel %vm1336, %v1338, %v1334
        %v1340 = vmul.f32 %v1107, %v1339
        %v1341 = vrcp.pop %v1239
        %v1342 = vmul.f32 %v1239, %v1341
        %v1343 = vsub.f32 1.0, %v1342
        %v1344 = vmul.f32 %v1341, %v1343
        %v1345 = vadd.f32 %v1341, %v1344
        %vm1346 = vweird.f32 %v1239
        %vm1347 = vweird.f32 %v1341
        %vm1348 = vmor %vm1346, %vm1347
        %v1349 = vsel %vm1348, %v1341, %v1345
        %v1350 = vand.u32 2147483647, %v1239
        %vm1351 = vcmp.eq.f32.partialorder %v1350, 8.507059e+37
        %v1352 = vand.u32 %v1239, 2147483648
        %v1353 = vor.u32 1.1754944e-38, %v1352
        %v1354 = vsel %vm1351, %v1353, %v1349
        %v1355 = vmul.f32 %v1109, %v1354
        %v1356 = vrcp.pop %v1240
        %v1357 = vmul.f32 %v1240, %v1356
        %v1358 = vsub.f32 1.0, %v1357
        %v1359 = vmul.f32 %v1356, %v1358
        %v1360 = vadd.f32 %v1356, %v1359
        %vm1361 = vweird.f32 %v1240
        %vm1362 = vweird.f32 %v1356
        %vm1363 = vmor %vm1361, %vm1362
        %v1364 = vsel %vm1363, %v1356, %v1360
        %v1365 = vand.u32 2147483647, %v1240
        %vm1366 = vcmp.eq.f32.partialorder %v1365, 8.507059e+37
        %v1367 = vand.u32 %v1240, 2147483648
        %v1368 = vor.u32 1.1754944e-38, %v1367
        %v1369 = vsel %vm1366, %v1368, %v1364
        %v1370 = vmul.f32 %v1111, %v1369
        %v1371 = vrcp.pop %v1241
        %v1372 = vmul.f32 %v1241, %v1371
        %v1373 = vsub.f32 1.0, %v1372
        %v1374 = vmul.f32 %v1371, %v1373
        %v1375 = vadd.f32 %v1371, %v1374
        %vm1376 = vweird.f32 %v1241
        %vm1377 = vweird.f32 %v1371
        %vm1378 = vmor %vm1376, %vm1377
        %v1379 = vsel %vm1378, %v1371, %v1375
        %v1380 = vand.u32 2147483647, %v1241
        %vm1381 = vcmp.eq.f32.partialorder %v1380, 8.507059e+37
        %v1382 = vand.u32 %v1241, 2147483648
        %v1383 = vor.u32 1.1754944e-38, %v1382
        %v1384 = vsel %vm1381, %v1383, %v1379
        %v1385 = vmul.f32 %v1113, %v1384
        %v1386 = vrcp.pop %v1242
        %v1387 = vmul.f32 %v1242, %v1386
        %v1388 = vsub.f32 1.0, %v1387
        %v1389 = vmul.f32 %v1386, %v1388
        %v1390 = vadd.f32 %v1386, %v1389
        %vm1391 = vweird.f32 %v1242
        %vm1392 = vweird.f32 %v1386
        %vm1393 = vmor %vm1391, %vm1392
        %v1394 = vsel %vm1393, %v1386, %v1390
        %v1395 = vand.u32 2147483647, %v1242
        %vm1396 = vcmp.eq.f32.partialorder %v1395, 8.507059e+37
        %v1397 = vand.u32 %v1242, 2147483648
        %v1398 = vor.u32 1.1754944e-38, %v1397
        %v1399 = vsel %vm1396, %v1398, %v1394
        %v1400 = vmul.f32 %v1115, %v1399
        %v1401 = vrcp.pop %v1243
        %v1402 = vmul.f32 %v1243, %v1401
        %v1403 = vsub.f32 1.0, %v1402
        %v1404 = vmul.f32 %v1401, %v1403
        %v1405 = vadd.f32 %v1401, %v1404
        %vm1406 = vweird.f32 %v1243
        %vm1407 = vweird.f32 %v1401
        %vm1408 = vmor %vm1406, %vm1407
        %v1409 = vsel %vm1408, %v1401, %v1405
        %v1410 = vand.u32 2147483647, %v1243
        %vm1411 = vcmp.eq.f32.partialorder %v1410, 8.507059e+37
        %v1412 = vand.u32 %v1243, 2147483648
        %v1413 = vor.u32 1.1754944e-38, %v1412
        %v1414 = vsel %vm1411, %v1413, %v1409
        %v1415 = vmul.f32 %v1117, %v1414
        %v1416 = vrcp.pop %v1244
        %v1417 = vmul.f32 %v1244, %v1416
        %v1418 = vsub.f32 1.0, %v1417
        %v1419 = vmul.f32 %v1416, %v1418
        %v1420 = vadd.f32 %v1416, %v1419
        %vm1421 = vweird.f32 %v1244
        %vm1422 = vweird.f32 %v1416
        %vm1423 = vmor %vm1421, %vm1422
        %v1424 = vsel %vm1423, %v1416, %v1420
        %v1425 = vand.u32 2147483647, %v1244
        %vm1426 = vcmp.eq.f32.partialorder %v1425, 8.507059e+37
        %v1427 = vand.u32 %v1244, 2147483648
        %v1428 = vor.u32 1.1754944e-38, %v1427
        %v1429 = vsel %vm1426, %v1428, %v1424
        %v1430 = vmul.f32 %v1119, %v1429
        %v1431 = vrcp.pop %v1245
        %v1432 = vmul.f32 %v1245, %v1431
        %v1433 = vsub.f32 1.0, %v1432
        %v1434 = vmul.f32 %v1431, %v1433
        %v1435 = vadd.f32 %v1431, %v1434
        %vm1436 = vweird.f32 %v1245
        %vm1437 = vweird.f32 %v1431
        %vm1438 = vmor %vm1436, %vm1437
        %v1439 = vsel %vm1438, %v1431, %v1435
        %v1440 = vand.u32 2147483647, %v1245
        %vm1441 = vcmp.eq.f32.partialorder %v1440, 8.507059e+37
        %v1442 = vand.u32 %v1245, 2147483648
        %v1443 = vor.u32 1.1754944e-38, %v1442
        %v1444 = vsel %vm1441, %v1443, %v1439
        %v1445 = vmul.f32 %v1121, %v1444
        %v1446 = vrcp.pop %v1246
        %v1447 = vmul.f32 %v1246, %v1446
        %v1448 = vsub.f32 1.0, %v1447
        %v1449 = vmul.f32 %v1446, %v1448
        %v1450 = vadd.f32 %v1446, %v1449
        %vm1451 = vweird.f32 %v1246
        %vm1452 = vweird.f32 %v1446
        %vm1453 = vmor %vm1451, %vm1452
        %v1454 = vsel %vm1453, %v1446, %v1450
        %v1455 = vand.u32 2147483647, %v1246
        %vm1456 = vcmp.eq.f32.partialorder %v1455, 8.507059e+37
        %v1457 = vand.u32 %v1246, 2147483648
        %v1458 = vor.u32 1.1754944e-38, %v1457
        %v1459 = vsel %vm1456, %v1458, %v1454
        %v1460 = vmul.f32 %v1123, %v1459
        %v1461 = vrcp.pop %v1247
        %v1462 = vmul.f32 %v1247, %v1461
        %v1463 = vsub.f32 1.0, %v1462
        %v1464 = vmul.f32 %v1461, %v1463
        %v1465 = vadd.f32 %v1461, %v1464
        %vm1466 = vweird.f32 %v1247
        %vm1467 = vweird.f32 %v1461
        %vm1468 = vmor %vm1466, %vm1467
        %v1469 = vsel %vm1468, %v1461, %v1465
        %v1470 = vand.u32 2147483647, %v1247
        %vm1471 = vcmp.eq.f32.partialorder %v1470, 8.507059e+37
        %v1472 = vand.u32 %v1247, 2147483648
        %v1473 = vor.u32 1.1754944e-38, %v1472
        %v1474 = vsel %vm1471, %v1473, %v1469
        %v1475 = vmul.f32 %v1125, %v1474
        %v1476 = vrcp.pop %v1248
        %v1477 = vmul.f32 %v1248, %v1476
        %v1478 = vsub.f32 1.0, %v1477
        %v1479 = vmul.f32 %v1476, %v1478
        %v1480 = vadd.f32 %v1476, %v1479
        %vm1481 = vweird.f32 %v1248
        %vm1482 = vweird.f32 %v1476
        %vm1483 = vmor %vm1481, %vm1482
        %v1484 = vsel %vm1483, %v1476, %v1480
        %v1485 = vand.u32 2147483647, %v1248
        %vm1486 = vcmp.eq.f32.partialorder %v1485, 8.507059e+37
        %v1487 = vand.u32 %v1248, 2147483648
        %v1488 = vor.u32 1.1754944e-38, %v1487
        %v1489 = vsel %vm1486, %v1488, %v1484
        %v1490 = vmul.f32 %v1127, %v1489
        %v1491 = vrcp.pop %v1249
        %v1492 = vmul.f32 %v1249, %v1491
        %v1493 = vsub.f32 1.0, %v1492
        %v1494 = vmul.f32 %v1491, %v1493
        %v1495 = vadd.f32 %v1491, %v1494
        %vm1496 = vweird.f32 %v1249
        %vm1497 = vweird.f32 %v1491
        %vm1498 = vmor %vm1496, %vm1497
        %v1499 = vsel %vm1498, %v1491, %v1495
        %v1500 = vand.u32 2147483647, %v1249
        %vm1501 = vcmp.eq.f32.partialorder %v1500, 8.507059e+37
        %v1502 = vand.u32 %v1249, 2147483648
        %v1503 = vor.u32 1.1754944e-38, %v1502
        %v1504 = vsel %vm1501, %v1503, %v1499
        %v1505 = vmul.f32 %v1129, %v1504
        %v1506 = vld [vmem:[%s437] sm:$0xff]
        %v1507 = vpack.c.bf16 %v1506, %v1506
        %v1508 = vpack.c.bf16 %v1280, %v1280
        %v1509 = vpack.c.bf16 %v1295, %v1295
        %v1510 = vpack.c.bf16 %v1310, %v1310
        %v1511 = vpack.c.bf16 %v1325, %v1325
        %v1512 = vpack.c.bf16 %v1340, %v1340
        %v1513 = vpack.c.bf16 %v1355, %v1355
        %v1514 = vpack.c.bf16 %v1370, %v1370
        %v1515 = vpack.c.bf16 %v1385, %v1385
        %v1516 = vpack.c.bf16 %v1400, %v1400
        %v1517 = vpack.c.bf16 %v1415, %v1415
        %v1518 = vpack.c.bf16 %v1430, %v1430
        %v1519 = vpack.c.bf16 %v1445, %v1445
        %v1520 = vpack.c.bf16 %v1460, %v1460
        %v1521 = vpack.c.bf16 %v1475, %v1475
        %v1522 = vpack.c.bf16 %v1490, %v1490
        %v1523 = vpack.c.bf16 %v1505, %v1505
        %v1540 = vunpack.c.l.b16 %v1508
        %v1541 = vunpack.c.l.b16 %v1509
        %v1542 = vunpack.c.l.b16 %v1510
        %v1543 = vunpack.c.l.b16 %v1511
        %v1544 = vunpack.c.l.b16 %v1512
        %v1545 = vunpack.c.l.b16 %v1513
        %v1546 = vunpack.c.l.b16 %v1514
        %v1547 = vunpack.c.l.b16 %v1515
        %v1548 = vunpack.c.l.b16 %v1516
        %v1549 = vunpack.c.l.b16 %v1517
        %v1550 = vunpack.c.l.b16 %v1518
        %v1551 = vunpack.c.l.b16 %v1519
        %v1552 = vunpack.c.l.b16 %v1520
        %v1553 = vunpack.c.l.b16 %v1521
        %v1554 = vunpack.c.l.b16 %v1522
        %v1555 = vunpack.c.l.b16 %v1523
        %1556 = vset.pattern.permute.xlu0 0
        %1557 = vperm.xlu0 %1556, %v1540
        %v1558 = vpop.permute.xlu0 %1557
        %1559 = vset.pattern.permute.xlu0 0
        %1560 = vperm.xlu0 %1559, %v1541
        %v1561 = vpop.permute.xlu0 %1560
        %1562 = vset.pattern.permute.xlu0 0
        %1563 = vperm.xlu0 %1562, %v1542
        %v1564 = vpop.permute.xlu0 %1563
        %1565 = vset.pattern.permute.xlu0 0
        %1566 = vperm.xlu0 %1565, %v1543
        %v1567 = vpop.permute.xlu0 %1566
        %1568 = vset.pattern.permute.xlu0 0
        %1569 = vperm.xlu0 %1568, %v1544
        %v1570 = vpop.permute.xlu0 %1569
        %1571 = vset.pattern.permute.xlu0 0
        %1572 = vperm.xlu0 %1571, %v1545
        %v1573 = vpop.permute.xlu0 %1572
        %1574 = vset.pattern.permute.xlu0 0
        %1575 = vperm.xlu0 %1574, %v1546
        %v1576 = vpop.permute.xlu0 %1575
        %1577 = vset.pattern.permute.xlu0 0
        %1578 = vperm.xlu0 %1577, %v1547
        %v1579 = vpop.permute.xlu0 %1578
        %1580 = vset.pattern.permute.xlu0 0
        %1581 = vperm.xlu0 %1580, %v1548
        %v1582 = vpop.permute.xlu0 %1581
        %1583 = vset.pattern.permute.xlu0 0
        %1584 = vperm.xlu0 %1583, %v1549
        %v1585 = vpop.permute.xlu0 %1584
        %1586 = vset.pattern.permute.xlu0 0
        %1587 = vperm.xlu0 %1586, %v1550
        %v1588 = vpop.permute.xlu0 %1587
        %1589 = vset.pattern.permute.xlu0 0
        %1590 = vperm.xlu0 %1589, %v1551
        %v1591 = vpop.permute.xlu0 %1590
        %1592 = vset.pattern.permute.xlu0 0
        %1593 = vperm.xlu0 %1592, %v1552
        %v1594 = vpop.permute.xlu0 %1593
        %1595 = vset.pattern.permute.xlu0 0
        %1596 = vperm.xlu0 %1595, %v1553
        %v1597 = vpop.permute.xlu0 %1596
        %1598 = vset.pattern.permute.xlu0 0
        %1599 = vperm.xlu0 %1598, %v1554
        %v1600 = vpop.permute.xlu0 %1599
        %1601 = vset.pattern.permute.xlu0 0
        %1602 = vperm.xlu0 %1601, %v1555
        %v1603 = vpop.permute.xlu0 %1602
        %v1604 = vperm.slane %v1558, %v1001
        %v1605 = vperm.slane %v1561, %v1001
        %v1606 = vperm.slane %v1564, %v1001
        %v1607 = vperm.slane %v1567, %v1001
        %v1608 = vperm.slane %v1570, %v1001
        %v1609 = vperm.slane %v1573, %v1001
        %v1610 = vperm.slane %v1576, %v1001
        %v1611 = vperm.slane %v1579, %v1001
        %v1612 = vperm.slane %v1582, %v1001
        %v1613 = vperm.slane %v1585, %v1001
        %v1614 = vperm.slane %v1588, %v1001
        %v1615 = vperm.slane %v1591, %v1001
        %v1616 = vperm.slane %v1594, %v1001
        %v1617 = vperm.slane %v1597, %v1001
        %v1618 = vperm.slane %v1600, %v1001
        %v1619 = vperm.slane %v1603, %v1001
        %v1620 = vsel %vm1018, %v1605, %v1604
        %v1621 = vsel %vm1020, %v1606, %v1620
        %v1622 = vsel %vm1022, %v1607, %v1621
        %v1623 = vsel %vm1024, %v1608, %v1622
        %v1624 = vsel %vm1026, %v1609, %v1623
        %v1625 = vsel %vm1028, %v1610, %v1624
        %v1626 = vsel %vm1030, %v1611, %v1625
        %v1627 = vsel %vm1018, %v1613, %v1612
        %v1628 = vsel %vm1020, %v1614, %v1627
        %v1629 = vsel %vm1022, %v1615, %v1628
        %v1630 = vsel %vm1024, %v1616, %v1629
        %v1631 = vsel %vm1026, %v1617, %v1630
        %v1632 = vsel %vm1028, %v1618, %v1631
        %v1633 = vsel %vm1030, %v1619, %v1632
        %v1634 = vpack.c.b16 %v1633, %v1626
        %v1636 = vsel %vm1041, %v1634, 0
        %vm1638 = vcmask 1043456
        %v1640 = vsel %vm1638, %v1507, 0
        %1642 = vmatpush.bf16.msra.mxu0 0
        %1643 = vmatpush.bf16.msra.mxu0 0
        %1644 = vmatpush.bf16.msra.mxu0 0
        %1645 = vmatpush.bf16.msra.mxu0 0
        %1646 = vmatpush.bf16.msra.mxu0 0
        %1647 = vmatpush.bf16.msra.mxu0 0
        %1648 = vmatpush.bf16.msra.mxu0 0
        %1649 = vmatpush.bf16.msra.mxu0 %v1640
        %1650 = vmatmul.bf16.gmra.mxu0 %v1636
        %v1651 = vpop.f32.mrf.mxu0
        %v1652 = vadd.f32 0.0, %v1651
        %v1653 = vpop.f32.mrf.mxu0
        %v1654 = vadd.f32 0.0, %v1653
        %1655 = vdwg.mxu0
        %1656 = vst [vmem:[#allocation5] sm:$0xff] %v1652
        %1657 = vst [vmem:[#allocation5 + $0x8] sm:$0xff] %v1654
        %v1658 = vld [vmem:[%s447] sm:$0xff]
        %v1659 = vld [vmem:[%s447 + $0x8] sm:$0xff]
        %v1660 = vld [vmem:[#allocation5] sm:$0xff]
        %v1661 = vld [vmem:[#allocation5 + $0x8] sm:$0xff]
        %v1662 = vpack.c.bf16 %v1661, %v1660
        %v1663 = vld [vmem:[#allocation12] sm:$0xf]
        %v1664 = vld [vmem:[#allocation12 + $0x4] sm:$0xf]
        %v1665 = vld [vmem:[#allocation12 + $0x8] sm:$0xf]
        %v1666 = vld [vmem:[#allocation12 + $0xc] sm:$0xf]
        %v1667 = vld [vmem:[#allocation12 + $0x10] sm:$0xf]
        %v1668 = vld [vmem:[#allocation12 + $0x14] sm:$0xf]
        %v1669 = vld [vmem:[#allocation12 + $0x18] sm:$0xf]
        %v1670 = vld [vmem:[#allocation12 + $0x1c] sm:$0xf]
        %v1671 = vld [vmem:[#allocation12 + $0x20] sm:$0xf]
        %v1672 = vld [vmem:[#allocation12 + $0x24] sm:$0xf]
        %v1673 = vld [vmem:[#allocation12 + $0x28] sm:$0xf]
        %v1674 = vld [vmem:[#allocation12 + $0x2c] sm:$0xf]
        %v1675 = vld [vmem:[#allocation12 + $0x30] sm:$0xf]
        %v1676 = vld [vmem:[#allocation12 + $0x34] sm:$0xf]
        %v1677 = vld [vmem:[#allocation12 + $0x38] sm:$0xf]
        %v1678 = vld [vmem:[#allocation12 + $0x3c] sm:$0xf]
        %v1695 = vunpack.c.l.b16 %v1663
        %v1696 = vunpack.c.l.b16 %v1664
        %v1697 = vunpack.c.l.b16 %v1665
        %v1698 = vunpack.c.l.b16 %v1666
        %v1699 = vunpack.c.l.b16 %v1667
        %v1700 = vunpack.c.l.b16 %v1668
        %v1701 = vunpack.c.l.b16 %v1669
        %v1702 = vunpack.c.l.b16 %v1670
        %v1703 = vunpack.c.l.b16 %v1671
        %v1704 = vunpack.c.l.b16 %v1672
        %v1705 = vunpack.c.l.b16 %v1673
        %v1706 = vunpack.c.l.b16 %v1674
        %v1707 = vunpack.c.l.b16 %v1675
        %v1708 = vunpack.c.l.b16 %v1676
        %v1709 = vunpack.c.l.b16 %v1677
        %v1710 = vunpack.c.l.b16 %v1678
        %v1711 = vpack.c.b16 %v1696, %v1695
        %v1712 = vpack.c.b16 %v1698, %v1697
        %v1713 = vpack.c.b16 %v1700, %v1699
        %v1714 = vpack.c.b16 %v1702, %v1701
        %v1715 = vpack.c.b16 %v1704, %v1703
        %v1716 = vpack.c.b16 %v1706, %v1705
        %v1717 = vpack.c.b16 %v1708, %v1707
        %v1718 = vpack.c.b16 %v1710, %v1709
        %1727 = vmatpush.bf16.msra.mxu0 %v1718
        %1728 = vmatpush.bf16.msra.mxu0 %v1717
        %1729 = vmatpush.bf16.msra.mxu0 %v1716
        %1730 = vmatpush.bf16.msra.mxu0 %v1715
        %1731 = vmatpush.bf16.msra.mxu0 %v1714
        %1732 = vmatpush.bf16.msra.mxu0 %v1713
        %1733 = vmatpush.bf16.msra.mxu0 %v1712
        %1734 = vmatpush.bf16.msra.mxu0 %v1711
        %1735 = vmatmul.bf16.gmra.mxu0 %v1662
        %v1736 = vpop.f32.mrf.mxu0
        %v1737 = vadd.f32 0.0, %v1736
        %v1738 = vpop.f32.mrf.mxu0
        %v1739 = vadd.f32 0.0, %v1738
        %1740 = vdwg.mxu0
        %v1741 = vxor.u32 %v1737, 2147483648
        %v1742 = vxor.u32 %v1739, 2147483648
        %v1743 = vmul.f32 %v1741, 1.442695
        %v1744 = vpow.pop %v1743
        %v1745 = vmul.f32 %v1742, 1.442695
        %v1746 = vpow.pop %v1745
        %v1747 = vadd.f32 %v1744, 1.0
        %v1748 = vadd.f32 %v1746, 1.0
        %v1749 = vrcp.pop %v1747
        %v1750 = vmul.f32 %v1747, %v1749
        %v1751 = vsub.f32 1.0, %v1750
        %v1752 = vmul.f32 %v1749, %v1751
        %v1753 = vadd.f32 %v1749, %v1752
        %vm1754 = vweird.f32 %v1747
        %vm1755 = vweird.f32 %v1749
        %vm1756 = vmor %vm1754, %vm1755
        %v1757 = vsel %vm1756, %v1749, %v1753
        %v1758 = vand.u32 2147483647, %v1747
        %vm1759 = vcmp.eq.f32.partialorder %v1758, 8.507059e+37
        %v1760 = vand.u32 %v1747, 2147483648
        %v1761 = vor.u32 1.1754944e-38, %v1760
        %v1762 = vsel %vm1759, %v1761, %v1757
        %v1763 = vmul.f32 1.0, %v1762
        %v1764 = vrcp.pop %v1748
        %v1765 = vmul.f32 %v1748, %v1764
        %v1766 = vsub.f32 1.0, %v1765
        %v1767 = vmul.f32 %v1764, %v1766
        %v1768 = vadd.f32 %v1764, %v1767
        %vm1769 = vweird.f32 %v1748
        %vm1770 = vweird.f32 %v1764
        %vm1771 = vmor %vm1769, %vm1770
        %v1772 = vsel %vm1771, %v1764, %v1768
        %v1773 = vand.u32 2147483647, %v1748
        %vm1774 = vcmp.eq.f32.partialorder %v1773, 8.507059e+37
        %v1775 = vand.u32 %v1748, 2147483648
        %v1776 = vor.u32 1.1754944e-38, %v1775
        %v1777 = vsel %vm1774, %v1776, %v1772
        %v1778 = vmul.f32 1.0, %v1777
        %v1779 = vmul.f32 %v1763, %v1658
        %v1780 = vmul.f32 %v1778, %v1659
        %v1781 = vld [vmem:[#allocation3] sm:$0xff]
        %v1782 = vld [vmem:[#allocation3 + $0x8] sm:$0xff]
        %v1783 = vxor.u32 %v1781, 2147483648
        %v1784 = vxor.u32 %v1782, 2147483648
        %v1785 = vmul.f32 %v1783, 1.442695
        %v1786 = vpow.pop %v1785
        %v1787 = vmul.f32 %v1784, 1.442695
        %v1788 = vpow.pop %v1787
        %v1789 = vadd.f32 %v1786, 1.0
        %v1790 = vadd.f32 %v1788, 1.0
        %v1791 = vrcp.pop %v1789
        %v1792 = vmul.f32 %v1789, %v1791
        %v1793 = vsub.f32 1.0, %v1792
        %v1794 = vmul.f32 %v1791, %v1793
        %v1795 = vadd.f32 %v1791, %v1794
        %vm1796 = vweird.f32 %v1789
        %vm1797 = vweird.f32 %v1791
        %vm1798 = vmor %vm1796, %vm1797
        %v1799 = vsel %vm1798, %v1791, %v1795
        %v1800 = vand.u32 2147483647, %v1789
        %vm1801 = vcmp.eq.f32.partialorder %v1800, 8.507059e+37
        %v1802 = vand.u32 %v1789, 2147483648
        %v1803 = vor.u32 1.1754944e-38, %v1802
        %v1804 = vsel %vm1801, %v1803, %v1799
        %v1805 = vmul.f32 1.0, %v1804
        %v1806 = vrcp.pop %v1790
        %v1807 = vmul.f32 %v1790, %v1806
        %v1808 = vsub.f32 1.0, %v1807
        %v1809 = vmul.f32 %v1806, %v1808
        %v1810 = vadd.f32 %v1806, %v1809
        %vm1811 = vweird.f32 %v1790
        %vm1812 = vweird.f32 %v1806
        %vm1813 = vmor %vm1811, %vm1812
        %v1814 = vsel %vm1813, %v1806, %v1810
        %v1815 = vand.u32 2147483647, %v1790
        %vm1816 = vcmp.eq.f32.partialorder %v1815, 8.507059e+37
        %v1817 = vand.u32 %v1790, 2147483648
        %v1818 = vor.u32 1.1754944e-38, %v1817
        %v1819 = vsel %vm1816, %v1818, %v1814
        %v1820 = vmul.f32 1.0, %v1819
        %v1821 = vmul.f32 %v1805, %v1660
        %v1822 = vmul.f32 %v1820, %v1661
        %v1823 = vpack.c.bf16 %v1822, %v1821
        %v1824 = vld [vmem:[#allocation14] sm:$0xff]
        %v1825 = vld [vmem:[#allocation14 + $0x8] sm:$0xff]
        %v1826 = vld [vmem:[#allocation14 + $0x10] sm:$0xff]
        %v1827 = vld [vmem:[#allocation14 + $0x18] sm:$0xff]
        %v1828 = vld [vmem:[#allocation14 + $0x20] sm:$0xff]
        %v1829 = vld [vmem:[#allocation14 + $0x28] sm:$0xff]
        %v1830 = vld [vmem:[#allocation14 + $0x30] sm:$0xff]
        %v1831 = vld [vmem:[#allocation14 + $0x38] sm:$0xff]
        %v1832 = vld [vmem:[#allocation14 + $0x40] sm:$0xff]
        %v1833 = vld [vmem:[#allocation14 + $0x48] sm:$0xff]
        %v1834 = vld [vmem:[#allocation14 + $0x50] sm:$0xff]
        %v1835 = vld [vmem:[#allocation14 + $0x58] sm:$0xff]
        %v1836 = vld [vmem:[#allocation14 + $0x60] sm:$0xff]
        %v1837 = vld [vmem:[#allocation14 + $0x68] sm:$0xff]
        %v1838 = vld [vmem:[#allocation14 + $0x70] sm:$0xff]
        %v1839 = vld [vmem:[#allocation14 + $0x78] sm:$0xff]
        %v1840 = vld [vmem:[%s8] sm:$0x3]
        %v1842 = vperm.slane %v1840, 0
        %v1843 = vperm.slane %v1840, 1
        %v1862 = vunpack.c.l.b16 %v1824
        %v1863 = vunpack.c.h.b16 %v1824
        %v1864 = vunpack.c.l.b16 %v1825
        %v1865 = vunpack.c.h.b16 %v1825
        %v1866 = vunpack.c.l.b16 %v1826
        %v1867 = vunpack.c.h.b16 %v1826
        %v1868 = vunpack.c.l.b16 %v1827
        %v1869 = vunpack.c.h.b16 %v1827
        %v1870 = vunpack.c.l.b16 %v1828
        %v1871 = vunpack.c.h.b16 %v1828
        %v1872 = vunpack.c.l.b16 %v1829
        %v1873 = vunpack.c.h.b16 %v1829
        %v1874 = vunpack.c.l.b16 %v1830
        %v1875 = vunpack.c.h.b16 %v1830
        %v1876 = vunpack.c.l.b16 %v1831
        %v1877 = vunpack.c.h.b16 %v1831
        %v1878 = vunpack.c.l.b16 %v1832
        %v1879 = vunpack.c.h.b16 %v1832
        %v1880 = vunpack.c.l.b16 %v1833
        %v1881 = vunpack.c.h.b16 %v1833
        %v1882 = vunpack.c.l.b16 %v1834
        %v1883 = vunpack.c.h.b16 %v1834
        %v1884 = vunpack.c.l.b16 %v1835
        %v1885 = vunpack.c.h.b16 %v1835
        %v1886 = vunpack.c.l.b16 %v1836
        %v1887 = vunpack.c.h.b16 %v1836
        %v1888 = vunpack.c.l.b16 %v1837
        %v1889 = vunpack.c.h.b16 %v1837
        %v1890 = vunpack.c.l.b16 %v1838
        %v1891 = vunpack.c.h.b16 %v1838
        %v1892 = vunpack.c.l.b16 %v1839
        %v1893 = vunpack.c.h.b16 %v1839
        %v1894 = vpack.c.b16 %v1864, %v1862
        %v1895 = vpack.c.b16 %v1865, %v1863
        %v1896 = vpack.c.b16 %v1868, %v1866
        %v1897 = vpack.c.b16 %v1869, %v1867
        %v1898 = vpack.c.b16 %v1872, %v1870
        %v1899 = vpack.c.b16 %v1873, %v1871
        %v1900 = vpack.c.b16 %v1876, %v1874
        %v1901 = vpack.c.b16 %v1877, %v1875
        %v1902 = vpack.c.b16 %v1880, %v1878
        %v1903 = vpack.c.b16 %v1881, %v1879
        %v1904 = vpack.c.b16 %v1884, %v1882
        %v1905 = vpack.c.b16 %v1885, %v1883
        %v1906 = vpack.c.b16 %v1888, %v1886
        %v1907 = vpack.c.b16 %v1889, %v1887
        %v1908 = vpack.c.b16 %v1892, %v1890
        %v1909 = vpack.c.b16 %v1893, %v1891
        %1926 = vmatpush.bf16.msra.mxu0 %v1908
        %1927 = vmatpush.bf16.msra.mxu0 %v1906
        %1928 = vmatpush.bf16.msra.mxu0 %v1904
        %1929 = vmatpush.bf16.msra.mxu0 %v1902
        %1930 = vmatpush.bf16.msra.mxu0 %v1900
        %1931 = vmatpush.bf16.msra.mxu0 %v1898
        %1932 = vmatpush.bf16.msra.mxu0 %v1896
        %1933 = vmatpush.bf16.msra.mxu0 %v1894
        %1934 = vmatmul.bf16.gmra.mxu0 %v1823
        %v1935 = vpop.f32.mrf.mxu0
        %v1936 = vadd.f32 %v1842, %v1935
        %v1937 = vpop.f32.mrf.mxu0
        %v1938 = vadd.f32 %v1842, %v1937
        %1939 = vdwg.mxu0
        %1940 = vmatpush.bf16.msra.mxu0 %v1909
        %1941 = vmatpush.bf16.msra.mxu0 %v1907
        %1942 = vmatpush.bf16.msra.mxu0 %v1905
        %1943 = vmatpush.bf16.msra.mxu0 %v1903
        %1944 = vmatpush.bf16.msra.mxu0 %v1901
        %1945 = vmatpush.bf16.msra.mxu0 %v1899
        %1946 = vmatpush.bf16.msra.mxu0 %v1897
        %1947 = vmatpush.bf16.msra.mxu0 %v1895
        %1948 = vmatmul.bf16.gmra.mxu0 %v1823
        %v1949 = vpop.f32.mrf.mxu0
        %v1950 = vadd.f32 %v1843, %v1949
        %v1951 = vpop.f32.mrf.mxu0
        %v1952 = vadd.f32 %v1843, %v1951
        %1953 = vdwg.mxu0
        %v1954 = vpack.c.bf16 %v1780, %v1779
        %v1955 = vld [vmem:[#allocation15] sm:$0xff]
        %v1956 = vld [vmem:[#allocation15 + $0x8] sm:$0xff]
        %v1957 = vld [vmem:[#allocation15 + $0x10] sm:$0xff]
        %v1958 = vld [vmem:[#allocation15 + $0x18] sm:$0xff]
        %v1959 = vld [vmem:[#allocation15 + $0x20] sm:$0xff]
        %v1960 = vld [vmem:[#allocation15 + $0x28] sm:$0xff]
        %v1961 = vld [vmem:[#allocation15 + $0x30] sm:$0xff]
        %v1962 = vld [vmem:[#allocation15 + $0x38] sm:$0xff]
        %v1963 = vld [vmem:[#allocation15 + $0x40] sm:$0xff]
        %v1964 = vld [vmem:[#allocation15 + $0x48] sm:$0xff]
        %v1965 = vld [vmem:[#allocation15 + $0x50] sm:$0xff]
        %v1966 = vld [vmem:[#allocation15 + $0x58] sm:$0xff]
        %v1967 = vld [vmem:[#allocation15 + $0x60] sm:$0xff]
        %v1968 = vld [vmem:[#allocation15 + $0x68] sm:$0xff]
        %v1969 = vld [vmem:[#allocation15 + $0x70] sm:$0xff]
        %v1970 = vld [vmem:[#allocation15 + $0x78] sm:$0xff]
        %v1971 = vld [vmem:[%s10] sm:$0x3]
        %v1973 = vperm.slane %v1971, 0
        %v1974 = vperm.slane %v1971, 1
        %v1993 = vunpack.c.l.b16 %v1955
        %v1994 = vunpack.c.h.b16 %v1955
        %v1995 = vunpack.c.l.b16 %v1956
        %v1996 = vunpack.c.h.b16 %v1956
        %v1997 = vunpack.c.l.b16 %v1957
        %v1998 = vunpack.c.h.b16 %v1957
        %v1999 = vunpack.c.l.b16 %v1958
        %v2000 = vunpack.c.h.b16 %v1958
        %v2001 = vunpack.c.l.b16 %v1959
        %v2002 = vunpack.c.h.b16 %v1959
        %v2003 = vunpack.c.l.b16 %v1960
        %v2004 = vunpack.c.h.b16 %v1960
        %v2005 = vunpack.c.l.b16 %v1961
        %v2006 = vunpack.c.h.b16 %v1961
        %v2007 = vunpack.c.l.b16 %v1962
        %v2008 = vunpack.c.h.b16 %v1962
        %v2009 = vunpack.c.l.b16 %v1963
        %v2010 = vunpack.c.h.b16 %v1963
        %v2011 = vunpack.c.l.b16 %v1964
        %v2012 = vunpack.c.h.b16 %v1964
        %v2013 = vunpack.c.l.b16 %v1965
        %v2014 = vunpack.c.h.b16 %v1965
        %v2015 = vunpack.c.l.b16 %v1966
        %v2016 = vunpack.c.h.b16 %v1966
        %v2017 = vunpack.c.l.b16 %v1967
        %v2018 = vunpack.c.h.b16 %v1967
        %v2019 = vunpack.c.l.b16 %v1968
        %v2020 = vunpack.c.h.b16 %v1968
        %v2021 = vunpack.c.l.b16 %v1969
        %v2022 = vunpack.c.h.b16 %v1969
        %v2023 = vunpack.c.l.b16 %v1970
        %v2024 = vunpack.c.h.b16 %v1970
        %v2025 = vpack.c.b16 %v1995, %v1993
        %v2026 = vpack.c.b16 %v1996, %v1994
        %v2027 = vpack.c.b16 %v1999, %v1997
        %v2028 = vpack.c.b16 %v2000, %v1998
        %v2029 = vpack.c.b16 %v2003, %v2001
        %v2030 = vpack.c.b16 %v2004, %v2002
        %v2031 = vpack.c.b16 %v2007, %v2005
        %v2032 = vpack.c.b16 %v2008, %v2006
        %v2033 = vpack.c.b16 %v2011, %v2009
        %v2034 = vpack.c.b16 %v2012, %v2010
        %v2035 = vpack.c.b16 %v2015, %v2013
        %v2036 = vpack.c.b16 %v2016, %v2014
        %v2037 = vpack.c.b16 %v2019, %v2017
        %v2038 = vpack.c.b16 %v2020, %v2018
        %v2039 = vpack.c.b16 %v2023, %v2021
        %v2040 = vpack.c.b16 %v2024, %v2022
        %2057 = vmatpush.bf16.msra.mxu0 %v2039
        %2058 = vmatpush.bf16.msra.mxu0 %v2037
        %2059 = vmatpush.bf16.msra.mxu0 %v2035
        %2060 = vmatpush.bf16.msra.mxu0 %v2033
        %2061 = vmatpush.bf16.msra.mxu0 %v2031
        %2062 = vmatpush.bf16.msra.mxu0 %v2029
        %2063 = vmatpush.bf16.msra.mxu0 %v2027
        %2064 = vmatpush.bf16.msra.mxu0 %v2025
        %2065 = vmatmul.bf16.gmra.mxu0 %v1954
        %v2066 = vpop.f32.mrf.mxu0
        %v2067 = vadd.f32 %v1973, %v2066
        %v2068 = vpop.f32.mrf.mxu0
        %v2069 = vadd.f32 %v1973, %v2068
        %2070 = vdwg.mxu0
        %2071 = vmatpush.bf16.msra.mxu0 %v2040
        %2072 = vmatpush.bf16.msra.mxu0 %v2038
        %2073 = vmatpush.bf16.msra.mxu0 %v2036
        %2074 = vmatpush.bf16.msra.mxu0 %v2034
        %2075 = vmatpush.bf16.msra.mxu0 %v2032
        %2076 = vmatpush.bf16.msra.mxu0 %v2030
        %2077 = vmatpush.bf16.msra.mxu0 %v2028
        %2078 = vmatpush.bf16.msra.mxu0 %v2026
        %2079 = vmatmul.bf16.gmra.mxu0 %v1954
        %v2080 = vpop.f32.mrf.mxu0
        %v2081 = vadd.f32 %v1974, %v2080
        %v2082 = vpop.f32.mrf.mxu0
        %v2083 = vadd.f32 %v1974, %v2082
        %2084 = vdwg.mxu0
        %v2085 = vmul.f32 %v1936, %v2067
        %v2086 = vmul.f32 %v1938, %v2069
        %v2087 = vmul.f32 %v1950, %v2081
        %v2088 = vmul.f32 %v1952, %v2083
        %v2089 = vadd.f32 %v2085, %v2087
        %v2090 = vadd.f32 %v2086, %v2088
        %v2091 = vand.u32 2147483647, %v2089
        %v2092 = vand.u32 2147483647, %v2090
        %v2093 = vrsqrt.pop %v2091
        %v2094 = vmul.f32 %v2093, %v2091
        %v2095 = vmul.f32 %v2094, %v2093
        %v2096 = vmul.f32 0.5, %v2095
        %v2097 = vsub.f32 1.5, %v2096
        %v2098 = vmul.f32 %v2093, %v2097
        %v2099 = vmul.f32 %v2091, %v2098
        %vm2100 = vcmp.eq.f32.partialorder %v2091, inf
        %v2101 = vsel %vm2100, %v2091, %v2099
        %vm2102 = vcmp.eq.f32.partialorder %v2091, 0.0
        %v2103 = vand.u32 %v2091, 2147483648
        %v2104 = vsel %vm2102, %v2103, %v2101
        %v2105 = vrsqrt.pop %v2092
        %v2106 = vmul.f32 %v2105, %v2092
        %v2107 = vmul.f32 %v2106, %v2105
        %v2108 = vmul.f32 0.5, %v2107
        %v2109 = vsub.f32 1.5, %v2108
        %v2110 = vmul.f32 %v2105, %v2109
        %v2111 = vmul.f32 %v2092, %v2110
        %vm2112 = vcmp.eq.f32.partialorder %v2092, inf
        %v2113 = vsel %vm2112, %v2092, %v2111
        %vm2114 = vcmp.eq.f32.partialorder %v2092, 0.0
        %v2115 = vand.u32 %v2092, 2147483648
        %v2116 = vsel %vm2114, %v2115, %v2113
        %vm2117 = vcmp.lt.f32.partialorder %v2089, 0.0
        %vm2118 = vcmp.lt.f32.partialorder %v2090, 0.0
        %v2119 = vsub.f32 0.0, %v2104
        %v2120 = vsub.f32 0.0, %v2116
        %v2121 = vsel %vm2117, %v2119, %v2104
        %v2122 = vsel %vm2118, %v2120, %v2116
        %v2123 = vmul.f32 %v2121, %v2121
        %v2124 = vmul.f32 %v2122, %v2122
        %2125 = vadd.xlane.f32.xlu0 %v2123
        %v2126 = vpop.xlane.xlu0 %2125
        %2127 = vadd.xlane.f32.xlu0 %v2124
        %v2128 = vpop.xlane.xlu0 %2127
        %v2129 = vmax.f32 %v2126, 1e-24
        %v2130 = vmax.f32 %v2128, 1e-24
        %v2131 = vrsqrt.pop %v2129
        %v2132 = vmul.f32 %v2131, %v2129
        %v2133 = vmul.f32 %v2132, %v2131
        %v2134 = vmul.f32 0.5, %v2133
        %v2135 = vsub.f32 1.5, %v2134
        %v2136 = vmul.f32 %v2131, %v2135
        %vm2137 = vweird.f32 %v2129
        %vm2138 = vweird.f32 %v2131
        %vm2139 = vmor %vm2137, %vm2138
        %v2140 = vsel %vm2139, %v2131, %v2136
        %v2141 = vrsqrt.pop %v2130
        %v2142 = vmul.f32 %v2141, %v2130
        %v2143 = vmul.f32 %v2142, %v2141
        %v2144 = vmul.f32 0.5, %v2143
        %v2145 = vsub.f32 1.5, %v2144
        %v2146 = vmul.f32 %v2141, %v2145
        %vm2147 = vweird.f32 %v2130
        %vm2148 = vweird.f32 %v2141
        %vm2149 = vmor %vm2147, %vm2148
        %v2150 = vsel %vm2149, %v2141, %v2146
        %v2151 = vmul.f32 %v2121, %v2140
        %v2152 = vmul.f32 %v2122, %v2150
        %2153 = vst [vmem:[%s511] sm:$0xff] %v2151
        %2154 = vst [vmem:[%s511 + $0x8] sm:$0xff] %v2152
        %s2155 = sand.u32 %s282, 1
        %s2156 = scalar_lea.sflag [#allocation8], %s2155
        %s2157 = sand.u32 %s282, 1
        %s2158 = smul.addr %s2157, 16
        %s2159 = scalar_lea.vmem [#allocation17], %s2158
        // Predicated region
        $region89: #{tpu_custom_call.1} parent=63 // pred_check
          %p2160 = pneg %p292
        $region90: #{tpu_custom_call.1} parent=63 // pred_check_branch
          %2162 = sbr.rel (%p2160) target = $region92
        $region91: #{tpu_custom_call.1} parent=63 // pred_region
          %s2163 = smul.u32 2, %s33
          %2165 = vsyncadd %s2156, 0
          %s2166 = smul.addr %s2163, 8
          %s2167 = scalar_lea.hbm %s11, %s2166
          %s2168 = sshll.u32 %s2159, 4
          %s2169 = int_to_ptr.vmem [resolvable:$true] %s2168
          %s2170 = sshll.u32 %s2167, 4
          %s2171 = int_to_ptr.hbm [resolvable:$true] %s2170
          %2176 = dma.vmem_to_hbm [thread:$0]  %s2169, 256, %s2171, %s2156, 128, 128, 8
        $region92: #{tpu_custom_call.1} parent=63 // pred_fallthru
          _
      $region64: #{tpu_custom_call.1} parent=5 // pred_fallthru
        _
      %p2177 = scmp.le.s32.totalorder 2, %s28
      // Predicated region
      $region93: #{tpu_custom_call.1} parent=5 // pred_check
        %p2178 = pneg %p2177
      $region94: #{tpu_custom_call.1} parent=5 // pred_check_branch
        %2180 = sbr.rel (%p2178) target = $region96
      $region95: #{tpu_custom_call.1} parent=5 // pred_region
        %s2181 = ssub.s32 %s28, 2
        // Predicated region
        $region97: #{tpu_custom_call.1} parent=95 // pred_check
          %p2182 = pneg %p298
        $region98: #{tpu_custom_call.1} parent=95 // pred_check_branch
          %2184 = sbr.rel (%p2182) target = $region100
        $region99: #{tpu_custom_call.1} parent=95 // pred_region
          %s2185 = sand.u32 %s283, 1
          %s2186 = scalar_lea.sflag [#allocation8], %s2185
          %s2187 = sand.u32 %s283, 1
          %s2188 = smul.addr %s2187, 16
          %s2189 = scalar_lea.vmem [#allocation17], %s2188
          %2191 = dma.done %s2186, 256
        $region100: #{tpu_custom_call.1} parent=95 // pred_fallthru
          _
      $region96: #{tpu_custom_call.1} parent=5 // pred_fallthru
        _
    $region6: #{tpu_custom_call.1} parent=1 // loop_footer
      %s32 = sadd.s32 1, %s28
    $region7: #{tpu_custom_call.1} parent=1 // loop_footer_branch
      %27 = sbr.rel target = $region3
    $region8: #{tpu_custom_call.1} parent=1 // loop_exit
      _
    %2192 = vsyncpa [#allocation7], 1
    %s2193 = scalar_lea.sflag [#allocation7], 1
    %2194 = vsyncpa %s2193, 1
    %2195 = vsyncpa [#allocation10], 1
    %s2196 = scalar_lea.sflag [#allocation10], 1
    %2197 = vsyncpa %s2196, 1
    %2198 = vsyncpa [#allocation13], 1
    %2199 = vsyncpa [#allocation16], 1
    %2200 = vsyncpa [#allocation8], 1
    %s2201 = scalar_lea.sflag [#allocation8], 1
    %2202 = vsyncpa %s2201, 1

</llo_original>
